<compile_context>
chip_gen: v5e
topology: v5e:2x2
jax: 0.10.0
libtpu: 0.0.40
codegen_flags: <defaults>
</compile_context>

<pallas_src>
import jax
import jax.numpy as jnp
import numpy as np
from jax.experimental import pallas as pl
from jax.experimental.pallas import tpu as pltpu

# ------------------------------ static geometry ------------------------------
_K = 5                      # conv kernel size (both convs: 5x5, valid, no bias)
_H = 32                     # input spatial size (required by .view(-1, 500))
_W = 32
_CIN = 3
_C1 = 10                    # conv1 output channels
_C2 = 20                    # conv2 output channels
_HO1 = _H - _K + 1          # 28  conv1 output rows/cols
_HP1 = _HO1 // 2            # 14  after 2x2 pool
_HO2 = _HP1 - _K + 1        # 10  conv2 output rows/cols
_HP2 = _HO2 // 2            # 5   after 2x2 pool
_FIN = _W * _CIN            # 96  input lane width   (lane = w*3  + ci)
_L1 = _HO1 * _C1            # 280 conv1 out lane width (lane = wo*10 + co)
_A1 = (_HO1 - 1) * _C1      # 270 pooled conv1 lane width fed to conv2
_L2 = _HO2 * _C2            # 200 conv2 out lane width (lane = wo*20 + co)
_A2 = (_HO2 - 1) * _C2      # 180 pooled conv2 lane width fed to fc1
_NH = 50                    # fc1 hidden size
_NC = 10                    # classes


# --------------------------------- the kernel ---------------------------------

def _net_cifar_kernel(x_ref, t1_ref, t2_ref, wf1_ref, wf2_ref, o_ref):
    """Fused Net_CIFAR forward for one batch tile.

    x_ref  : (32, B_t, 96)  f32   x[h, b, w*3 + ci]
    t1_ref : (5, 96, 280)   bf16  conv1 Toeplitz weights (one per kh)
    t2_ref : (5, 270, 200)  bf16  conv2 Toeplitz weights (zero rows for dead cols)
    wf1_ref: (5, 180, 50)   bf16  fc1 per-pooled-row weights (NCHW flatten folded)
    wf2_ref: (50, 10)       bf16
    o_ref  : (B_t, 10)      f32   log-probs
    """
    bt = x_ref.shape[1]
    x = x_ref[...]                                              # (32, bt, 96) f32

    # conv1: 5 shift-and-accumulate MXU matmuls; row r = ho*bt + b,
    # lane = wo*10 + co.  The kh shift is a free leading-dim slice.
    acc1 = jnp.zeros((_HO1 * bt, _L1), jnp.float32)
    for kh in range(_K):
        xk = x[kh:kh + _HO1].reshape(_HO1 * bt, _FIN).astype(jnp.bfloat16)
        acc1 = acc1 + jnp.dot(xk, t1_ref[kh], preferred_element_type=jnp.float32)

    # 2x2 max-pool + ReLU.  H: leading-dim reshape + max.  W: one lane-offset
    # max; odd-wo lane blocks become dead columns zeroed by conv2's weight.
    z1 = jnp.max(acc1.reshape(_HP1, 2, bt, _L1), axis=1)        # (14, bt, 280)
    a1 = jnp.maximum(jnp.maximum(z1[:, :, :_A1], z1[:, :, _C1:_C1 + _A1]), 0.0)
    # TODO(synk): nn.Dropout2d is identity in eval mode; training-mode dropout
    # is intentionally not implemented.

    # conv2: same scheme on the 270-lane pooled rows.
    acc2 = jnp.zeros((_HO2 * bt, _L2), jnp.float32)
    for kh in range(_K):
        ak = a1[kh:kh + _HO2].reshape(_HO2 * bt, _A1).astype(jnp.bfloat16)
        acc2 = acc2 + jnp.dot(ak, t2_ref[kh], preferred_element_type=jnp.float32)

    z2 = jnp.max(acc2.reshape(_HP2, 2, bt, _L2), axis=1)        # (5, bt, 200)
    a2 = jnp.maximum(jnp.maximum(z2[:, :, :_A2], z2[:, :, _C2:_C2 + _A2]), 0.0)

    # fc1 (NCHW .view(-1, 500) order absorbed into wf1), accumulated over the
    # 5 pooled image rows; then ReLU.
    h = jnp.zeros((bt, _NH), jnp.float32)
    for hp in range(_HP2):
        h = h + jnp.dot(a2[hp].astype(jnp.bfloat16), wf1_ref[hp],
                        preferred_element_type=jnp.float32)
    h = jnp.maximum(h, 0.0)
    # TODO(synk): F.dropout is identity in eval mode (training=False).

    logits = jnp.dot(h.astype(jnp.bfloat16), wf2_ref[...],
                     preferred_element_type=jnp.float32)        # (bt, 10)
    m = jnp.max(logits, axis=-1, keepdims=True)                 # stable log_softmax
    zl = logits - m
    lse = jnp.log(jnp.sum(jnp.exp(zl), axis=-1, keepdims=True))
    o_ref[...] = (zl - lse).astype(o_ref.dtype)


# ---------------------------------- wrapper -----------------------------------

def net_cifar_forward(x_nchw, pp, *, bt=8):
    """Full Net_CIFAR forward.  x_nchw: (B, 3, 32, 32) f32 -> (B, 10) log-probs."""
    B = x_nchw.shape[0]
    assert x_nchw.shape[1:] == (_CIN, _H, _W), x_nchw.shape
    assert bt % 8 == 0, "batch tile must be a multiple of the f32 sublane tile"
    b_pad = ((B + bt - 1) // bt) * bt
    if b_pad != B:
        x_nchw = jnp.pad(x_nchw, ((0, b_pad - B), (0, 0), (0, 0), (0, 0)))

    # (B, C, H, W) -> (H, B, W*C): image rows on the leading axis (free kh
    # shifts in-kernel), batch on sublanes, interleaved (w, ci) on lanes.
    xr = jnp.transpose(x_nchw, (2, 0, 3, 1)).reshape(_H, b_pad, _FIN)

    out = pl.pallas_call(
        _net_cifar_kernel,
        out_shape=jax.ShapeDtypeStruct((b_pad, _NC), jnp.float32),
        grid_spec=pltpu.PrefetchScalarGridSpec(
            num_scalar_prefetch=0,
            grid=(b_pad // bt,),
            in_specs=[
                pl.BlockSpec((_H, bt, _FIN), lambda i: (0, i, 0)),
                pl.BlockSpec((_K, _FIN, _L1), lambda i: (0, 0, 0)),    # resident
                pl.BlockSpec((_K, _A1, _L2), lambda i: (0, 0, 0)),     # resident
                pl.BlockSpec((_HP2, _A2, _NH), lambda i: (0, 0, 0)),   # resident
                pl.BlockSpec((_NH, _NC), lambda i: (0, 0)),            # resident
            ],
            out_specs=pl.BlockSpec((bt, _NC), lambda i: (i, 0)),
        ),
        compiler_params=pltpu.CompilerParams(
            dimension_semantics=("parallel",)),    # v7x: 2 TCs split batch tiles
    )(xr, pp["t1"], pp["t2"], pp["wf1"], pp["wf2"])
    return out[:B]


# --------------------------- one-time weight re-layout -------------------------

def preprocess_params(params):
    """One-time re-layout of the PyTorch weights into kernel form (host side).

    * Conv weights become per-kh Toeplitz matrices that consume a whole
      (W*Cin)-wide image row and emit a (Wo*Cout)-wide output row, so each
      conv is just 5 matmuls with free leading-dim row shifts.
    * The stride-2 lane compaction skipped by the in-kernel W-pooling and the
      NCHW .view(-1, 500) flatten order are absorbed as zero / permuted rows
      of the next layer's weight.
    """
    c1 = np.asarray(jax.device_get(params["conv1"]), np.float32)   # (10, 3, 5, 5)
    c2 = np.asarray(jax.device_get(params["conv2"]), np.float32)   # (20, 10, 5, 5)
    f1 = np.asarray(jax.device_get(params["fc1"]), np.float32)     # (50, 500)
    f2 = np.asarray(jax.device_get(params["fc2"]), np.float32)     # (10, 50)

    # t1[kh, w*3 + ci, wo*10 + co] = c1[co, ci, kh, w - wo]   (0 <= w - wo < 5)
    t1 = np.zeros((_K, _FIN, _L1), np.float32)
    for kh in range(_K):
        for wo in range(_HO1):
            for kw in range(_K):
                w = wo + kw
                t1[kh, w * _CIN:(w + 1) * _CIN, wo * _C1:(wo + 1) * _C1] = \
                    c1[:, :, kh, kw].T                              # (ci, co)

    # Pooled conv1 rows are 270 lanes; valid features at lane 20*wp + ci,
    # lanes with (lane % 20) >= 10 are dead -> zero rows.
    # t2[kh, 20*wp + ci, wo*20 + co] = c2[co, ci, kh, wp - wo]
    t2 = np.zeros((_K, _A1, _L2), np.float32)
    for kh in range(_K):
        for wo in range(_HO2):
            for kw in range(_K):
                wp = wo + kw
                t2[kh, 2 * _C1 * wp:2 * _C1 * wp + _C1, wo * _C2:(wo + 1) * _C2] = \
                    c2[:, :, kh, kw].T                              # (ci, co)

    # Pooled conv2 rows are 180 lanes; valid features at lane 40*wp + co, with
    # the pooled row hp as the accumulation step.  PyTorch flatten order is
    # idx = co*25 + hp*5 + wp.
    wf1 = np.zeros((_HP2, _A2, _NH), np.float32)
    for hp in range(_HP2):
        for wp in range(_HP2):
            for co in range(_C2):
                wf1[hp, 2 * _C2 * wp + co, :] = f1[:, co * 25 + hp * 5 + wp]

    wf2 = f2.T                                                      # (50, 10)

    bf16 = lambda a: jnp.asarray(a, jnp.bfloat16)
    return {"t1": bf16(t1), "t2": bf16(t2), "wf1": bf16(wf1), "wf2": bf16(wf2)}


# ---------------------------- pure-JAX f32 reference ---------------------------

def _reference_forward(x_nchw, params):
    hi = jax.lax.Precision.HIGHEST
    y = jax.lax.conv_general_dilated(
        x_nchw, params["conv1"], (1, 1), "VALID",
        dimension_numbers=("NCHW", "OIHW", "NCHW"), precision=hi)
    y = jnp.maximum(jax.lax.reduce_window(
        y, -jnp.inf, jax.lax.max, (1, 1, 2, 2), (1, 1, 2, 2), "VALID"), 0.0)
    y = jax.lax.conv_general_dilated(
        y, params["conv2"], (1, 1), "VALID",
        dimension_numbers=("NCHW", "OIHW", "NCHW"), precision=hi)
    y = jnp.maximum(jax.lax.reduce_window(
        y, -jnp.inf, jax.lax.max, (1, 1, 2, 2), (1, 1, 2, 2), "VALID"), 0.0)
    y = y.reshape(y.shape[0], -1)                  # NCHW flatten == .view(-1, 500)
    h = jnp.maximum(y @ params["fc1"].T, 0.0)
    logits = h @ params["fc2"].T
    return jax.nn.log_softmax(logits, axis=-1)


# ----------------------------------- driver ------------------------------------

def _init_uniform(key, shape, fan_in):
    bound = 1.0 / (fan_in ** 0.5)
    return jax.random.uniform(key, shape, jnp.float32, -bound, bound)


if __name__ == "__main__":
    key = jax.random.PRNGKey(0)
    k_x, k1, k2, k3, k4 = jax.random.split(key, 5)

    # CIFAR-shaped input (B, 3, 32, 32) so .view(-1, 500) is valid; B=16 gives
    # a 2-step grid at the default batch tile of 8 (both v7x TCs get work).
    x = jax.random.normal(k_x, (16, 3, 32, 32), dtype=jnp.float32)

    params = {
        "conv1": _init_uniform(k1, (10, 3, 5, 5), 3 * 5 * 5),
        "conv2": _init_uniform(k2, (20, 10, 5, 5), 10 * 5 * 5),
        "fc1": _init_uniform(k3, (50, 500), 500),
        "fc2": _init_uniform(k4, (10, 50), 50),
    }

    pp = preprocess_params(params)                  # one-time weight re-layout
    out = jax.jit(net_cifar_forward)(x, pp)
    out = jax.block_until_ready(out)
    assert out.shape == (16, 10), out.shape
    assert out.dtype == jnp.float32

    # Sanity check vs. a pure-JAX f32 reference (loose tolerance: bf16 MXU).
    ref = _reference_forward(x, params)
    err = float(jnp.max(jnp.abs(out - ref)))
    assert err < 1e-1, f"max |pallas - reference| = {err}"

    print("KERNEL_OK")
</pallas_src>

<mosaic_0001>
module attributes {stable_mosaic.version = 11 : i64} {
  func.func @_net_cifar_kernel(%arg0: i32, %arg1: memref<32x8x96xf32, #tpu.memory_space<vmem>>, %arg2: memref<5x96x280xbf16, #tpu.memory_space<vmem>>, %arg3: memref<5x270x200xbf16, #tpu.memory_space<vmem>>, %arg4: memref<5x180x50xbf16, #tpu.memory_space<vmem>>, %arg5: memref<50x10xbf16, #tpu.memory_space<vmem>>, %arg6: memref<8x10xf32, #tpu.memory_space<vmem>>) attributes {dimension_semantics = [#tpu.dimension_semantics<parallel>], iteration_bounds = array<i64: 2>, scalar_prefetch = 0 : i64, scratch_operands = 0 : i64, tpu.core_type = #tpu.core_type<tc>, window_params = [{transform_indices = @transform_0, window_bounds = array<i64: 32, 8, 96>}, {pipeline_mode = #tpu.pipeline_mode<synchronous>, transform_indices = @transform_1, window_bounds = array<i64: 5, 96, 280>}, {pipeline_mode = #tpu.pipeline_mode<synchronous>, transform_indices = @transform_2, window_bounds = array<i64: 5, 270, 200>}, {pipeline_mode = #tpu.pipeline_mode<synchronous>, transform_indices = @transform_3, window_bounds = array<i64: 5, 180, 50>}, {pipeline_mode = #tpu.pipeline_mode<synchronous>, transform_indices = @transform_4, window_bounds = array<i64: 50, 10>}, {transform_indices = @transform_5, window_bounds = array<i64: 8, 10>}]} {
    %c0 = arith.constant 0 : index
    %c0_0 = arith.constant 0 : index
    %c0_1 = arith.constant 0 : index
    %0 = vector.load %arg1[%c0, %c0_0, %c0_1] : memref<32x8x96xf32, #tpu.memory_space<vmem>>, vector<32x8x96xf32>
    %cst = arith.constant 0.000000e+00 : f32
    %1 = vector.broadcast %cst : f32 to vector<224x280xf32>
    %2 = vector.extract_strided_slice %0 {offsets = [0, 0, 0], sizes = [28, 8, 96], strides = [1, 1, 1]} : vector<32x8x96xf32> to vector<28x8x96xf32>
    %3 = vector.shape_cast %2 : vector<28x8x96xf32> to vector<224x96xf32>
    %4 = arith.truncf %3 : vector<224x96xf32> to vector<224x96xbf16>
    %c0_2 = arith.constant 0 : index
    %c0_3 = arith.constant 0 : index
    %c0_4 = arith.constant 0 : index
    %5 = vector.load %arg2[%c0_2, %c0_3, %c0_4] : memref<5x96x280xbf16, #tpu.memory_space<vmem>>, vector<1x96x280xbf16>
    %6 = vector.shape_cast %5 : vector<1x96x280xbf16> to vector<96x280xbf16>
    %cst_5 = arith.constant dense<0.000000e+00> : vector<224x280xf32>
    %7 = tpu.matmul %4, %6, %cst_5 {dimension_numbers = #tpu.dot_dimension_numbers<[1], [0], [0], [1], [0, 0, 1, 1], [], []>} : vector<224x96xbf16>, vector<96x280xbf16>, vector<224x280xf32> -> vector<224x280xf32>
    %8 = arith.addf %1, %7 : vector<224x280xf32>
    %9 = vector.extract_strided_slice %0 {offsets = [1, 0, 0], sizes = [28, 8, 96], strides = [1, 1, 1]} : vector<32x8x96xf32> to vector<28x8x96xf32>
    %10 = vector.shape_cast %9 : vector<28x8x96xf32> to vector<224x96xf32>
    %11 = arith.truncf %10 : vector<224x96xf32> to vector<224x96xbf16>
    %c1 = arith.constant 1 : index
    %c0_6 = arith.constant 0 : index
    %c0_7 = arith.constant 0 : index
    %12 = vector.load %arg2[%c1, %c0_6, %c0_7] : memref<5x96x280xbf16, #tpu.memory_space<vmem>>, vector<1x96x280xbf16>
    %13 = vector.shape_cast %12 : vector<1x96x280xbf16> to vector<96x280xbf16>
    %cst_8 = arith.constant dense<0.000000e+00> : vector<224x280xf32>
    %14 = tpu.matmul %11, %13, %cst_8 {dimension_numbers = #tpu.dot_dimension_numbers<[1], [0], [0], [1], [0, 0, 1, 1], [], []>} : vector<224x96xbf16>, vector<96x280xbf16>, vector<224x280xf32> -> vector<224x280xf32>
    %15 = arith.addf %8, %14 : vector<224x280xf32>
    %16 = vector.extract_strided_slice %0 {offsets = [2, 0, 0], sizes = [28, 8, 96], strides = [1, 1, 1]} : vector<32x8x96xf32> to vector<28x8x96xf32>
    %17 = vector.shape_cast %16 : vector<28x8x96xf32> to vector<224x96xf32>
    %18 = arith.truncf %17 : vector<224x96xf32> to vector<224x96xbf16>
    %c2 = arith.constant 2 : index
    %c0_9 = arith.constant 0 : index
    %c0_10 = arith.constant 0 : index
    %19 = vector.load %arg2[%c2, %c0_9, %c0_10] : memref<5x96x280xbf16, #tpu.memory_space<vmem>>, vector<1x96x280xbf16>
    %20 = vector.shape_cast %19 : vector<1x96x280xbf16> to vector<96x280xbf16>
    %cst_11 = arith.constant dense<0.000000e+00> : vector<224x280xf32>
    %21 = tpu.matmul %18, %20, %cst_11 {dimension_numbers = #tpu.dot_dimension_numbers<[1], [0], [0], [1], [0, 0, 1, 1], [], []>} : vector<224x96xbf16>, vector<96x280xbf16>, vector<224x280xf32> -> vector<224x280xf32>
    %22 = arith.addf %15, %21 : vector<224x280xf32>
    %23 = vector.extract_strided_slice %0 {offsets = [3, 0, 0], sizes = [28, 8, 96], strides = [1, 1, 1]} : vector<32x8x96xf32> to vector<28x8x96xf32>
    %24 = vector.shape_cast %23 : vector<28x8x96xf32> to vector<224x96xf32>
    %25 = arith.truncf %24 : vector<224x96xf32> to vector<224x96xbf16>
    %c3 = arith.constant 3 : index
    %c0_12 = arith.constant 0 : index
    %c0_13 = arith.constant 0 : index
    %26 = vector.load %arg2[%c3, %c0_12, %c0_13] : memref<5x96x280xbf16, #tpu.memory_space<vmem>>, vector<1x96x280xbf16>
    %27 = vector.shape_cast %26 : vector<1x96x280xbf16> to vector<96x280xbf16>
    %cst_14 = arith.constant dense<0.000000e+00> : vector<224x280xf32>
    %28 = tpu.matmul %25, %27, %cst_14 {dimension_numbers = #tpu.dot_dimension_numbers<[1], [0], [0], [1], [0, 0, 1, 1], [], []>} : vector<224x96xbf16>, vector<96x280xbf16>, vector<224x280xf32> -> vector<224x280xf32>
    %29 = arith.addf %22, %28 : vector<224x280xf32>
    %30 = vector.extract_strided_slice %0 {offsets = [4, 0, 0], sizes = [28, 8, 96], strides = [1, 1, 1]} : vector<32x8x96xf32> to vector<28x8x96xf32>
    %31 = vector.shape_cast %30 : vector<28x8x96xf32> to vector<224x96xf32>
    %32 = arith.truncf %31 : vector<224x96xf32> to vector<224x96xbf16>
    %c4 = arith.constant 4 : index
    %c0_15 = arith.constant 0 : index
    %c0_16 = arith.constant 0 : index
    %33 = vector.load %arg2[%c4, %c0_15, %c0_16] : memref<5x96x280xbf16, #tpu.memory_space<vmem>>, vector<1x96x280xbf16>
    %34 = vector.shape_cast %33 : vector<1x96x280xbf16> to vector<96x280xbf16>
    %cst_17 = arith.constant dense<0.000000e+00> : vector<224x280xf32>
    %35 = tpu.matmul %32, %34, %cst_17 {dimension_numbers = #tpu.dot_dimension_numbers<[1], [0], [0], [1], [0, 0, 1, 1], [], []>} : vector<224x96xbf16>, vector<96x280xbf16>, vector<224x280xf32> -> vector<224x280xf32>
    %36 = arith.addf %29, %35 : vector<224x280xf32>
    %37 = vector.shape_cast %36 : vector<224x280xf32> to vector<14x2x8x280xf32>
    %cst_18 = arith.constant dense<0xFF800000> : vector<14x8x280xf32>
    %38 = vector.multi_reduction <maximumf>, %37, %cst_18 [1] : vector<14x2x8x280xf32> to vector<14x8x280xf32>
    %39 = vector.extract_strided_slice %38 {offsets = [0, 0, 0], sizes = [14, 8, 270], strides = [1, 1, 1]} : vector<14x8x280xf32> to vector<14x8x270xf32>
    %40 = vector.extract_strided_slice %38 {offsets = [0, 0, 10], sizes = [14, 8, 270], strides = [1, 1, 1]} : vector<14x8x280xf32> to vector<14x8x270xf32>
    %41 = arith.maximumf %39, %40 : vector<14x8x270xf32>
    %cst_19 = arith.constant 0.000000e+00 : f32
    %42 = vector.broadcast %cst_19 : f32 to vector<14x8x270xf32>
    %43 = arith.maximumf %41, %42 : vector<14x8x270xf32>
    %cst_20 = arith.constant 0.000000e+00 : f32
    %44 = vector.broadcast %cst_20 : f32 to vector<80x200xf32>
    %45 = vector.extract_strided_slice %43 {offsets = [0, 0, 0], sizes = [10, 8, 270], strides = [1, 1, 1]} : vector<14x8x270xf32> to vector<10x8x270xf32>
    %46 = vector.shape_cast %45 : vector<10x8x270xf32> to vector<80x270xf32>
    %47 = arith.truncf %46 : vector<80x270xf32> to vector<80x270xbf16>
    %c0_21 = arith.constant 0 : index
    %c0_22 = arith.constant 0 : index
    %c0_23 = arith.constant 0 : index
    %48 = vector.load %arg3[%c0_21, %c0_22, %c0_23] : memref<5x270x200xbf16, #tpu.memory_space<vmem>>, vector<1x270x200xbf16>
    %49 = vector.shape_cast %48 : vector<1x270x200xbf16> to vector<270x200xbf16>
    %cst_24 = arith.constant dense<0.000000e+00> : vector<80x200xf32>
    %50 = tpu.matmul %47, %49, %cst_24 {dimension_numbers = #tpu.dot_dimension_numbers<[1], [0], [0], [1], [0, 0, 1, 1], [], []>} : vector<80x270xbf16>, vector<270x200xbf16>, vector<80x200xf32> -> vector<80x200xf32>
    %51 = arith.addf %44, %50 : vector<80x200xf32>
    %52 = vector.extract_strided_slice %43 {offsets = [1, 0, 0], sizes = [10, 8, 270], strides = [1, 1, 1]} : vector<14x8x270xf32> to vector<10x8x270xf32>
    %53 = vector.shape_cast %52 : vector<10x8x270xf32> to vector<80x270xf32>
    %54 = arith.truncf %53 : vector<80x270xf32> to vector<80x270xbf16>
    %c1_25 = arith.constant 1 : index
    %c0_26 = arith.constant 0 : index
    %c0_27 = arith.constant 0 : index
    %55 = vector.load %arg3[%c1_25, %c0_26, %c0_27] : memref<5x270x200xbf16, #tpu.memory_space<vmem>>, vector<1x270x200xbf16>
    %56 = vector.shape_cast %55 : vector<1x270x200xbf16> to vector<270x200xbf16>
    %cst_28 = arith.constant dense<0.000000e+00> : vector<80x200xf32>
    %57 = tpu.matmul %54, %56, %cst_28 {dimension_numbers = #tpu.dot_dimension_numbers<[1], [0], [0], [1], [0, 0, 1, 1], [], []>} : vector<80x270xbf16>, vector<270x200xbf16>, vector<80x200xf32> -> vector<80x200xf32>
    %58 = arith.addf %51, %57 : vector<80x200xf32>
    %59 = vector.extract_strided_slice %43 {offsets = [2, 0, 0], sizes = [10, 8, 270], strides = [1, 1, 1]} : vector<14x8x270xf32> to vector<10x8x270xf32>
    %60 = vector.shape_cast %59 : vector<10x8x270xf32> to vector<80x270xf32>
    %61 = arith.truncf %60 : vector<80x270xf32> to vector<80x270xbf16>
    %c2_29 = arith.constant 2 : index
    %c0_30 = arith.constant 0 : index
    %c0_31 = arith.constant 0 : index
    %62 = vector.load %arg3[%c2_29, %c0_30, %c0_31] : memref<5x270x200xbf16, #tpu.memory_space<vmem>>, vector<1x270x200xbf16>
    %63 = vector.shape_cast %62 : vector<1x270x200xbf16> to vector<270x200xbf16>
    %cst_32 = arith.constant dense<0.000000e+00> : vector<80x200xf32>
    %64 = tpu.matmul %61, %63, %cst_32 {dimension_numbers = #tpu.dot_dimension_numbers<[1], [0], [0], [1], [0, 0, 1, 1], [], []>} : vector<80x270xbf16>, vector<270x200xbf16>, vector<80x200xf32> -> vector<80x200xf32>
    %65 = arith.addf %58, %64 : vector<80x200xf32>
    %66 = vector.extract_strided_slice %43 {offsets = [3, 0, 0], sizes = [10, 8, 270], strides = [1, 1, 1]} : vector<14x8x270xf32> to vector<10x8x270xf32>
    %67 = vector.shape_cast %66 : vector<10x8x270xf32> to vector<80x270xf32>
    %68 = arith.truncf %67 : vector<80x270xf32> to vector<80x270xbf16>
    %c3_33 = arith.constant 3 : index
    %c0_34 = arith.constant 0 : index
    %c0_35 = arith.constant 0 : index
    %69 = vector.load %arg3[%c3_33, %c0_34, %c0_35] : memref<5x270x200xbf16, #tpu.memory_space<vmem>>, vector<1x270x200xbf16>
    %70 = vector.shape_cast %69 : vector<1x270x200xbf16> to vector<270x200xbf16>
    %cst_36 = arith.constant dense<0.000000e+00> : vector<80x200xf32>
    %71 = tpu.matmul %68, %70, %cst_36 {dimension_numbers = #tpu.dot_dimension_numbers<[1], [0], [0], [1], [0, 0, 1, 1], [], []>} : vector<80x270xbf16>, vector<270x200xbf16>, vector<80x200xf32> -> vector<80x200xf32>
    %72 = arith.addf %65, %71 : vector<80x200xf32>
    %73 = vector.extract_strided_slice %43 {offsets = [4, 0, 0], sizes = [10, 8, 270], strides = [1, 1, 1]} : vector<14x8x270xf32> to vector<10x8x270xf32>
    %74 = vector.shape_cast %73 : vector<10x8x270xf32> to vector<80x270xf32>
    %75 = arith.truncf %74 : vector<80x270xf32> to vector<80x270xbf16>
    %c4_37 = arith.constant 4 : index
    %c0_38 = arith.constant 0 : index
    %c0_39 = arith.constant 0 : index
    %76 = vector.load %arg3[%c4_37, %c0_38, %c0_39] : memref<5x270x200xbf16, #tpu.memory_space<vmem>>, vector<1x270x200xbf16>
    %77 = vector.shape_cast %76 : vector<1x270x200xbf16> to vector<270x200xbf16>
    %cst_40 = arith.constant dense<0.000000e+00> : vector<80x200xf32>
    %78 = tpu.matmul %75, %77, %cst_40 {dimension_numbers = #tpu.dot_dimension_numbers<[1], [0], [0], [1], [0, 0, 1, 1], [], []>} : vector<80x270xbf16>, vector<270x200xbf16>, vector<80x200xf32> -> vector<80x200xf32>
    %79 = arith.addf %72, %78 : vector<80x200xf32>
    %80 = vector.shape_cast %79 : vector<80x200xf32> to vector<5x2x8x200xf32>
    %cst_41 = arith.constant dense<0xFF800000> : vector<5x8x200xf32>
    %81 = vector.multi_reduction <maximumf>, %80, %cst_41 [1] : vector<5x2x8x200xf32> to vector<5x8x200xf32>
    %82 = vector.extract_strided_slice %81 {offsets = [0, 0, 0], sizes = [5, 8, 180], strides = [1, 1, 1]} : vector<5x8x200xf32> to vector<5x8x180xf32>
    %83 = vector.extract_strided_slice %81 {offsets = [0, 0, 20], sizes = [5, 8, 180], strides = [1, 1, 1]} : vector<5x8x200xf32> to vector<5x8x180xf32>
    %84 = arith.maximumf %82, %83 : vector<5x8x180xf32>
    %cst_42 = arith.constant 0.000000e+00 : f32
    %85 = vector.broadcast %cst_42 : f32 to vector<5x8x180xf32>
    %86 = arith.maximumf %84, %85 : vector<5x8x180xf32>
    %cst_43 = arith.constant 0.000000e+00 : f32
    %87 = vector.broadcast %cst_43 : f32 to vector<8x50xf32>
    %88 = vector.extract_strided_slice %86 {offsets = [0, 0, 0], sizes = [1, 8, 180], strides = [1, 1, 1]} : vector<5x8x180xf32> to vector<1x8x180xf32>
    %89 = vector.shape_cast %88 : vector<1x8x180xf32> to vector<8x180xf32>
    %90 = arith.truncf %89 : vector<8x180xf32> to vector<8x180xbf16>
    %c0_44 = arith.constant 0 : index
    %c0_45 = arith.constant 0 : index
    %c0_46 = arith.constant 0 : index
    %91 = vector.load %arg4[%c0_44, %c0_45, %c0_46] : memref<5x180x50xbf16, #tpu.memory_space<vmem>>, vector<1x180x50xbf16>
    %92 = vector.shape_cast %91 : vector<1x180x50xbf16> to vector<180x50xbf16>
    %cst_47 = arith.constant dense<0.000000e+00> : vector<8x50xf32>
    %93 = tpu.matmul %90, %92, %cst_47 {dimension_numbers = #tpu.dot_dimension_numbers<[1], [0], [0], [1], [0, 0, 1, 1], [], []>} : vector<8x180xbf16>, vector<180x50xbf16>, vector<8x50xf32> -> vector<8x50xf32>
    %94 = arith.addf %87, %93 : vector<8x50xf32>
    %95 = vector.extract_strided_slice %86 {offsets = [1, 0, 0], sizes = [1, 8, 180], strides = [1, 1, 1]} : vector<5x8x180xf32> to vector<1x8x180xf32>
    %96 = vector.shape_cast %95 : vector<1x8x180xf32> to vector<8x180xf32>
    %97 = arith.truncf %96 : vector<8x180xf32> to vector<8x180xbf16>
    %c1_48 = arith.constant 1 : index
    %c0_49 = arith.constant 0 : index
    %c0_50 = arith.constant 0 : index
    %98 = vector.load %arg4[%c1_48, %c0_49, %c0_50] : memref<5x180x50xbf16, #tpu.memory_space<vmem>>, vector<1x180x50xbf16>
    %99 = vector.shape_cast %98 : vector<1x180x50xbf16> to vector<180x50xbf16>
    %cst_51 = arith.constant dense<0.000000e+00> : vector<8x50xf32>
    %100 = tpu.matmul %97, %99, %cst_51 {dimension_numbers = #tpu.dot_dimension_numbers<[1], [0], [0], [1], [0, 0, 1, 1], [], []>} : vector<8x180xbf16>, vector<180x50xbf16>, vector<8x50xf32> -> vector<8x50xf32>
    %101 = arith.addf %94, %100 : vector<8x50xf32>
    %102 = vector.extract_strided_slice %86 {offsets = [2, 0, 0], sizes = [1, 8, 180], strides = [1, 1, 1]} : vector<5x8x180xf32> to vector<1x8x180xf32>
    %103 = vector.shape_cast %102 : vector<1x8x180xf32> to vector<8x180xf32>
    %104 = arith.truncf %103 : vector<8x180xf32> to vector<8x180xbf16>
    %c2_52 = arith.constant 2 : index
    %c0_53 = arith.constant 0 : index
    %c0_54 = arith.constant 0 : index
    %105 = vector.load %arg4[%c2_52, %c0_53, %c0_54] : memref<5x180x50xbf16, #tpu.memory_space<vmem>>, vector<1x180x50xbf16>
    %106 = vector.shape_cast %105 : vector<1x180x50xbf16> to vector<180x50xbf16>
    %cst_55 = arith.constant dense<0.000000e+00> : vector<8x50xf32>
    %107 = tpu.matmul %104, %106, %cst_55 {dimension_numbers = #tpu.dot_dimension_numbers<[1], [0], [0], [1], [0, 0, 1, 1], [], []>} : vector<8x180xbf16>, vector<180x50xbf16>, vector<8x50xf32> -> vector<8x50xf32>
    %108 = arith.addf %101, %107 : vector<8x50xf32>
    %109 = vector.extract_strided_slice %86 {offsets = [3, 0, 0], sizes = [1, 8, 180], strides = [1, 1, 1]} : vector<5x8x180xf32> to vector<1x8x180xf32>
    %110 = vector.shape_cast %109 : vector<1x8x180xf32> to vector<8x180xf32>
    %111 = arith.truncf %110 : vector<8x180xf32> to vector<8x180xbf16>
    %c3_56 = arith.constant 3 : index
    %c0_57 = arith.constant 0 : index
    %c0_58 = arith.constant 0 : index
    %112 = vector.load %arg4[%c3_56, %c0_57, %c0_58] : memref<5x180x50xbf16, #tpu.memory_space<vmem>>, vector<1x180x50xbf16>
    %113 = vector.shape_cast %112 : vector<1x180x50xbf16> to vector<180x50xbf16>
    %cst_59 = arith.constant dense<0.000000e+00> : vector<8x50xf32>
    %114 = tpu.matmul %111, %113, %cst_59 {dimension_numbers = #tpu.dot_dimension_numbers<[1], [0], [0], [1], [0, 0, 1, 1], [], []>} : vector<8x180xbf16>, vector<180x50xbf16>, vector<8x50xf32> -> vector<8x50xf32>
    %115 = arith.addf %108, %114 : vector<8x50xf32>
    %116 = vector.extract_strided_slice %86 {offsets = [4, 0, 0], sizes = [1, 8, 180], strides = [1, 1, 1]} : vector<5x8x180xf32> to vector<1x8x180xf32>
    %117 = vector.shape_cast %116 : vector<1x8x180xf32> to vector<8x180xf32>
    %118 = arith.truncf %117 : vector<8x180xf32> to vector<8x180xbf16>
    %c4_60 = arith.constant 4 : index
    %c0_61 = arith.constant 0 : index
    %c0_62 = arith.constant 0 : index
    %119 = vector.load %arg4[%c4_60, %c0_61, %c0_62] : memref<5x180x50xbf16, #tpu.memory_space<vmem>>, vector<1x180x50xbf16>
    %120 = vector.shape_cast %119 : vector<1x180x50xbf16> to vector<180x50xbf16>
    %cst_63 = arith.constant dense<0.000000e+00> : vector<8x50xf32>
    %121 = tpu.matmul %118, %120, %cst_63 {dimension_numbers = #tpu.dot_dimension_numbers<[1], [0], [0], [1], [0, 0, 1, 1], [], []>} : vector<8x180xbf16>, vector<180x50xbf16>, vector<8x50xf32> -> vector<8x50xf32>
    %122 = arith.addf %115, %121 : vector<8x50xf32>
    %cst_64 = arith.constant 0.000000e+00 : f32
    %123 = vector.broadcast %cst_64 : f32 to vector<8x50xf32>
    %124 = arith.maximumf %122, %123 : vector<8x50xf32>
    %125 = arith.truncf %124 : vector<8x50xf32> to vector<8x50xbf16>
    %c0_65 = arith.constant 0 : index
    %c0_66 = arith.constant 0 : index
    %126 = vector.load %arg5[%c0_65, %c0_66] : memref<50x10xbf16, #tpu.memory_space<vmem>>, vector<50x10xbf16>
    %cst_67 = arith.constant dense<0.000000e+00> : vector<8x10xf32>
    %127 = tpu.matmul %125, %126, %cst_67 {dimension_numbers = #tpu.dot_dimension_numbers<[1], [0], [0], [1], [0, 0, 1, 1], [], []>} : vector<8x50xbf16>, vector<50x10xbf16>, vector<8x10xf32> -> vector<8x10xf32>
    %cst_68 = arith.constant dense<0xFF800000> : vector<8xf32>
    %128 = vector.multi_reduction <maximumf>, %127, %cst_68 [1] : vector<8x10xf32> to vector<8xf32>
    %129 = vector.shape_cast %128 : vector<8xf32> to vector<8x1xf32>
    %130 = vector.broadcast %129 : vector<8x1xf32> to vector<8x10xf32>
    %131 = arith.subf %127, %130 : vector<8x10xf32>
    %132 = math.exp %131 : vector<8x10xf32>
    %cst_69 = arith.constant dense<0.000000e+00> : vector<8xf32>
    %133 = vector.multi_reduction <add>, %132, %cst_69 [1] : vector<8x10xf32> to vector<8xf32>
    %134 = vector.shape_cast %133 : vector<8xf32> to vector<8x1xf32>
    %135 = math.log %134 : vector<8x1xf32>
    %136 = vector.broadcast %135 : vector<8x1xf32> to vector<8x10xf32>
    %137 = arith.subf %131, %136 : vector<8x10xf32>
    %c0_70 = arith.constant 0 : index
    %c0_71 = arith.constant 0 : index
    %138 = vector.load %arg6[%c0_70, %c0_71] : memref<8x10xf32, #tpu.memory_space<vmem>>, vector<8x10xf32>
    tpu.vector_store %arg6[%c0_70, %c0_71], %137 {strides = array<i32>} : memref<8x10xf32, #tpu.memory_space<vmem>>, vector<8x10xf32>,
    return
  }
  func.func @transform_0(%arg0: i32) -> (i32, i32, i32) {
    %c0_i32 = arith.constant 0 : i32
    %c0_i32_0 = arith.constant 0 : i32
    %c0_i32_1 = arith.constant 0 : i32
    return %c0_i32, %arg0, %c0_i32_0 : i32, i32, i32
  }
  func.func @transform_1(%arg0: i32) -> (i32, i32, i32) {
    %c0_i32 = arith.constant 0 : i32
    %c0_i32_0 = arith.constant 0 : i32
    %c0_i32_1 = arith.constant 0 : i32
    %c0_i32_2 = arith.constant 0 : i32
    return %c0_i32, %c0_i32_0, %c0_i32_1 : i32, i32, i32
  }
  func.func @transform_2(%arg0: i32) -> (i32, i32, i32) {
    %c0_i32 = arith.constant 0 : i32
    %c0_i32_0 = arith.constant 0 : i32
    %c0_i32_1 = arith.constant 0 : i32
    %c0_i32_2 = arith.constant 0 : i32
    return %c0_i32, %c0_i32_0, %c0_i32_1 : i32, i32, i32
  }
  func.func @transform_3(%arg0: i32) -> (i32, i32, i32) {
    %c0_i32 = arith.constant 0 : i32
    %c0_i32_0 = arith.constant 0 : i32
    %c0_i32_1 = arith.constant 0 : i32
    %c0_i32_2 = arith.constant 0 : i32
    return %c0_i32, %c0_i32_0, %c0_i32_1 : i32, i32, i32
  }
  func.func @transform_4(%arg0: i32) -> (i32, i32) {
    %c0_i32 = arith.constant 0 : i32
    %c0_i32_0 = arith.constant 0 : i32
    %c0_i32_1 = arith.constant 0 : i32
    return %c0_i32, %c0_i32_0 : i32, i32
  }
  func.func @transform_5(%arg0: i32) -> (i32, i32) {
    %c0_i32 = arith.constant 0 : i32
    %c0_i32_0 = arith.constant 0 : i32
    return %arg0, %c0_i32 : i32, i32
  }
}

</mosaic_0001>

<llo_original>
// kernel: net_cifar_forward.1
$region0: #{net_cifar_forward.1}
  #allocation0 [shape = 'u32[]', space=smem, size = 0x4, offset = 0x4, fixed_abs, tag = 'smem constant byte address 0x4 - core index']
  #allocation1 [shape = 'u32[72,128]{1,0:T(1,128)}', space=vmem, size = 0x9000, scoped, tag = 'internal scratch']
  %s0 = inlined_call_operand.vmem [shape: f32[32,16,96], index: 0, kind: input, shape index: {}]
  %s1 = inlined_call_operand.vmem [shape: bf16[5,96,280], index: 1, kind: input, shape index: {}]
  %s2 = inlined_call_operand.vmem [shape: bf16[5,270,200], index: 2, kind: input, shape index: {}]
  %s3 = inlined_call_operand.vmem [shape: bf16[5,180,50], index: 3, kind: input, shape index: {}]
  %s4 = inlined_call_operand.vmem [shape: bf16[50,10], index: 4, kind: input, shape index: {}]
  %s5 = inlined_call_operand.hbm [shape: f32[16,10], index: 5, kind: output, shape index: {}]
  %s6 = sld [smem:[#allocation0]]
  $region91: #{net_cifar_forward.1} parent=0
    _
  %s8 = ssub.s32 1, %s6
  %s9 = scalar_select 0, %s8, %s6
  $region1: #{net_cifar_forward.1} parent=0
    #allocation2 [shape = 'u8[262144]{0}', space=vmem, size = 0x40000, scoped, tag = 'input window, operand 0']
    #allocation3 [shape = 'u8[8192]{0}', space=vmem, size = 0x2000, scoped, tag = 'output window, operand 0']
    #allocation4 [shape = 's32[2]{0}', space=sflag, size = 0x8, scoped, tag = 'scoped memory for net_cifar_forward.1']
    %10 = vsyncpa [#allocation4], 0
    %s11 = scalar_lea.sflag [#allocation4], 1
    %12 = vsyncpa %s11, 0
    loop: start=0, step=1, limit=4
    $region2: #{net_cifar_forward.1} parent=1 // loop_pre_header
      _
    $region3: #{net_cifar_forward.1} parent=1 // loop_header
      %s14 = sphi 0, %s18
      %p15 = scmp.ge.s32.totalorder %s14, 4
      %s24 = sphi 0, %s26
      %s27 = sphi 0, %s24
      %s28 = sphi 0, %s27
      %s44 = sphi 0, %s28
      %s48 = sphi 0, %s48
      %s50 = sphi 0, %s48
      %s51 = sphi 0, %s50
      %s65 = sphi 0, %s51
      %s69 = sphi 0, %s69
      %s71 = sphi 0, %s69
      %s72 = sphi 0, %s71
      %s86 = sphi 0, %s72
      %s90 = sphi 0, %s90
      %s92 = sphi 0, %s90
      %s93 = sphi 0, %s92
      %s107 = sphi 0, %s93
      %s111 = sphi 0, %s111
      %s113 = sphi 0, %s111
      %s114 = sphi 0, %s113
      %s128 = sphi 0, %s114
      %s134 = sphi 0, %s136
      %s137 = sphi 0, %s134
      %s138 = sphi 0, %s137
      %s154 = sphi 0, %s138
    $region4: #{net_cifar_forward.1} parent=1 // loop_header_branch
      %17 = sbr.rel (%p15) target = $region8
    $region5: #{net_cifar_forward.1} parent=1 // loop_body
      %s19 = ssub.s32 %s14, 1
      %s20 = ssub.s32 %s14, 2
      %s21 = sadd.s32 %s14, 1
      %s22 = ssub.s32 %s14, %s21
      %p23 = scmp.eq.s32.totalorder %s22, 0
      %s25 = sadd.s32 %s24, 1
      %s26 = scalar_select %p23, %s24, %s25
      %p29 = pneg %p23
      %p30 = scmp.eq.s32.totalorder %s14, 1
      %p31 = por %p29, %p30
      %p32 = scmp.ne.s32.totalorder %s24, %s27
      %p33 = scmp.eq.s32.totalorder %s14, 0
      %p34 = por %p32, %p33
      %p35 = scmp.ne.s32.totalorder %s24, %s27
      %p36 = scmp.eq.s32.totalorder %s19, 1
      %p37 = por %p35, %p36
      %p38 = scmp.ne.s32.totalorder %s27, %s28
      %p39 = scmp.eq.s32.totalorder %s19, 0
      %p40 = por %p38, %p39
      %p41 = scmp.ne.s32.totalorder %s27, %s28
      %p42 = scmp.eq.s32.totalorder %s20, 1
      %p43 = por %p41, %p42
      %p45 = scmp.ne.s32.totalorder %s28, %s44
      %p46 = scmp.eq.s32.totalorder %s20, 0
      %p47 = por %p45, %p46
      %s49 = sadd.s32 %s48, 1
      %p52 = scmp.eq.s32.totalorder %s14, 1
      %p53 = scmp.ne.s32.totalorder %s48, %s50
      %p54 = scmp.eq.s32.totalorder %s14, 0
      %p55 = por %p53, %p54
      %p56 = scmp.ne.s32.totalorder %s48, %s50
      %p57 = scmp.eq.s32.totalorder %s19, 1
      %p58 = por %p56, %p57
      %p59 = scmp.ne.s32.totalorder %s50, %s51
      %p60 = scmp.eq.s32.totalorder %s19, 0
      %p61 = por %p59, %p60
      %p62 = scmp.ne.s32.totalorder %s50, %s51
      %p63 = scmp.eq.s32.totalorder %s20, 1
      %p64 = por %p62, %p63
      %p66 = scmp.ne.s32.totalorder %s51, %s65
      %p67 = scmp.eq.s32.totalorder %s20, 0
      %p68 = por %p66, %p67
      %s70 = sadd.s32 %s69, 1
      %p73 = scmp.eq.s32.totalorder %s14, 1
      %p74 = scmp.ne.s32.totalorder %s69, %s71
      %p75 = scmp.eq.s32.totalorder %s14, 0
      %p76 = por %p74, %p75
      %p77 = scmp.ne.s32.totalorder %s69, %s71
      %p78 = scmp.eq.s32.totalorder %s19, 1
      %p79 = por %p77, %p78
      %p80 = scmp.ne.s32.totalorder %s71, %s72
      %p81 = scmp.eq.s32.totalorder %s19, 0
      %p82 = por %p80, %p81
      %p83 = scmp.ne.s32.totalorder %s71, %s72
      %p84 = scmp.eq.s32.totalorder %s20, 1
      %p85 = por %p83, %p84
      %p87 = scmp.ne.s32.totalorder %s72, %s86
      %p88 = scmp.eq.s32.totalorder %s20, 0
      %p89 = por %p87, %p88
      %s91 = sadd.s32 %s90, 1
      %p94 = scmp.eq.s32.totalorder %s14, 1
      %p95 = scmp.ne.s32.totalorder %s90, %s92
      %p96 = scmp.eq.s32.totalorder %s14, 0
      %p97 = por %p95, %p96
      %p98 = scmp.ne.s32.totalorder %s90, %s92
      %p99 = scmp.eq.s32.totalorder %s19, 1
      %p100 = por %p98, %p99
      %p101 = scmp.ne.s32.totalorder %s92, %s93
      %p102 = scmp.eq.s32.totalorder %s19, 0
      %p103 = por %p101, %p102
      %p104 = scmp.ne.s32.totalorder %s92, %s93
      %p105 = scmp.eq.s32.totalorder %s20, 1
      %p106 = por %p104, %p105
      %p108 = scmp.ne.s32.totalorder %s93, %s107
      %p109 = scmp.eq.s32.totalorder %s20, 0
      %p110 = por %p108, %p109
      %s112 = sadd.s32 %s111, 1
      %p115 = scmp.eq.s32.totalorder %s14, 1
      %p116 = scmp.ne.s32.totalorder %s111, %s113
      %p117 = scmp.eq.s32.totalorder %s14, 0
      %p118 = por %p116, %p117
      %p119 = scmp.ne.s32.totalorder %s111, %s113
      %p120 = scmp.eq.s32.totalorder %s19, 1
      %p121 = por %p119, %p120
      %p122 = scmp.ne.s32.totalorder %s113, %s114
      %p123 = scmp.eq.s32.totalorder %s19, 0
      %p124 = por %p122, %p123
      %p125 = scmp.ne.s32.totalorder %s113, %s114
      %p126 = scmp.eq.s32.totalorder %s20, 1
      %p127 = por %p125, %p126
      %p129 = scmp.ne.s32.totalorder %s114, %s128
      %p130 = scmp.eq.s32.totalorder %s20, 0
      %p131 = por %p129, %p130
      %s132 = ssub.s32 %s14, %s21
      %p133 = scmp.eq.s32.totalorder %s132, 0
      %s135 = sadd.s32 %s134, 1
      %s136 = scalar_select %p133, %s134, %s135
      %p139 = pneg %p133
      %p140 = scmp.eq.s32.totalorder %s14, 1
      %p141 = por %p139, %p140
      %p142 = scmp.ne.s32.totalorder %s134, %s137
      %p143 = scmp.eq.s32.totalorder %s14, 0
      %p144 = por %p142, %p143
      %p145 = scmp.ne.s32.totalorder %s134, %s137
      %p146 = scmp.eq.s32.totalorder %s19, 1
      %p147 = por %p145, %p146
      %p148 = scmp.ne.s32.totalorder %s137, %s138
      %p149 = scmp.eq.s32.totalorder %s19, 0
      %p150 = por %p148, %p149
      %p151 = scmp.ne.s32.totalorder %s137, %s138
      %p152 = scmp.eq.s32.totalorder %s20, 1
      %p153 = por %p151, %p152
      %p155 = scmp.ne.s32.totalorder %s138, %s154
      %p156 = scmp.eq.s32.totalorder %s20, 0
      %p157 = por %p155, %p156
      %p158 = scmp.le.s32.totalorder 1, %s14
      %p159 = scmp.lt.s32.totalorder %s14, 3
      %p160 = pnand %p158, %p159
      %p161 = pneg %p160
      // Predicated region
      $region9: #{net_cifar_forward.1} parent=5 // pred_check
        _
      $region10: #{net_cifar_forward.1} parent=5 // pred_check_branch
        %163 = sbr.rel (%p160) target = $region12
      $region11: #{net_cifar_forward.1} parent=5 // pred_region
        %s164 = ssub.s32 %s14, 1
        // Predicated region
        $region13: #{net_cifar_forward.1} parent=11 // pred_check
          %p165 = pneg %p61
        $region14: #{net_cifar_forward.1} parent=11 // pred_check_branch
          %167 = sbr.rel (%p165) target = $region16
        $region15: #{net_cifar_forward.1} parent=11 // pred_region
          _
        $region16: #{net_cifar_forward.1} parent=11 // pred_fallthru
          _
        // Predicated region
        $region17: #{net_cifar_forward.1} parent=11 // pred_check
          %p168 = pneg %p82
        $region18: #{net_cifar_forward.1} parent=11 // pred_check_branch
          %170 = sbr.rel (%p168) target = $region20
        $region19: #{net_cifar_forward.1} parent=11 // pred_region
          _
        $region20: #{net_cifar_forward.1} parent=11 // pred_fallthru
          _
        // Predicated region
        $region21: #{net_cifar_forward.1} parent=11 // pred_check
          %p171 = pneg %p103
        $region22: #{net_cifar_forward.1} parent=11 // pred_check_branch
          %173 = sbr.rel (%p171) target = $region24
        $region23: #{net_cifar_forward.1} parent=11 // pred_region
          _
        $region24: #{net_cifar_forward.1} parent=11 // pred_fallthru
          _
        // Predicated region
        $region25: #{net_cifar_forward.1} parent=11 // pred_check
          %p174 = pneg %p124
        $region26: #{net_cifar_forward.1} parent=11 // pred_check_branch
          %176 = sbr.rel (%p174) target = $region28
        $region27: #{net_cifar_forward.1} parent=11 // pred_region
          _
        $region28: #{net_cifar_forward.1} parent=11 // pred_fallthru
          _
      $region12: #{net_cifar_forward.1} parent=5 // pred_fallthru
        _
      %p177 = scmp.lt.s32.totalorder %s14, 2
      // Predicated region
      $region29: #{net_cifar_forward.1} parent=5 // pred_check
        %p178 = pneg %p177
      $region30: #{net_cifar_forward.1} parent=5 // pred_check_branch
        %180 = sbr.rel (%p178) target = $region32
      $region31: #{net_cifar_forward.1} parent=5 // pred_region
        // Predicated region
        $region33: #{net_cifar_forward.1} parent=31 // pred_check
          %p181 = pneg %p34
        $region34: #{net_cifar_forward.1} parent=31 // pred_check_branch
          %183 = sbr.rel (%p181) target = $region36
        $region35: #{net_cifar_forward.1} parent=31 // pred_region
          %s184 = sand.u32 %s24, 1
          %s185 = sand.u32 %s24, 1
          %s186 = smul.addr %s185, 256
          %s187 = scalar_lea.vmem [#allocation2], %s186
          %s188 = smul.addr %s14, 8
          %s189 = scalar_lea.vmem %s0, %s188
          // Predicated region
          $region37: #{net_cifar_forward.1} parent=35 // pred_check
            _
          $region38: #{net_cifar_forward.1} parent=35 // pred_check_branch
            %191 = sbr.rel (0) target = $region40
          $region39: #{net_cifar_forward.1} parent=35 // pred_region
            // Predicated region
            $region41: #{net_cifar_forward.1} parent=39 // pred_check
              _
            $region42: #{net_cifar_forward.1} parent=39 // pred_check_branch
              %193 = sbr.rel (0) target = $region44
            $region43: #{net_cifar_forward.1} parent=39 // pred_region
              // Predicated region
              $region56: #{net_cifar_forward.1} parent=43 // pred_check
                _
              $region57: #{net_cifar_forward.1} parent=43 // pred_check_branch
                %271 = sbr.rel (0) target = $region59
              $region58: #{net_cifar_forward.1} parent=43 // pred_region
                loop: start=0, step=1, limit=1
                $region60: #{net_cifar_forward.1} parent=58 // loop_pre_header
                  _
                $region61: #{net_cifar_forward.1} parent=58 // loop_header
                  %s273 = sphi 0, %s277
                  %p274 = scmp.ge.s32.totalorder %s273, 1
                  %s278 = sphi %s189, %s189
                  %s279 = sphi %s187, %s187
                $region62: #{net_cifar_forward.1} parent=58 // loop_header_branch
                  %276 = sbr.rel (%p274) target = $region66
                $region63: #{net_cifar_forward.1} parent=58 // loop_body
                  %v280 = vld [vmem:[%s278] sm:$0xff]
                  %281 = vst [vmem:[%s279] sm:$0xff] %v280
                  %v282 = vld [vmem:[%s278 + $0x10] sm:$0xff]
                  %283 = vst [vmem:[%s279 + $0x8] sm:$0xff] %v282
                  %v284 = vld [vmem:[%s278 + $0x20] sm:$0xff]
                  %285 = vst [vmem:[%s279 + $0x10] sm:$0xff] %v284
                  %v286 = vld [vmem:[%s278 + $0x30] sm:$0xff]
                  %287 = vst [vmem:[%s279 + $0x18] sm:$0xff] %v286
                  %v288 = vld [vmem:[%s278 + $0x40] sm:$0xff]
                  %289 = vst [vmem:[%s279 + $0x20] sm:$0xff] %v288
                  %v290 = vld [vmem:[%s278 + $0x50] sm:$0xff]
                  %291 = vst [vmem:[%s279 + $0x28] sm:$0xff] %v290
                  %v292 = vld [vmem:[%s278 + $0x60] sm:$0xff]
                  %293 = vst [vmem:[%s279 + $0x30] sm:$0xff] %v292
                  %v294 = vld [vmem:[%s278 + $0x70] sm:$0xff]
                  %295 = vst [vmem:[%s279 + $0x38] sm:$0xff] %v294
                  %v296 = vld [vmem:[%s278 + $0x80] sm:$0xff]
                  %297 = vst [vmem:[%s279 + $0x40] sm:$0xff] %v296
                  %v298 = vld [vmem:[%s278 + $0x90] sm:$0xff]
                  %299 = vst [vmem:[%s279 + $0x48] sm:$0xff] %v298
                  %v300 = vld [vmem:[%s278 + $0xa0] sm:$0xff]
                  %301 = vst [vmem:[%s279 + $0x50] sm:$0xff] %v300
                  %v302 = vld [vmem:[%s278 + $0xb0] sm:$0xff]
                  %303 = vst [vmem:[%s279 + $0x58] sm:$0xff] %v302
                  %v304 = vld [vmem:[%s278 + $0xc0] sm:$0xff]
                  %305 = vst [vmem:[%s279 + $0x60] sm:$0xff] %v304
                  %v306 = vld [vmem:[%s278 + $0xd0] sm:$0xff]
                  %307 = vst [vmem:[%s279 + $0x68] sm:$0xff] %v306
                  %v308 = vld [vmem:[%s278 + $0xe0] sm:$0xff]
                  %309 = vst [vmem:[%s279 + $0x70] sm:$0xff] %v308
                  %v310 = vld [vmem:[%s278 + $0xf0] sm:$0xff]
                  %311 = vst [vmem:[%s279 + $0x78] sm:$0xff] %v310
                  %v312 = vld [vmem:[%s278 + $0x100] sm:$0xff]
                  %313 = vst [vmem:[%s279 + $0x80] sm:$0xff] %v312
                  %v314 = vld [vmem:[%s278 + $0x110] sm:$0xff]
                  %315 = vst [vmem:[%s279 + $0x88] sm:$0xff] %v314
                  %v316 = vld [vmem:[%s278 + $0x120] sm:$0xff]
                  %317 = vst [vmem:[%s279 + $0x90] sm:$0xff] %v316
                  %v318 = vld [vmem:[%s278 + $0x130] sm:$0xff]
                  %319 = vst [vmem:[%s279 + $0x98] sm:$0xff] %v318
                  %v320 = vld [vmem:[%s278 + $0x140] sm:$0xff]
                  %321 = vst [vmem:[%s279 + $0xa0] sm:$0xff] %v320
                  %v322 = vld [vmem:[%s278 + $0x150] sm:$0xff]
                  %323 = vst [vmem:[%s279 + $0xa8] sm:$0xff] %v322
                  %v324 = vld [vmem:[%s278 + $0x160] sm:$0xff]
                  %325 = vst [vmem:[%s279 + $0xb0] sm:$0xff] %v324
                  %v326 = vld [vmem:[%s278 + $0x170] sm:$0xff]
                  %327 = vst [vmem:[%s279 + $0xb8] sm:$0xff] %v326
                  %v328 = vld [vmem:[%s278 + $0x180] sm:$0xff]
                  %329 = vst [vmem:[%s279 + $0xc0] sm:$0xff] %v328
                  %v330 = vld [vmem:[%s278 + $0x190] sm:$0xff]
                  %331 = vst [vmem:[%s279 + $0xc8] sm:$0xff] %v330
                  %v332 = vld [vmem:[%s278 + $0x1a0] sm:$0xff]
                  %333 = vst [vmem:[%s279 + $0xd0] sm:$0xff] %v332
                  %v334 = vld [vmem:[%s278 + $0x1b0] sm:$0xff]
                  %335 = vst [vmem:[%s279 + $0xd8] sm:$0xff] %v334
                  %v336 = vld [vmem:[%s278 + $0x1c0] sm:$0xff]
                  %337 = vst [vmem:[%s279 + $0xe0] sm:$0xff] %v336
                  %v338 = vld [vmem:[%s278 + $0x1d0] sm:$0xff]
                  %339 = vst [vmem:[%s279 + $0xe8] sm:$0xff] %v338
                  %v340 = vld [vmem:[%s278 + $0x1e0] sm:$0xff]
                  %341 = vst [vmem:[%s279 + $0xf0] sm:$0xff] %v340
                  %v342 = vld [vmem:[%s278 + $0x1f0] sm:$0xff]
                  %343 = vst [vmem:[%s279 + $0xf8] sm:$0xff] %v342
                $region64: #{net_cifar_forward.1} parent=58 // loop_footer
                  %s277 = sadd.s32 1, %s273
                $region65: #{net_cifar_forward.1} parent=58 // loop_footer_branch
                  %272 = sbr.rel target = $region61
                $region66: #{net_cifar_forward.1} parent=58 // loop_exit
                  _
              $region59: #{net_cifar_forward.1} parent=43 // pred_fallthru
                _
              // Predicated region
              $region67: #{net_cifar_forward.1} parent=43 // pred_check
                _
              $region68: #{net_cifar_forward.1} parent=43 // pred_check_branch
                %345 = sbr.rel target = $region70
              $region69: #{net_cifar_forward.1} parent=43 // pred_region
                _
              $region70: #{net_cifar_forward.1} parent=43 // pred_fallthru
                _
            $region44: #{net_cifar_forward.1} parent=39 // pred_fallthru
              _
            // Predicated region
            $region45: #{net_cifar_forward.1} parent=39 // pred_check
              _
            $region46: #{net_cifar_forward.1} parent=39 // pred_check_branch
              %195 = sbr.rel target = $region48
            $region47: #{net_cifar_forward.1} parent=39 // pred_region
              %s197 = ssub.s32 256, 1
              loop: start=0, step=1, limit=1
              $region49: #{net_cifar_forward.1} parent=47 // loop_pre_header
                _
              $region50: #{net_cifar_forward.1} parent=47 // loop_header
                %s199 = sphi 0, %s203
                %p200 = scmp.ge.s32.totalorder %s199, 1
                %s204 = sphi %s189, %s189
                %s205 = sphi %s187, %s187
              $region51: #{net_cifar_forward.1} parent=47 // loop_header_branch
                %202 = sbr.rel (%p200) target = $region55
              $region52: #{net_cifar_forward.1} parent=47 // loop_body
                %v206 = vld [vmem:[%s204] sm:%s197]
                %207 = vst [vmem:[%s205] sm:%s197] %v206
                %v208 = vld [vmem:[%s204 + $0x10] sm:%s197]
                %209 = vst [vmem:[%s205 + $0x8] sm:%s197] %v208
                %v210 = vld [vmem:[%s204 + $0x20] sm:%s197]
                %211 = vst [vmem:[%s205 + $0x10] sm:%s197] %v210
                %v212 = vld [vmem:[%s204 + $0x30] sm:%s197]
                %213 = vst [vmem:[%s205 + $0x18] sm:%s197] %v212
                %v214 = vld [vmem:[%s204 + $0x40] sm:%s197]
                %215 = vst [vmem:[%s205 + $0x20] sm:%s197] %v214
                %v216 = vld [vmem:[%s204 + $0x50] sm:%s197]
                %217 = vst [vmem:[%s205 + $0x28] sm:%s197] %v216
                %v218 = vld [vmem:[%s204 + $0x60] sm:%s197]
                %219 = vst [vmem:[%s205 + $0x30] sm:%s197] %v218
                %v220 = vld [vmem:[%s204 + $0x70] sm:%s197]
                %221 = vst [vmem:[%s205 + $0x38] sm:%s197] %v220
                %v222 = vld [vmem:[%s204 + $0x80] sm:%s197]
                %223 = vst [vmem:[%s205 + $0x40] sm:%s197] %v222
                %v224 = vld [vmem:[%s204 + $0x90] sm:%s197]
                %225 = vst [vmem:[%s205 + $0x48] sm:%s197] %v224
                %v226 = vld [vmem:[%s204 + $0xa0] sm:%s197]
                %227 = vst [vmem:[%s205 + $0x50] sm:%s197] %v226
                %v228 = vld [vmem:[%s204 + $0xb0] sm:%s197]
                %229 = vst [vmem:[%s205 + $0x58] sm:%s197] %v228
                %v230 = vld [vmem:[%s204 + $0xc0] sm:%s197]
                %231 = vst [vmem:[%s205 + $0x60] sm:%s197] %v230
                %v232 = vld [vmem:[%s204 + $0xd0] sm:%s197]
                %233 = vst [vmem:[%s205 + $0x68] sm:%s197] %v232
                %v234 = vld [vmem:[%s204 + $0xe0] sm:%s197]
                %235 = vst [vmem:[%s205 + $0x70] sm:%s197] %v234
                %v236 = vld [vmem:[%s204 + $0xf0] sm:%s197]
                %237 = vst [vmem:[%s205 + $0x78] sm:%s197] %v236
                %v238 = vld [vmem:[%s204 + $0x100] sm:%s197]
                %239 = vst [vmem:[%s205 + $0x80] sm:%s197] %v238
                %v240 = vld [vmem:[%s204 + $0x110] sm:%s197]
                %241 = vst [vmem:[%s205 + $0x88] sm:%s197] %v240
                %v242 = vld [vmem:[%s204 + $0x120] sm:%s197]
                %243 = vst [vmem:[%s205 + $0x90] sm:%s197] %v242
                %v244 = vld [vmem:[%s204 + $0x130] sm:%s197]
                %245 = vst [vmem:[%s205 + $0x98] sm:%s197] %v244
                %v246 = vld [vmem:[%s204 + $0x140] sm:%s197]
                %247 = vst [vmem:[%s205 + $0xa0] sm:%s197] %v246
                %v248 = vld [vmem:[%s204 + $0x150] sm:%s197]
                %249 = vst [vmem:[%s205 + $0xa8] sm:%s197] %v248
                %v250 = vld [vmem:[%s204 + $0x160] sm:%s197]
                %251 = vst [vmem:[%s205 + $0xb0] sm:%s197] %v250
                %v252 = vld [vmem:[%s204 + $0x170] sm:%s197]
                %253 = vst [vmem:[%s205 + $0xb8] sm:%s197] %v252
                %v254 = vld [vmem:[%s204 + $0x180] sm:%s197]
                %255 = vst [vmem:[%s205 + $0xc0] sm:%s197] %v254
                %v256 = vld [vmem:[%s204 + $0x190] sm:%s197]
                %257 = vst [vmem:[%s205 + $0xc8] sm:%s197] %v256
                %v258 = vld [vmem:[%s204 + $0x1a0] sm:%s197]
                %259 = vst [vmem:[%s205 + $0xd0] sm:%s197] %v258
                %v260 = vld [vmem:[%s204 + $0x1b0] sm:%s197]
                %261 = vst [vmem:[%s205 + $0xd8] sm:%s197] %v260
                %v262 = vld [vmem:[%s204 + $0x1c0] sm:%s197]
                %263 = vst [vmem:[%s205 + $0xe0] sm:%s197] %v262
                %v264 = vld [vmem:[%s204 + $0x1d0] sm:%s197]
                %265 = vst [vmem:[%s205 + $0xe8] sm:%s197] %v264
                %v266 = vld [vmem:[%s204 + $0x1e0] sm:%s197]
                %267 = vst [vmem:[%s205 + $0xf0] sm:%s197] %v266
                %v268 = vld [vmem:[%s204 + $0x1f0] sm:%s197]
                %269 = vst [vmem:[%s205 + $0xf8] sm:%s197] %v268
              $region53: #{net_cifar_forward.1} parent=47 // loop_footer
                %s203 = sadd.s32 1, %s199
              $region54: #{net_cifar_forward.1} parent=47 // loop_footer_branch
                %198 = sbr.rel target = $region50
              $region55: #{net_cifar_forward.1} parent=47 // loop_exit
                _
            $region48: #{net_cifar_forward.1} parent=39 // pred_fallthru
              _
          $region40: #{net_cifar_forward.1} parent=35 // pred_fallthru
            _
          %346 = vnop
        $region36: #{net_cifar_forward.1} parent=31 // pred_fallthru
          _
      $region32: #{net_cifar_forward.1} parent=5 // pred_fallthru
        _
      %p347 = scmp.le.s32.totalorder 1, %s14
      %p348 = scmp.lt.s32.totalorder %s14, 3
      %p349 = pnand %p347, %p348
      %p350 = pneg %p349
      // Predicated region
      $region71: #{net_cifar_forward.1} parent=5 // pred_check
        _
      $region72: #{net_cifar_forward.1} parent=5 // pred_check_branch
        %352 = sbr.rel (%p349) target = $region74
      $region73: #{net_cifar_forward.1} parent=5 // pred_region
        %s353 = ssub.s32 %s14, 1
        %s354 = sand.u32 %s27, 1
        %s355 = sand.u32 %s27, 1
        %s356 = smul.addr %s355, 256
        %s357 = scalar_lea.vmem [#allocation2], %s356
        // Predicated region
        $region75: #{net_cifar_forward.1} parent=73 // pred_check
          %p358 = pneg %p40
        $region76: #{net_cifar_forward.1} parent=73 // pred_check_branch
          %360 = sbr.rel (%p358) target = $region78
        $region77: #{net_cifar_forward.1} parent=73 // pred_region
          _
        $region78: #{net_cifar_forward.1} parent=73 // pred_fallthru
          _
        %s361 = sand.u32 %s27, 1
        %s362 = sand.u32 %s27, 1
        %s363 = smul.addr %s362, 256
        %s364 = scalar_lea.vmem [#allocation2], %s363
        %p365 = pneg %p40
        %p366 = pneg %p37
        %p367 = pneg %p61
        %p368 = pneg %p58
        %p369 = pneg %p82
        %p370 = pneg %p79
        %p371 = pneg %p103
        %p372 = pneg %p100
        %p373 = pneg %p124
        %p374 = pneg %p121
        %p375 = pneg %p150
        %p376 = pneg %p147
        %s377 = sand.u32 %s137, 1
        %s378 = scalar_lea.sflag [#allocation4], %s377
        %s379 = sand.u32 %s137, 1
        %s380 = smul.addr %s379, 8
        %s381 = scalar_lea.vmem [#allocation3], %s380
        %v383 = vld [vmem:[%s357] sm:$0xff]
        %v384 = vld [vmem:[%s357 + $0x8] sm:$0xff]
        %v385 = vld [vmem:[%s357 + $0x10] sm:$0xff]
        %v386 = vld [vmem:[%s357 + $0x18] sm:$0xff]
        %v387 = vld [vmem:[%s357 + $0x20] sm:$0xff]
        %v388 = vld [vmem:[%s357 + $0x28] sm:$0xff]
        %v389 = vld [vmem:[%s357 + $0x30] sm:$0xff]
        %v390 = vld [vmem:[%s357 + $0x38] sm:$0xff]
        %v391 = vld [vmem:[%s357 + $0x40] sm:$0xff]
        %v392 = vld [vmem:[%s357 + $0x48] sm:$0xff]
        %v393 = vld [vmem:[%s357 + $0x50] sm:$0xff]
        %v394 = vld [vmem:[%s357 + $0x58] sm:$0xff]
        %v395 = vld [vmem:[%s357 + $0x60] sm:$0xff]
        %v396 = vld [vmem:[%s357 + $0x68] sm:$0xff]
        %v397 = vld [vmem:[%s357 + $0x70] sm:$0xff]
        %v398 = vld [vmem:[%s357 + $0x78] sm:$0xff]
        %v399 = vld [vmem:[%s357 + $0x80] sm:$0xff]
        %v400 = vld [vmem:[%s357 + $0x88] sm:$0xff]
        %v401 = vld [vmem:[%s357 + $0x90] sm:$0xff]
        %v402 = vld [vmem:[%s357 + $0x98] sm:$0xff]
        %v403 = vld [vmem:[%s357 + $0xa0] sm:$0xff]
        %v404 = vld [vmem:[%s357 + $0xa8] sm:$0xff]
        %v405 = vld [vmem:[%s357 + $0xb0] sm:$0xff]
        %v406 = vld [vmem:[%s357 + $0xb8] sm:$0xff]
        %v407 = vld [vmem:[%s357 + $0xc0] sm:$0xff]
        %v408 = vld [vmem:[%s357 + $0xc8] sm:$0xff]
        %v409 = vld [vmem:[%s357 + $0xd0] sm:$0xff]
        %v410 = vld [vmem:[%s357 + $0xd8] sm:$0xff]
        %v411 = vld [vmem:[%s357 + $0xe0] sm:$0xff]
        %v412 = vld [vmem:[%s357 + $0xe8] sm:$0xff]
        %v413 = vld [vmem:[%s357 + $0xf0] sm:$0xff]
        %v414 = vld [vmem:[%s357 + $0xf8] sm:$0xff]
        %v415 = vpack.c.bf16 %v384, %v383
        %v416 = vpack.c.bf16 %v386, %v385
        %v417 = vpack.c.bf16 %v388, %v387
        %v418 = vpack.c.bf16 %v390, %v389
        %v419 = vpack.c.bf16 %v392, %v391
        %v420 = vpack.c.bf16 %v394, %v393
        %v421 = vpack.c.bf16 %v396, %v395
        %v422 = vpack.c.bf16 %v398, %v397
        %v423 = vpack.c.bf16 %v400, %v399
        %v424 = vpack.c.bf16 %v402, %v401
        %v425 = vpack.c.bf16 %v404, %v403
        %v426 = vpack.c.bf16 %v406, %v405
        %v427 = vpack.c.bf16 %v408, %v407
        %v428 = vpack.c.bf16 %v410, %v409
        %v429 = vld [vmem:[%s1] sm:$0xff]
        %v430 = vld [vmem:[%s1 + $0x8] sm:$0xf]
        %v431 = vld [vmem:[%s1 + $0xc] sm:$0xff]
        %v432 = vld [vmem:[%s1 + $0x14] sm:$0xf]
        %v433 = vld [vmem:[%s1 + $0x18] sm:$0xff]
        %v434 = vld [vmem:[%s1 + $0x20] sm:$0xf]
        %v435 = vld [vmem:[%s1 + $0x24] sm:$0xff]
        %v436 = vld [vmem:[%s1 + $0x2c] sm:$0xf]
        %v437 = vld [vmem:[%s1 + $0x30] sm:$0xff]
        %v438 = vld [vmem:[%s1 + $0x38] sm:$0xf]
        %v439 = vld [vmem:[%s1 + $0x3c] sm:$0xff]
        %v440 = vld [vmem:[%s1 + $0x44] sm:$0xf]
        %v441 = vld [vmem:[%s1 + $0x48] sm:$0xff]
        %v442 = vld [vmem:[%s1 + $0x50] sm:$0xf]
        %v443 = vld [vmem:[%s1 + $0x54] sm:$0xff]
        %v444 = vld [vmem:[%s1 + $0x5c] sm:$0xf]
        %v445 = vld [vmem:[%s1 + $0x60] sm:$0xff]
        %v446 = vld [vmem:[%s1 + $0x68] sm:$0xf]
        %v447 = vld [vmem:[%s1 + $0x6c] sm:$0xff]
        %v448 = vld [vmem:[%s1 + $0x74] sm:$0xf]
        %v449 = vld [vmem:[%s1 + $0x78] sm:$0xff]
        %v450 = vld [vmem:[%s1 + $0x80] sm:$0xf]
        %v451 = vld [vmem:[%s1 + $0x84] sm:$0xff]
        %v452 = vld [vmem:[%s1 + $0x8c] sm:$0xf]
        %v453 = vpack.c.bf16 %v385, %v384
        %v454 = vpack.c.bf16 %v387, %v386
        %v455 = vpack.c.bf16 %v389, %v388
        %v456 = vpack.c.bf16 %v391, %v390
        %v457 = vpack.c.bf16 %v393, %v392
        %v458 = vpack.c.bf16 %v395, %v394
        %v459 = vpack.c.bf16 %v397, %v396
        %v460 = vpack.c.bf16 %v399, %v398
        %v461 = vpack.c.bf16 %v401, %v400
        %v462 = vpack.c.bf16 %v403, %v402
        %v463 = vpack.c.bf16 %v405, %v404
        %v464 = vpack.c.bf16 %v407, %v406
        %v465 = vpack.c.bf16 %v409, %v408
        %v466 = vpack.c.bf16 %v411, %v410
        %s467 = scalar_lea.vmem %s1, 144
        %v468 = vld [vmem:[%s467] sm:$0xff]
        %v469 = vld [vmem:[%s467 + $0x8] sm:$0xf]
        %v470 = vld [vmem:[%s467 + $0xc] sm:$0xff]
        %v471 = vld [vmem:[%s467 + $0x14] sm:$0xf]
        %v472 = vld [vmem:[%s467 + $0x18] sm:$0xff]
        %v473 = vld [vmem:[%s467 + $0x20] sm:$0xf]
        %v474 = vld [vmem:[%s467 + $0x24] sm:$0xff]
        %v475 = vld [vmem:[%s467 + $0x2c] sm:$0xf]
        %v476 = vld [vmem:[%s467 + $0x30] sm:$0xff]
        %v477 = vld [vmem:[%s467 + $0x38] sm:$0xf]
        %v478 = vld [vmem:[%s467 + $0x3c] sm:$0xff]
        %v479 = vld [vmem:[%s467 + $0x44] sm:$0xf]
        %v480 = vld [vmem:[%s467 + $0x48] sm:$0xff]
        %v481 = vld [vmem:[%s467 + $0x50] sm:$0xf]
        %v482 = vld [vmem:[%s467 + $0x54] sm:$0xff]
        %v483 = vld [vmem:[%s467 + $0x5c] sm:$0xf]
        %v484 = vld [vmem:[%s467 + $0x60] sm:$0xff]
        %v485 = vld [vmem:[%s467 + $0x68] sm:$0xf]
        %v486 = vld [vmem:[%s467 + $0x6c] sm:$0xff]
        %v487 = vld [vmem:[%s467 + $0x74] sm:$0xf]
        %v488 = vld [vmem:[%s467 + $0x78] sm:$0xff]
        %v489 = vld [vmem:[%s467 + $0x80] sm:$0xf]
        %v490 = vld [vmem:[%s467 + $0x84] sm:$0xff]
        %v491 = vld [vmem:[%s467 + $0x8c] sm:$0xf]
        %v516 = vunpack.c.l.b16 %v468
        %v517 = vunpack.c.h.b16 %v468
        %v518 = vunpack.c.l.b16 %v469
        %v519 = vunpack.c.l.b16 %v470
        %v520 = vunpack.c.h.b16 %v470
        %v521 = vunpack.c.l.b16 %v471
        %v522 = vunpack.c.l.b16 %v472
        %v523 = vunpack.c.h.b16 %v472
        %v524 = vunpack.c.l.b16 %v473
        %v525 = vunpack.c.l.b16 %v474
        %v526 = vunpack.c.h.b16 %v474
        %v527 = vunpack.c.l.b16 %v475
        %v528 = vunpack.c.l.b16 %v476
        %v529 = vunpack.c.h.b16 %v476
        %v530 = vunpack.c.l.b16 %v477
        %v531 = vunpack.c.l.b16 %v478
        %v532 = vunpack.c.h.b16 %v478
        %v533 = vunpack.c.l.b16 %v479
        %v534 = vunpack.c.l.b16 %v480
        %v535 = vunpack.c.h.b16 %v480
        %v536 = vunpack.c.l.b16 %v481
        %v537 = vunpack.c.l.b16 %v482
        %v538 = vunpack.c.h.b16 %v482
        %v539 = vunpack.c.l.b16 %v483
        %v540 = vunpack.c.l.b16 %v484
        %v541 = vunpack.c.h.b16 %v484
        %v542 = vunpack.c.l.b16 %v485
        %v543 = vunpack.c.l.b16 %v486
        %v544 = vunpack.c.h.b16 %v486
        %v545 = vunpack.c.l.b16 %v487
        %v546 = vunpack.c.l.b16 %v488
        %v547 = vunpack.c.h.b16 %v488
        %v548 = vunpack.c.l.b16 %v489
        %v549 = vunpack.c.l.b16 %v490
        %v550 = vunpack.c.h.b16 %v490
        %v551 = vunpack.c.l.b16 %v491
        %v552 = vpack.c.b16 %v519, %v516
        %v553 = vpack.c.b16 %v520, %v517
        %v554 = vpack.c.b16 %v521, %v518
        %v555 = vpack.c.b16 %v525, %v522
        %v556 = vpack.c.b16 %v526, %v523
        %v557 = vpack.c.b16 %v527, %v524
        %v558 = vpack.c.b16 %v531, %v528
        %v559 = vpack.c.b16 %v532, %v529
        %v560 = vpack.c.b16 %v533, %v530
        %v561 = vpack.c.b16 %v537, %v534
        %v562 = vpack.c.b16 %v538, %v535
        %v563 = vpack.c.b16 %v539, %v536
        %v564 = vpack.c.b16 %v543, %v540
        %v565 = vpack.c.b16 %v544, %v541
        %v566 = vpack.c.b16 %v545, %v542
        %v567 = vpack.c.b16 %v549, %v546
        %v568 = vpack.c.b16 %v550, %v547
        %v569 = vpack.c.b16 %v551, %v548
        %vm588 = vcmask 785408
        %v590 = vsel %vm588, %v453, 0
        %v593 = vsel %vm588, %v454, 0
        %v596 = vsel %vm588, %v455, 0
        %v599 = vsel %vm588, %v456, 0
        %v602 = vsel %vm588, %v457, 0
        %v605 = vsel %vm588, %v458, 0
        %v608 = vsel %vm588, %v459, 0
        %v611 = vsel %vm588, %v460, 0
        %v614 = vsel %vm588, %v461, 0
        %v617 = vsel %vm588, %v462, 0
        %v620 = vsel %vm588, %v463, 0
        %v623 = vsel %vm588, %v464, 0
        %v626 = vsel %vm588, %v465, 0
        %v629 = vsel %vm588, %v466, 0
        %631 = vmatpush.bf16.msra.mxu0 0
        %632 = vmatpush.bf16.msra.mxu0 0
        %633 = vmatpush.bf16.msra.mxu0 %v567
        %634 = vmatpush.bf16.msra.mxu0 %v564
        %635 = vmatpush.bf16.msra.mxu0 %v561
        %636 = vmatpush.bf16.msra.mxu0 %v558
        %637 = vmatpush.bf16.msra.mxu0 %v555
        %638 = vmatpush.bf16.msra.mxu0 %v552
        %639 = vmatmul.bf16.gmra.mxu0 %v590
        %v640 = vpop.f32.mrf.mxu0
        %v641 = vadd.f32 0.0, %v640
        %v642 = vpop.f32.mrf.mxu0
        %v643 = vadd.f32 0.0, %v642
        %644 = vmatmul.bf16.gmra.mxu0 %v593
        %v645 = vpop.f32.mrf.mxu0
        %v646 = vadd.f32 0.0, %v645
        %v647 = vpop.f32.mrf.mxu0
        %v648 = vadd.f32 0.0, %v647
        %649 = vmatmul.bf16.gmra.mxu0 %v596
        %v650 = vpop.f32.mrf.mxu0
        %v651 = vadd.f32 0.0, %v650
        %v652 = vpop.f32.mrf.mxu0
        %v653 = vadd.f32 0.0, %v652
        %654 = vmatmul.bf16.gmra.mxu0 %v599
        %v655 = vpop.f32.mrf.mxu0
        %v656 = vadd.f32 0.0, %v655
        %v657 = vpop.f32.mrf.mxu0
        %v658 = vadd.f32 0.0, %v657
        %659 = vmatmul.bf16.gmra.mxu0 %v602
        %v660 = vpop.f32.mrf.mxu0
        %v661 = vadd.f32 0.0, %v660
        %v662 = vpop.f32.mrf.mxu0
        %v663 = vadd.f32 0.0, %v662
        %664 = vmatmul.bf16.gmra.mxu0 %v605
        %v665 = vpop.f32.mrf.mxu0
        %v666 = vadd.f32 0.0, %v665
        %v667 = vpop.f32.mrf.mxu0
        %v668 = vadd.f32 0.0, %v667
        %669 = vmatmul.bf16.gmra.mxu0 %v608
        %v670 = vpop.f32.mrf.mxu0
        %v671 = vadd.f32 0.0, %v670
        %v672 = vpop.f32.mrf.mxu0
        %v673 = vadd.f32 0.0, %v672
        %674 = vmatmul.bf16.gmra.mxu0 %v611
        %v675 = vpop.f32.mrf.mxu0
        %v676 = vadd.f32 0.0, %v675
        %v677 = vpop.f32.mrf.mxu0
        %v678 = vadd.f32 0.0, %v677
        %679 = vmatmul.bf16.gmra.mxu0 %v614
        %v680 = vpop.f32.mrf.mxu0
        %v681 = vadd.f32 0.0, %v680
        %v682 = vpop.f32.mrf.mxu0
        %v683 = vadd.f32 0.0, %v682
        %684 = vmatmul.bf16.gmra.mxu0 %v617
        %v685 = vpop.f32.mrf.mxu0
        %v686 = vadd.f32 0.0, %v685
        %v687 = vpop.f32.mrf.mxu0
        %v688 = vadd.f32 0.0, %v687
        %689 = vmatmul.bf16.gmra.mxu0 %v620
        %v690 = vpop.f32.mrf.mxu0
        %v691 = vadd.f32 0.0, %v690
        %v692 = vpop.f32.mrf.mxu0
        %v693 = vadd.f32 0.0, %v692
        %694 = vmatmul.bf16.gmra.mxu0 %v623
        %v695 = vpop.f32.mrf.mxu0
        %v696 = vadd.f32 0.0, %v695
        %v697 = vpop.f32.mrf.mxu0
        %v698 = vadd.f32 0.0, %v697
        %699 = vmatmul.bf16.gmra.mxu0 %v626
        %v700 = vpop.f32.mrf.mxu0
        %v701 = vadd.f32 0.0, %v700
        %v702 = vpop.f32.mrf.mxu0
        %v703 = vadd.f32 0.0, %v702
        %704 = vmatmul.bf16.gmra.mxu0 %v629
        %v705 = vpop.f32.mrf.mxu0
        %v706 = vadd.f32 0.0, %v705
        %v707 = vpop.f32.mrf.mxu0
        %v708 = vadd.f32 0.0, %v707
        %709 = vdwg.mxu0
        %710 = vmatpush.bf16.msra.mxu0 0
        %711 = vmatpush.bf16.msra.mxu0 0
        %712 = vmatpush.bf16.msra.mxu0 %v568
        %713 = vmatpush.bf16.msra.mxu0 %v565
        %714 = vmatpush.bf16.msra.mxu0 %v562
        %715 = vmatpush.bf16.msra.mxu0 %v559
        %716 = vmatpush.bf16.msra.mxu0 %v556
        %717 = vmatpush.bf16.msra.mxu0 %v553
        %718 = vmatmul.bf16.gmra.mxu0 %v590
        %v719 = vpop.f32.mrf.mxu0
        %v720 = vadd.f32 0.0, %v719
        %v721 = vpop.f32.mrf.mxu0
        %v722 = vadd.f32 0.0, %v721
        %723 = vmatmul.bf16.gmra.mxu0 %v593
        %v724 = vpop.f32.mrf.mxu0
        %v725 = vadd.f32 0.0, %v724
        %v726 = vpop.f32.mrf.mxu0
        %v727 = vadd.f32 0.0, %v726
        %728 = vmatmul.bf16.gmra.mxu0 %v596
        %v729 = vpop.f32.mrf.mxu0
        %v730 = vadd.f32 0.0, %v729
        %v731 = vpop.f32.mrf.mxu0
        %v732 = vadd.f32 0.0, %v731
        %733 = vmatmul.bf16.gmra.mxu0 %v599
        %v734 = vpop.f32.mrf.mxu0
        %v735 = vadd.f32 0.0, %v734
        %v736 = vpop.f32.mrf.mxu0
        %v737 = vadd.f32 0.0, %v736
        %738 = vmatmul.bf16.gmra.mxu0 %v602
        %v739 = vpop.f32.mrf.mxu0
        %v740 = vadd.f32 0.0, %v739
        %v741 = vpop.f32.mrf.mxu0
        %v742 = vadd.f32 0.0, %v741
        %743 = vmatmul.bf16.gmra.mxu0 %v605
        %v744 = vpop.f32.mrf.mxu0
        %v745 = vadd.f32 0.0, %v744
        %v746 = vpop.f32.mrf.mxu0
        %v747 = vadd.f32 0.0, %v746
        %748 = vmatmul.bf16.gmra.mxu0 %v608
        %v749 = vpop.f32.mrf.mxu0
        %v750 = vadd.f32 0.0, %v749
        %v751 = vpop.f32.mrf.mxu0
        %v752 = vadd.f32 0.0, %v751
        %753 = vmatmul.bf16.gmra.mxu0 %v611
        %v754 = vpop.f32.mrf.mxu0
        %v755 = vadd.f32 0.0, %v754
        %v756 = vpop.f32.mrf.mxu0
        %v757 = vadd.f32 0.0, %v756
        %758 = vmatmul.bf16.gmra.mxu0 %v614
        %v759 = vpop.f32.mrf.mxu0
        %v760 = vadd.f32 0.0, %v759
        %v761 = vpop.f32.mrf.mxu0
        %v762 = vadd.f32 0.0, %v761
        %763 = vmatmul.bf16.gmra.mxu0 %v617
        %v764 = vpop.f32.mrf.mxu0
        %v765 = vadd.f32 0.0, %v764
        %v766 = vpop.f32.mrf.mxu0
        %v767 = vadd.f32 0.0, %v766
        %768 = vmatmul.bf16.gmra.mxu0 %v620
        %v769 = vpop.f32.mrf.mxu0
        %v770 = vadd.f32 0.0, %v769
        %v771 = vpop.f32.mrf.mxu0
        %v772 = vadd.f32 0.0, %v771
        %773 = vmatmul.bf16.gmra.mxu0 %v623
        %v774 = vpop.f32.mrf.mxu0
        %v775 = vadd.f32 0.0, %v774
        %v776 = vpop.f32.mrf.mxu0
        %v777 = vadd.f32 0.0, %v776
        %778 = vmatmul.bf16.gmra.mxu0 %v626
        %v779 = vpop.f32.mrf.mxu0
        %v780 = vadd.f32 0.0, %v779
        %v781 = vpop.f32.mrf.mxu0
        %v782 = vadd.f32 0.0, %v781
        %783 = vmatmul.bf16.gmra.mxu0 %v629
        %v784 = vpop.f32.mrf.mxu0
        %v785 = vadd.f32 0.0, %v784
        %v786 = vpop.f32.mrf.mxu0
        %v787 = vadd.f32 0.0, %v786
        %788 = vdwg.mxu0
        %789 = vmatpush.bf16.msra.mxu0 0
        %790 = vmatpush.bf16.msra.mxu0 0
        %791 = vmatpush.bf16.msra.mxu0 %v569
        %792 = vmatpush.bf16.msra.mxu0 %v566
        %793 = vmatpush.bf16.msra.mxu0 %v563
        %794 = vmatpush.bf16.msra.mxu0 %v560
        %795 = vmatpush.bf16.msra.mxu0 %v557
        %796 = vmatpush.bf16.msra.mxu0 %v554
        %797 = vmatmul.bf16.gmra.mxu0 %v590
        %v798 = vpop.f32.mrf.mxu0
        %v799 = vadd.f32 0.0, %v798
        %v800 = vpop.f32.mrf.mxu0
        %v801 = vadd.f32 0.0, %v800
        %802 = vmatmul.bf16.gmra.mxu0 %v593
        %v803 = vpop.f32.mrf.mxu0
        %v804 = vadd.f32 0.0, %v803
        %v805 = vpop.f32.mrf.mxu0
        %v806 = vadd.f32 0.0, %v805
        %807 = vmatmul.bf16.gmra.mxu0 %v596
        %v808 = vpop.f32.mrf.mxu0
        %v809 = vadd.f32 0.0, %v808
        %v810 = vpop.f32.mrf.mxu0
        %v811 = vadd.f32 0.0, %v810
        %812 = vmatmul.bf16.gmra.mxu0 %v599
        %v813 = vpop.f32.mrf.mxu0
        %v814 = vadd.f32 0.0, %v813
        %v815 = vpop.f32.mrf.mxu0
        %v816 = vadd.f32 0.0, %v815
        %817 = vmatmul.bf16.gmra.mxu0 %v602
        %v818 = vpop.f32.mrf.mxu0
        %v819 = vadd.f32 0.0, %v818
        %v820 = vpop.f32.mrf.mxu0
        %v821 = vadd.f32 0.0, %v820
        %822 = vmatmul.bf16.gmra.mxu0 %v605
        %v823 = vpop.f32.mrf.mxu0
        %v824 = vadd.f32 0.0, %v823
        %v825 = vpop.f32.mrf.mxu0
        %v826 = vadd.f32 0.0, %v825
        %827 = vmatmul.bf16.gmra.mxu0 %v608
        %v828 = vpop.f32.mrf.mxu0
        %v829 = vadd.f32 0.0, %v828
        %v830 = vpop.f32.mrf.mxu0
        %v831 = vadd.f32 0.0, %v830
        %832 = vmatmul.bf16.gmra.mxu0 %v611
        %v833 = vpop.f32.mrf.mxu0
        %v834 = vadd.f32 0.0, %v833
        %v835 = vpop.f32.mrf.mxu0
        %v836 = vadd.f32 0.0, %v835
        %837 = vmatmul.bf16.gmra.mxu0 %v614
        %v838 = vpop.f32.mrf.mxu0
        %v839 = vadd.f32 0.0, %v838
        %v840 = vpop.f32.mrf.mxu0
        %v841 = vadd.f32 0.0, %v840
        %842 = vmatmul.bf16.gmra.mxu0 %v617
        %v843 = vpop.f32.mrf.mxu0
        %v844 = vadd.f32 0.0, %v843
        %v845 = vpop.f32.mrf.mxu0
        %v846 = vadd.f32 0.0, %v845
        %847 = vmatmul.bf16.gmra.mxu0 %v620
        %v848 = vpop.f32.mrf.mxu0
        %v849 = vadd.f32 0.0, %v848
        %v850 = vpop.f32.mrf.mxu0
        %v851 = vadd.f32 0.0, %v850
        %852 = vmatmul.bf16.gmra.mxu0 %v623
        %v853 = vpop.f32.mrf.mxu0
        %v854 = vadd.f32 0.0, %v853
        %v855 = vpop.f32.mrf.mxu0
        %v856 = vadd.f32 0.0, %v855
        %857 = vmatmul.bf16.gmra.mxu0 %v626
        %v858 = vpop.f32.mrf.mxu0
        %v859 = vadd.f32 0.0, %v858
        %v860 = vpop.f32.mrf.mxu0
        %v861 = vadd.f32 0.0, %v860
        %862 = vmatmul.bf16.gmra.mxu0 %v629
        %v863 = vpop.f32.mrf.mxu0
        %v864 = vadd.f32 0.0, %v863
        %v865 = vpop.f32.mrf.mxu0
        %v866 = vadd.f32 0.0, %v865
        %867 = vdwg.mxu0
        %v892 = vunpack.c.l.b16 %v429
        %v893 = vunpack.c.h.b16 %v429
        %v894 = vunpack.c.l.b16 %v430
        %v895 = vunpack.c.l.b16 %v431
        %v896 = vunpack.c.h.b16 %v431
        %v897 = vunpack.c.l.b16 %v432
        %v898 = vunpack.c.l.b16 %v433
        %v899 = vunpack.c.h.b16 %v433
        %v900 = vunpack.c.l.b16 %v434
        %v901 = vunpack.c.l.b16 %v435
        %v902 = vunpack.c.h.b16 %v435
        %v903 = vunpack.c.l.b16 %v436
        %v904 = vunpack.c.l.b16 %v437
        %v905 = vunpack.c.h.b16 %v437
        %v906 = vunpack.c.l.b16 %v438
        %v907 = vunpack.c.l.b16 %v439
        %v908 = vunpack.c.h.b16 %v439
        %v909 = vunpack.c.l.b16 %v440
        %v910 = vunpack.c.l.b16 %v441
        %v911 = vunpack.c.h.b16 %v441
        %v912 = vunpack.c.l.b16 %v442
        %v913 = vunpack.c.l.b16 %v443
        %v914 = vunpack.c.h.b16 %v443
        %v915 = vunpack.c.l.b16 %v444
        %v916 = vunpack.c.l.b16 %v445
        %v917 = vunpack.c.h.b16 %v445
        %v918 = vunpack.c.l.b16 %v446
        %v919 = vunpack.c.l.b16 %v447
        %v920 = vunpack.c.h.b16 %v447
        %v921 = vunpack.c.l.b16 %v448
        %v922 = vunpack.c.l.b16 %v449
        %v923 = vunpack.c.h.b16 %v449
        %v924 = vunpack.c.l.b16 %v450
        %v925 = vunpack.c.l.b16 %v451
        %v926 = vunpack.c.h.b16 %v451
        %v927 = vunpack.c.l.b16 %v452
        %v928 = vpack.c.b16 %v895, %v892
        %v929 = vpack.c.b16 %v896, %v893
        %v930 = vpack.c.b16 %v897, %v894
        %v931 = vpack.c.b16 %v901, %v898
        %v932 = vpack.c.b16 %v902, %v899
        %v933 = vpack.c.b16 %v903, %v900
        %v934 = vpack.c.b16 %v907, %v904
        %v935 = vpack.c.b16 %v908, %v905
        %v936 = vpack.c.b16 %v909, %v906
        %v937 = vpack.c.b16 %v913, %v910
        %v938 = vpack.c.b16 %v914, %v911
        %v939 = vpack.c.b16 %v915, %v912
        %v940 = vpack.c.b16 %v919, %v916
        %v941 = vpack.c.b16 %v920, %v917
        %v942 = vpack.c.b16 %v921, %v918
        %v943 = vpack.c.b16 %v925, %v922
        %v944 = vpack.c.b16 %v926, %v923
        %v945 = vpack.c.b16 %v927, %v924
        %v965 = vsel %vm588, %v415, 0
        %v968 = vsel %vm588, %v416, 0
        %v971 = vsel %vm588, %v417, 0
        %v974 = vsel %vm588, %v418, 0
        %v977 = vsel %vm588, %v419, 0
        %v980 = vsel %vm588, %v420, 0
        %v983 = vsel %vm588, %v421, 0
        %v986 = vsel %vm588, %v422, 0
        %v989 = vsel %vm588, %v423, 0
        %v992 = vsel %vm588, %v424, 0
        %v995 = vsel %vm588, %v425, 0
        %v998 = vsel %vm588, %v426, 0
        %v1001 = vsel %vm588, %v427, 0
        %v1004 = vsel %vm588, %v428, 0
        %1006 = vmatpush.bf16.msra.mxu0 0
        %1007 = vmatpush.bf16.msra.mxu0 0
        %1008 = vmatpush.bf16.msra.mxu0 %v943
        %1009 = vmatpush.bf16.msra.mxu0 %v940
        %1010 = vmatpush.bf16.msra.mxu0 %v937
        %1011 = vmatpush.bf16.msra.mxu0 %v934
        %1012 = vmatpush.bf16.msra.mxu0 %v931
        %1013 = vmatpush.bf16.msra.mxu0 %v928
        %1014 = vmatmul.bf16.gmra.mxu0 %v965
        %v1015 = vpop.f32.mrf.mxu0
        %v1016 = vadd.f32 %v641, %v1015
        %v1017 = vpop.f32.mrf.mxu0
        %v1018 = vadd.f32 %v643, %v1017
        %1019 = vmatmul.bf16.gmra.mxu0 %v968
        %v1020 = vpop.f32.mrf.mxu0
        %v1021 = vadd.f32 %v646, %v1020
        %v1022 = vpop.f32.mrf.mxu0
        %v1023 = vadd.f32 %v648, %v1022
        %1024 = vmatmul.bf16.gmra.mxu0 %v971
        %v1025 = vpop.f32.mrf.mxu0
        %v1026 = vadd.f32 %v651, %v1025
        %v1027 = vpop.f32.mrf.mxu0
        %v1028 = vadd.f32 %v653, %v1027
        %1029 = vmatmul.bf16.gmra.mxu0 %v974
        %v1030 = vpop.f32.mrf.mxu0
        %v1031 = vadd.f32 %v656, %v1030
        %v1032 = vpop.f32.mrf.mxu0
        %v1033 = vadd.f32 %v658, %v1032
        %1034 = vmatmul.bf16.gmra.mxu0 %v977
        %v1035 = vpop.f32.mrf.mxu0
        %v1036 = vadd.f32 %v661, %v1035
        %v1037 = vpop.f32.mrf.mxu0
        %v1038 = vadd.f32 %v663, %v1037
        %1039 = vmatmul.bf16.gmra.mxu0 %v980
        %v1040 = vpop.f32.mrf.mxu0
        %v1041 = vadd.f32 %v666, %v1040
        %v1042 = vpop.f32.mrf.mxu0
        %v1043 = vadd.f32 %v668, %v1042
        %1044 = vmatmul.bf16.gmra.mxu0 %v983
        %v1045 = vpop.f32.mrf.mxu0
        %v1046 = vadd.f32 %v671, %v1045
        %v1047 = vpop.f32.mrf.mxu0
        %v1048 = vadd.f32 %v673, %v1047
        %1049 = vmatmul.bf16.gmra.mxu0 %v986
        %v1050 = vpop.f32.mrf.mxu0
        %v1051 = vadd.f32 %v676, %v1050
        %v1052 = vpop.f32.mrf.mxu0
        %v1053 = vadd.f32 %v678, %v1052
        %1054 = vmatmul.bf16.gmra.mxu0 %v989
        %v1055 = vpop.f32.mrf.mxu0
        %v1056 = vadd.f32 %v681, %v1055
        %v1057 = vpop.f32.mrf.mxu0
        %v1058 = vadd.f32 %v683, %v1057
        %1059 = vmatmul.bf16.gmra.mxu0 %v992
        %v1060 = vpop.f32.mrf.mxu0
        %v1061 = vadd.f32 %v686, %v1060
        %v1062 = vpop.f32.mrf.mxu0
        %v1063 = vadd.f32 %v688, %v1062
        %1064 = vmatmul.bf16.gmra.mxu0 %v995
        %v1065 = vpop.f32.mrf.mxu0
        %v1066 = vadd.f32 %v691, %v1065
        %v1067 = vpop.f32.mrf.mxu0
        %v1068 = vadd.f32 %v693, %v1067
        %1069 = vmatmul.bf16.gmra.mxu0 %v998
        %v1070 = vpop.f32.mrf.mxu0
        %v1071 = vadd.f32 %v696, %v1070
        %v1072 = vpop.f32.mrf.mxu0
        %v1073 = vadd.f32 %v698, %v1072
        %1074 = vmatmul.bf16.gmra.mxu0 %v1001
        %v1075 = vpop.f32.mrf.mxu0
        %v1076 = vadd.f32 %v701, %v1075
        %v1077 = vpop.f32.mrf.mxu0
        %v1078 = vadd.f32 %v703, %v1077
        %1079 = vmatmul.bf16.gmra.mxu0 %v1004
        %v1080 = vpop.f32.mrf.mxu0
        %v1081 = vadd.f32 %v706, %v1080
        %v1082 = vpop.f32.mrf.mxu0
        %v1083 = vadd.f32 %v708, %v1082
        %1084 = vdwg.mxu0
        %1085 = vmatpush.bf16.msra.mxu0 0
        %1086 = vmatpush.bf16.msra.mxu0 0
        %1087 = vmatpush.bf16.msra.mxu0 %v944
        %1088 = vmatpush.bf16.msra.mxu0 %v941
        %1089 = vmatpush.bf16.msra.mxu0 %v938
        %1090 = vmatpush.bf16.msra.mxu0 %v935
        %1091 = vmatpush.bf16.msra.mxu0 %v932
        %1092 = vmatpush.bf16.msra.mxu0 %v929
        %1093 = vmatmul.bf16.gmra.mxu0 %v965
        %v1094 = vpop.f32.mrf.mxu0
        %v1095 = vadd.f32 %v720, %v1094
        %v1096 = vpop.f32.mrf.mxu0
        %v1097 = vadd.f32 %v722, %v1096
        %1098 = vmatmul.bf16.gmra.mxu0 %v968
        %v1099 = vpop.f32.mrf.mxu0
        %v1100 = vadd.f32 %v725, %v1099
        %v1101 = vpop.f32.mrf.mxu0
        %v1102 = vadd.f32 %v727, %v1101
        %1103 = vmatmul.bf16.gmra.mxu0 %v971
        %v1104 = vpop.f32.mrf.mxu0
        %v1105 = vadd.f32 %v730, %v1104
        %v1106 = vpop.f32.mrf.mxu0
        %v1107 = vadd.f32 %v732, %v1106
        %1108 = vmatmul.bf16.gmra.mxu0 %v974
        %v1109 = vpop.f32.mrf.mxu0
        %v1110 = vadd.f32 %v735, %v1109
        %v1111 = vpop.f32.mrf.mxu0
        %v1112 = vadd.f32 %v737, %v1111
        %1113 = vmatmul.bf16.gmra.mxu0 %v977
        %v1114 = vpop.f32.mrf.mxu0
        %v1115 = vadd.f32 %v740, %v1114
        %v1116 = vpop.f32.mrf.mxu0
        %v1117 = vadd.f32 %v742, %v1116
        %1118 = vmatmul.bf16.gmra.mxu0 %v980
        %v1119 = vpop.f32.mrf.mxu0
        %v1120 = vadd.f32 %v745, %v1119
        %v1121 = vpop.f32.mrf.mxu0
        %v1122 = vadd.f32 %v747, %v1121
        %1123 = vmatmul.bf16.gmra.mxu0 %v983
        %v1124 = vpop.f32.mrf.mxu0
        %v1125 = vadd.f32 %v750, %v1124
        %v1126 = vpop.f32.mrf.mxu0
        %v1127 = vadd.f32 %v752, %v1126
        %1128 = vmatmul.bf16.gmra.mxu0 %v986
        %v1129 = vpop.f32.mrf.mxu0
        %v1130 = vadd.f32 %v755, %v1129
        %v1131 = vpop.f32.mrf.mxu0
        %v1132 = vadd.f32 %v757, %v1131
        %1133 = vmatmul.bf16.gmra.mxu0 %v989
        %v1134 = vpop.f32.mrf.mxu0
        %v1135 = vadd.f32 %v760, %v1134
        %v1136 = vpop.f32.mrf.mxu0
        %v1137 = vadd.f32 %v762, %v1136
        %1138 = vmatmul.bf16.gmra.mxu0 %v992
        %v1139 = vpop.f32.mrf.mxu0
        %v1140 = vadd.f32 %v765, %v1139
        %v1141 = vpop.f32.mrf.mxu0
        %v1142 = vadd.f32 %v767, %v1141
        %1143 = vmatmul.bf16.gmra.mxu0 %v995
        %v1144 = vpop.f32.mrf.mxu0
        %v1145 = vadd.f32 %v770, %v1144
        %v1146 = vpop.f32.mrf.mxu0
        %v1147 = vadd.f32 %v772, %v1146
        %1148 = vmatmul.bf16.gmra.mxu0 %v998
        %v1149 = vpop.f32.mrf.mxu0
        %v1150 = vadd.f32 %v775, %v1149
        %v1151 = vpop.f32.mrf.mxu0
        %v1152 = vadd.f32 %v777, %v1151
        %1153 = vmatmul.bf16.gmra.mxu0 %v1001
        %v1154 = vpop.f32.mrf.mxu0
        %v1155 = vadd.f32 %v780, %v1154
        %v1156 = vpop.f32.mrf.mxu0
        %v1157 = vadd.f32 %v782, %v1156
        %1158 = vmatmul.bf16.gmra.mxu0 %v1004
        %v1159 = vpop.f32.mrf.mxu0
        %v1160 = vadd.f32 %v785, %v1159
        %v1161 = vpop.f32.mrf.mxu0
        %v1162 = vadd.f32 %v787, %v1161
        %1163 = vdwg.mxu0
        %1164 = vmatpush.bf16.msra.mxu0 0
        %1165 = vmatpush.bf16.msra.mxu0 0
        %1166 = vmatpush.bf16.msra.mxu0 %v945
        %1167 = vmatpush.bf16.msra.mxu0 %v942
        %1168 = vmatpush.bf16.msra.mxu0 %v939
        %1169 = vmatpush.bf16.msra.mxu0 %v936
        %1170 = vmatpush.bf16.msra.mxu0 %v933
        %1171 = vmatpush.bf16.msra.mxu0 %v930
        %1172 = vmatmul.bf16.gmra.mxu0 %v965
        %v1173 = vpop.f32.mrf.mxu0
        %v1174 = vadd.f32 %v799, %v1173
        %v1175 = vpop.f32.mrf.mxu0
        %v1176 = vadd.f32 %v801, %v1175
        %1177 = vmatmul.bf16.gmra.mxu0 %v968
        %v1178 = vpop.f32.mrf.mxu0
        %v1179 = vadd.f32 %v804, %v1178
        %v1180 = vpop.f32.mrf.mxu0
        %v1181 = vadd.f32 %v806, %v1180
        %1182 = vmatmul.bf16.gmra.mxu0 %v971
        %v1183 = vpop.f32.mrf.mxu0
        %v1184 = vadd.f32 %v809, %v1183
        %v1185 = vpop.f32.mrf.mxu0
        %v1186 = vadd.f32 %v811, %v1185
        %1187 = vmatmul.bf16.gmra.mxu0 %v974
        %v1188 = vpop.f32.mrf.mxu0
        %v1189 = vadd.f32 %v814, %v1188
        %v1190 = vpop.f32.mrf.mxu0
        %v1191 = vadd.f32 %v816, %v1190
        %1192 = vmatmul.bf16.gmra.mxu0 %v977
        %v1193 = vpop.f32.mrf.mxu0
        %v1194 = vadd.f32 %v819, %v1193
        %v1195 = vpop.f32.mrf.mxu0
        %v1196 = vadd.f32 %v821, %v1195
        %1197 = vmatmul.bf16.gmra.mxu0 %v980
        %v1198 = vpop.f32.mrf.mxu0
        %v1199 = vadd.f32 %v824, %v1198
        %v1200 = vpop.f32.mrf.mxu0
        %v1201 = vadd.f32 %v826, %v1200
        %1202 = vmatmul.bf16.gmra.mxu0 %v983
        %v1203 = vpop.f32.mrf.mxu0
        %v1204 = vadd.f32 %v829, %v1203
        %v1205 = vpop.f32.mrf.mxu0
        %v1206 = vadd.f32 %v831, %v1205
        %1207 = vmatmul.bf16.gmra.mxu0 %v986
        %v1208 = vpop.f32.mrf.mxu0
        %v1209 = vadd.f32 %v834, %v1208
        %v1210 = vpop.f32.mrf.mxu0
        %v1211 = vadd.f32 %v836, %v1210
        %1212 = vmatmul.bf16.gmra.mxu0 %v989
        %v1213 = vpop.f32.mrf.mxu0
        %v1214 = vadd.f32 %v839, %v1213
        %v1215 = vpop.f32.mrf.mxu0
        %v1216 = vadd.f32 %v841, %v1215
        %1217 = vmatmul.bf16.gmra.mxu0 %v992
        %v1218 = vpop.f32.mrf.mxu0
        %v1219 = vadd.f32 %v844, %v1218
        %v1220 = vpop.f32.mrf.mxu0
        %v1221 = vadd.f32 %v846, %v1220
        %1222 = vmatmul.bf16.gmra.mxu0 %v995
        %v1223 = vpop.f32.mrf.mxu0
        %v1224 = vadd.f32 %v849, %v1223
        %v1225 = vpop.f32.mrf.mxu0
        %v1226 = vadd.f32 %v851, %v1225
        %1227 = vmatmul.bf16.gmra.mxu0 %v998
        %v1228 = vpop.f32.mrf.mxu0
        %v1229 = vadd.f32 %v854, %v1228
        %v1230 = vpop.f32.mrf.mxu0
        %v1231 = vadd.f32 %v856, %v1230
        %1232 = vmatmul.bf16.gmra.mxu0 %v1001
        %v1233 = vpop.f32.mrf.mxu0
        %v1234 = vadd.f32 %v859, %v1233
        %v1235 = vpop.f32.mrf.mxu0
        %v1236 = vadd.f32 %v861, %v1235
        %1237 = vmatmul.bf16.gmra.mxu0 %v1004
        %v1238 = vpop.f32.mrf.mxu0
        %v1239 = vadd.f32 %v864, %v1238
        %v1240 = vpop.f32.mrf.mxu0
        %v1241 = vadd.f32 %v866, %v1240
        %1242 = vdwg.mxu0
        %v1243 = vpack.c.bf16 %v412, %v411
        %s1244 = scalar_lea.vmem %s1, 288
        %v1245 = vld [vmem:[%s1244] sm:$0xff]
        %v1246 = vld [vmem:[%s1244 + $0x8] sm:$0xf]
        %v1247 = vld [vmem:[%s1244 + $0xc] sm:$0xff]
        %v1248 = vld [vmem:[%s1244 + $0x14] sm:$0xf]
        %v1249 = vld [vmem:[%s1244 + $0x18] sm:$0xff]
        %v1250 = vld [vmem:[%s1244 + $0x20] sm:$0xf]
        %v1251 = vld [vmem:[%s1244 + $0x24] sm:$0xff]
        %v1252 = vld [vmem:[%s1244 + $0x2c] sm:$0xf]
        %v1253 = vld [vmem:[%s1244 + $0x30] sm:$0xff]
        %v1254 = vld [vmem:[%s1244 + $0x38] sm:$0xf]
        %v1255 = vld [vmem:[%s1244 + $0x3c] sm:$0xff]
        %v1256 = vld [vmem:[%s1244 + $0x44] sm:$0xf]
        %v1257 = vld [vmem:[%s1244 + $0x48] sm:$0xff]
        %v1258 = vld [vmem:[%s1244 + $0x50] sm:$0xf]
        %v1259 = vld [vmem:[%s1244 + $0x54] sm:$0xff]
        %v1260 = vld [vmem:[%s1244 + $0x5c] sm:$0xf]
        %v1261 = vld [vmem:[%s1244 + $0x60] sm:$0xff]
        %v1262 = vld [vmem:[%s1244 + $0x68] sm:$0xf]
        %v1263 = vld [vmem:[%s1244 + $0x6c] sm:$0xff]
        %v1264 = vld [vmem:[%s1244 + $0x74] sm:$0xf]
        %v1265 = vld [vmem:[%s1244 + $0x78] sm:$0xff]
        %v1266 = vld [vmem:[%s1244 + $0x80] sm:$0xf]
        %v1267 = vld [vmem:[%s1244 + $0x84] sm:$0xff]
        %v1268 = vld [vmem:[%s1244 + $0x8c] sm:$0xf]
        %v1293 = vunpack.c.l.b16 %v1245
        %v1294 = vunpack.c.h.b16 %v1245
        %v1295 = vunpack.c.l.b16 %v1246
        %v1296 = vunpack.c.l.b16 %v1247
        %v1297 = vunpack.c.h.b16 %v1247
        %v1298 = vunpack.c.l.b16 %v1248
        %v1299 = vunpack.c.l.b16 %v1249
        %v1300 = vunpack.c.h.b16 %v1249
        %v1301 = vunpack.c.l.b16 %v1250
        %v1302 = vunpack.c.l.b16 %v1251
        %v1303 = vunpack.c.h.b16 %v1251
        %v1304 = vunpack.c.l.b16 %v1252
        %v1305 = vunpack.c.l.b16 %v1253
        %v1306 = vunpack.c.h.b16 %v1253
        %v1307 = vunpack.c.l.b16 %v1254
        %v1308 = vunpack.c.l.b16 %v1255
        %v1309 = vunpack.c.h.b16 %v1255
        %v1310 = vunpack.c.l.b16 %v1256
        %v1311 = vunpack.c.l.b16 %v1257
        %v1312 = vunpack.c.h.b16 %v1257
        %v1313 = vunpack.c.l.b16 %v1258
        %v1314 = vunpack.c.l.b16 %v1259
        %v1315 = vunpack.c.h.b16 %v1259
        %v1316 = vunpack.c.l.b16 %v1260
        %v1317 = vunpack.c.l.b16 %v1261
        %v1318 = vunpack.c.h.b16 %v1261
        %v1319 = vunpack.c.l.b16 %v1262
        %v1320 = vunpack.c.l.b16 %v1263
        %v1321 = vunpack.c.h.b16 %v1263
        %v1322 = vunpack.c.l.b16 %v1264
        %v1323 = vunpack.c.l.b16 %v1265
        %v1324 = vunpack.c.h.b16 %v1265
        %v1325 = vunpack.c.l.b16 %v1266
        %v1326 = vunpack.c.l.b16 %v1267
        %v1327 = vunpack.c.h.b16 %v1267
        %v1328 = vunpack.c.l.b16 %v1268
        %v1329 = vpack.c.b16 %v1296, %v1293
        %v1330 = vpack.c.b16 %v1297, %v1294
        %v1331 = vpack.c.b16 %v1298, %v1295
        %v1332 = vpack.c.b16 %v1302, %v1299
        %v1333 = vpack.c.b16 %v1303, %v1300
        %v1334 = vpack.c.b16 %v1304, %v1301
        %v1335 = vpack.c.b16 %v1308, %v1305
        %v1336 = vpack.c.b16 %v1309, %v1306
        %v1337 = vpack.c.b16 %v1310, %v1307
        %v1338 = vpack.c.b16 %v1314, %v1311
        %v1339 = vpack.c.b16 %v1315, %v1312
        %v1340 = vpack.c.b16 %v1316, %v1313
        %v1341 = vpack.c.b16 %v1320, %v1317
        %v1342 = vpack.c.b16 %v1321, %v1318
        %v1343 = vpack.c.b16 %v1322, %v1319
        %v1344 = vpack.c.b16 %v1326, %v1323
        %v1345 = vpack.c.b16 %v1327, %v1324
        %v1346 = vpack.c.b16 %v1328, %v1325
        %v1366 = vsel %vm588, %v1243, 0
        %1368 = vmatpush.bf16.msra.mxu0 0
        %1369 = vmatpush.bf16.msra.mxu0 0
        %1370 = vmatpush.bf16.msra.mxu0 %v1344
        %1371 = vmatpush.bf16.msra.mxu0 %v1341
        %1372 = vmatpush.bf16.msra.mxu0 %v1338
        %1373 = vmatpush.bf16.msra.mxu0 %v1335
        %1374 = vmatpush.bf16.msra.mxu0 %v1332
        %1375 = vmatpush.bf16.msra.mxu0 %v1329
        %1376 = vmatmul.bf16.gmra.mxu0 %v968
        %v1377 = vpop.f32.mrf.mxu0
        %v1378 = vadd.f32 0.0, %v1377
        %v1379 = vpop.f32.mrf.mxu0
        %v1380 = vadd.f32 0.0, %v1379
        %1381 = vmatmul.bf16.gmra.mxu0 %v971
        %v1382 = vpop.f32.mrf.mxu0
        %v1383 = vadd.f32 0.0, %v1382
        %v1384 = vpop.f32.mrf.mxu0
        %v1385 = vadd.f32 0.0, %v1384
        %1386 = vmatmul.bf16.gmra.mxu0 %v974
        %v1387 = vpop.f32.mrf.mxu0
        %v1388 = vadd.f32 0.0, %v1387
        %v1389 = vpop.f32.mrf.mxu0
        %v1390 = vadd.f32 0.0, %v1389
        %1391 = vmatmul.bf16.gmra.mxu0 %v977
        %v1392 = vpop.f32.mrf.mxu0
        %v1393 = vadd.f32 0.0, %v1392
        %v1394 = vpop.f32.mrf.mxu0
        %v1395 = vadd.f32 0.0, %v1394
        %1396 = vmatmul.bf16.gmra.mxu0 %v980
        %v1397 = vpop.f32.mrf.mxu0
        %v1398 = vadd.f32 0.0, %v1397
        %v1399 = vpop.f32.mrf.mxu0
        %v1400 = vadd.f32 0.0, %v1399
        %1401 = vmatmul.bf16.gmra.mxu0 %v983
        %v1402 = vpop.f32.mrf.mxu0
        %v1403 = vadd.f32 0.0, %v1402
        %v1404 = vpop.f32.mrf.mxu0
        %v1405 = vadd.f32 0.0, %v1404
        %1406 = vmatmul.bf16.gmra.mxu0 %v986
        %v1407 = vpop.f32.mrf.mxu0
        %v1408 = vadd.f32 0.0, %v1407
        %v1409 = vpop.f32.mrf.mxu0
        %v1410 = vadd.f32 0.0, %v1409
        %1411 = vmatmul.bf16.gmra.mxu0 %v989
        %v1412 = vpop.f32.mrf.mxu0
        %v1413 = vadd.f32 0.0, %v1412
        %v1414 = vpop.f32.mrf.mxu0
        %v1415 = vadd.f32 0.0, %v1414
        %1416 = vmatmul.bf16.gmra.mxu0 %v992
        %v1417 = vpop.f32.mrf.mxu0
        %v1418 = vadd.f32 0.0, %v1417
        %v1419 = vpop.f32.mrf.mxu0
        %v1420 = vadd.f32 0.0, %v1419
        %1421 = vmatmul.bf16.gmra.mxu0 %v995
        %v1422 = vpop.f32.mrf.mxu0
        %v1423 = vadd.f32 0.0, %v1422
        %v1424 = vpop.f32.mrf.mxu0
        %v1425 = vadd.f32 0.0, %v1424
        %1426 = vmatmul.bf16.gmra.mxu0 %v998
        %v1427 = vpop.f32.mrf.mxu0
        %v1428 = vadd.f32 0.0, %v1427
        %v1429 = vpop.f32.mrf.mxu0
        %v1430 = vadd.f32 0.0, %v1429
        %1431 = vmatmul.bf16.gmra.mxu0 %v1001
        %v1432 = vpop.f32.mrf.mxu0
        %v1433 = vadd.f32 0.0, %v1432
        %v1434 = vpop.f32.mrf.mxu0
        %v1435 = vadd.f32 0.0, %v1434
        %1436 = vmatmul.bf16.gmra.mxu0 %v1004
        %v1437 = vpop.f32.mrf.mxu0
        %v1438 = vadd.f32 0.0, %v1437
        %v1439 = vpop.f32.mrf.mxu0
        %v1440 = vadd.f32 0.0, %v1439
        %1441 = vmatmul.bf16.gmra.mxu0 %v1366
        %v1442 = vpop.f32.mrf.mxu0
        %v1443 = vadd.f32 0.0, %v1442
        %v1444 = vpop.f32.mrf.mxu0
        %v1445 = vadd.f32 0.0, %v1444
        %1446 = vdwg.mxu0
        %1447 = vmatpush.bf16.msra.mxu0 0
        %1448 = vmatpush.bf16.msra.mxu0 0
        %1449 = vmatpush.bf16.msra.mxu0 %v1345
        %1450 = vmatpush.bf16.msra.mxu0 %v1342
        %1451 = vmatpush.bf16.msra.mxu0 %v1339
        %1452 = vmatpush.bf16.msra.mxu0 %v1336
        %1453 = vmatpush.bf16.msra.mxu0 %v1333
        %1454 = vmatpush.bf16.msra.mxu0 %v1330
        %1455 = vmatmul.bf16.gmra.mxu0 %v968
        %v1456 = vpop.f32.mrf.mxu0
        %v1457 = vadd.f32 0.0, %v1456
        %v1458 = vpop.f32.mrf.mxu0
        %v1459 = vadd.f32 0.0, %v1458
        %1460 = vmatmul.bf16.gmra.mxu0 %v971
        %v1461 = vpop.f32.mrf.mxu0
        %v1462 = vadd.f32 0.0, %v1461
        %v1463 = vpop.f32.mrf.mxu0
        %v1464 = vadd.f32 0.0, %v1463
        %1465 = vmatmul.bf16.gmra.mxu0 %v974
        %v1466 = vpop.f32.mrf.mxu0
        %v1467 = vadd.f32 0.0, %v1466
        %v1468 = vpop.f32.mrf.mxu0
        %v1469 = vadd.f32 0.0, %v1468
        %1470 = vmatmul.bf16.gmra.mxu0 %v977
        %v1471 = vpop.f32.mrf.mxu0
        %v1472 = vadd.f32 0.0, %v1471
        %v1473 = vpop.f32.mrf.mxu0
        %v1474 = vadd.f32 0.0, %v1473
        %1475 = vmatmul.bf16.gmra.mxu0 %v980
        %v1476 = vpop.f32.mrf.mxu0
        %v1477 = vadd.f32 0.0, %v1476
        %v1478 = vpop.f32.mrf.mxu0
        %v1479 = vadd.f32 0.0, %v1478
        %1480 = vmatmul.bf16.gmra.mxu0 %v983
        %v1481 = vpop.f32.mrf.mxu0
        %v1482 = vadd.f32 0.0, %v1481
        %v1483 = vpop.f32.mrf.mxu0
        %v1484 = vadd.f32 0.0, %v1483
        %1485 = vmatmul.bf16.gmra.mxu0 %v986
        %v1486 = vpop.f32.mrf.mxu0
        %v1487 = vadd.f32 0.0, %v1486
        %v1488 = vpop.f32.mrf.mxu0
        %v1489 = vadd.f32 0.0, %v1488
        %1490 = vmatmul.bf16.gmra.mxu0 %v989
        %v1491 = vpop.f32.mrf.mxu0
        %v1492 = vadd.f32 0.0, %v1491
        %v1493 = vpop.f32.mrf.mxu0
        %v1494 = vadd.f32 0.0, %v1493
        %1495 = vmatmul.bf16.gmra.mxu0 %v992
        %v1496 = vpop.f32.mrf.mxu0
        %v1497 = vadd.f32 0.0, %v1496
        %v1498 = vpop.f32.mrf.mxu0
        %v1499 = vadd.f32 0.0, %v1498
        %1500 = vmatmul.bf16.gmra.mxu0 %v995
        %v1501 = vpop.f32.mrf.mxu0
        %v1502 = vadd.f32 0.0, %v1501
        %v1503 = vpop.f32.mrf.mxu0
        %v1504 = vadd.f32 0.0, %v1503
        %1505 = vmatmul.bf16.gmra.mxu0 %v998
        %v1506 = vpop.f32.mrf.mxu0
        %v1507 = vadd.f32 0.0, %v1506
        %v1508 = vpop.f32.mrf.mxu0
        %v1509 = vadd.f32 0.0, %v1508
        %1510 = vmatmul.bf16.gmra.mxu0 %v1001
        %v1511 = vpop.f32.mrf.mxu0
        %v1512 = vadd.f32 0.0, %v1511
        %v1513 = vpop.f32.mrf.mxu0
        %v1514 = vadd.f32 0.0, %v1513
        %1515 = vmatmul.bf16.gmra.mxu0 %v1004
        %v1516 = vpop.f32.mrf.mxu0
        %v1517 = vadd.f32 0.0, %v1516
        %v1518 = vpop.f32.mrf.mxu0
        %v1519 = vadd.f32 0.0, %v1518
        %1520 = vmatmul.bf16.gmra.mxu0 %v1366
        %v1521 = vpop.f32.mrf.mxu0
        %v1522 = vadd.f32 0.0, %v1521
        %v1523 = vpop.f32.mrf.mxu0
        %v1524 = vadd.f32 0.0, %v1523
        %1525 = vdwg.mxu0
        %1526 = vmatpush.bf16.msra.mxu0 0
        %1527 = vmatpush.bf16.msra.mxu0 0
        %1528 = vmatpush.bf16.msra.mxu0 %v1346
        %1529 = vmatpush.bf16.msra.mxu0 %v1343
        %1530 = vmatpush.bf16.msra.mxu0 %v1340
        %1531 = vmatpush.bf16.msra.mxu0 %v1337
        %1532 = vmatpush.bf16.msra.mxu0 %v1334
        %1533 = vmatpush.bf16.msra.mxu0 %v1331
        %1534 = vmatmul.bf16.gmra.mxu0 %v968
        %v1535 = vpop.f32.mrf.mxu0
        %v1536 = vadd.f32 0.0, %v1535
        %v1537 = vpop.f32.mrf.mxu0
        %v1538 = vadd.f32 0.0, %v1537
        %1539 = vmatmul.bf16.gmra.mxu0 %v971
        %v1540 = vpop.f32.mrf.mxu0
        %v1541 = vadd.f32 0.0, %v1540
        %v1542 = vpop.f32.mrf.mxu0
        %v1543 = vadd.f32 0.0, %v1542
        %1544 = vmatmul.bf16.gmra.mxu0 %v974
        %v1545 = vpop.f32.mrf.mxu0
        %v1546 = vadd.f32 0.0, %v1545
        %v1547 = vpop.f32.mrf.mxu0
        %v1548 = vadd.f32 0.0, %v1547
        %1549 = vmatmul.bf16.gmra.mxu0 %v977
        %v1550 = vpop.f32.mrf.mxu0
        %v1551 = vadd.f32 0.0, %v1550
        %v1552 = vpop.f32.mrf.mxu0
        %v1553 = vadd.f32 0.0, %v1552
        %1554 = vmatmul.bf16.gmra.mxu0 %v980
        %v1555 = vpop.f32.mrf.mxu0
        %v1556 = vadd.f32 0.0, %v1555
        %v1557 = vpop.f32.mrf.mxu0
        %v1558 = vadd.f32 0.0, %v1557
        %1559 = vmatmul.bf16.gmra.mxu0 %v983
        %v1560 = vpop.f32.mrf.mxu0
        %v1561 = vadd.f32 0.0, %v1560
        %v1562 = vpop.f32.mrf.mxu0
        %v1563 = vadd.f32 0.0, %v1562
        %1564 = vmatmul.bf16.gmra.mxu0 %v986
        %v1565 = vpop.f32.mrf.mxu0
        %v1566 = vadd.f32 0.0, %v1565
        %v1567 = vpop.f32.mrf.mxu0
        %v1568 = vadd.f32 0.0, %v1567
        %1569 = vmatmul.bf16.gmra.mxu0 %v989
        %v1570 = vpop.f32.mrf.mxu0
        %v1571 = vadd.f32 0.0, %v1570
        %v1572 = vpop.f32.mrf.mxu0
        %v1573 = vadd.f32 0.0, %v1572
        %1574 = vmatmul.bf16.gmra.mxu0 %v992
        %v1575 = vpop.f32.mrf.mxu0
        %v1576 = vadd.f32 0.0, %v1575
        %v1577 = vpop.f32.mrf.mxu0
        %v1578 = vadd.f32 0.0, %v1577
        %1579 = vmatmul.bf16.gmra.mxu0 %v995
        %v1580 = vpop.f32.mrf.mxu0
        %v1581 = vadd.f32 0.0, %v1580
        %v1582 = vpop.f32.mrf.mxu0
        %v1583 = vadd.f32 0.0, %v1582
        %1584 = vmatmul.bf16.gmra.mxu0 %v998
        %v1585 = vpop.f32.mrf.mxu0
        %v1586 = vadd.f32 0.0, %v1585
        %v1587 = vpop.f32.mrf.mxu0
        %v1588 = vadd.f32 0.0, %v1587
        %1589 = vmatmul.bf16.gmra.mxu0 %v1001
        %v1590 = vpop.f32.mrf.mxu0
        %v1591 = vadd.f32 0.0, %v1590
        %v1592 = vpop.f32.mrf.mxu0
        %v1593 = vadd.f32 0.0, %v1592
        %1594 = vmatmul.bf16.gmra.mxu0 %v1004
        %v1595 = vpop.f32.mrf.mxu0
        %v1596 = vadd.f32 0.0, %v1595
        %v1597 = vpop.f32.mrf.mxu0
        %v1598 = vadd.f32 0.0, %v1597
        %1599 = vmatmul.bf16.gmra.mxu0 %v1366
        %v1600 = vpop.f32.mrf.mxu0
        %v1601 = vadd.f32 0.0, %v1600
        %v1602 = vpop.f32.mrf.mxu0
        %v1603 = vadd.f32 0.0, %v1602
        %1604 = vdwg.mxu0
        %v1605 = vadd.f32 %v1016, %v1378
        %v1606 = vadd.f32 %v1095, %v1457
        %v1607 = vadd.f32 %v1174, %v1536
        %v1608 = vadd.f32 %v1018, %v1380
        %v1609 = vadd.f32 %v1097, %v1459
        %v1610 = vadd.f32 %v1176, %v1538
        %v1611 = vadd.f32 %v1021, %v1383
        %v1612 = vadd.f32 %v1100, %v1462
        %v1613 = vadd.f32 %v1179, %v1541
        %v1614 = vadd.f32 %v1023, %v1385
        %v1615 = vadd.f32 %v1102, %v1464
        %v1616 = vadd.f32 %v1181, %v1543
        %v1617 = vadd.f32 %v1026, %v1388
        %v1618 = vadd.f32 %v1105, %v1467
        %v1619 = vadd.f32 %v1184, %v1546
        %v1620 = vadd.f32 %v1028, %v1390
        %v1621 = vadd.f32 %v1107, %v1469
        %v1622 = vadd.f32 %v1186, %v1548
        %v1623 = vadd.f32 %v1031, %v1393
        %v1624 = vadd.f32 %v1110, %v1472
        %v1625 = vadd.f32 %v1189, %v1551
        %v1626 = vadd.f32 %v1033, %v1395
        %v1627 = vadd.f32 %v1112, %v1474
        %v1628 = vadd.f32 %v1191, %v1553
        %v1629 = vadd.f32 %v1036, %v1398
        %v1630 = vadd.f32 %v1115, %v1477
        %v1631 = vadd.f32 %v1194, %v1556
        %v1632 = vadd.f32 %v1038, %v1400
        %v1633 = vadd.f32 %v1117, %v1479
        %v1634 = vadd.f32 %v1196, %v1558
        %v1635 = vadd.f32 %v1041, %v1403
        %v1636 = vadd.f32 %v1120, %v1482
        %v1637 = vadd.f32 %v1199, %v1561
        %v1638 = vadd.f32 %v1043, %v1405
        %v1639 = vadd.f32 %v1122, %v1484
        %v1640 = vadd.f32 %v1201, %v1563
        %v1641 = vadd.f32 %v1046, %v1408
        %v1642 = vadd.f32 %v1125, %v1487
        %v1643 = vadd.f32 %v1204, %v1566
        %v1644 = vadd.f32 %v1048, %v1410
        %v1645 = vadd.f32 %v1127, %v1489
        %v1646 = vadd.f32 %v1206, %v1568
        %v1647 = vadd.f32 %v1051, %v1413
        %v1648 = vadd.f32 %v1130, %v1492
        %v1649 = vadd.f32 %v1209, %v1571
        %v1650 = vadd.f32 %v1053, %v1415
        %v1651 = vadd.f32 %v1132, %v1494
        %v1652 = vadd.f32 %v1211, %v1573
        %v1653 = vadd.f32 %v1056, %v1418
        %v1654 = vadd.f32 %v1135, %v1497
        %v1655 = vadd.f32 %v1214, %v1576
        %v1656 = vadd.f32 %v1058, %v1420
        %v1657 = vadd.f32 %v1137, %v1499
        %v1658 = vadd.f32 %v1216, %v1578
        %v1659 = vadd.f32 %v1061, %v1423
        %v1660 = vadd.f32 %v1140, %v1502
        %v1661 = vadd.f32 %v1219, %v1581
        %v1662 = vadd.f32 %v1063, %v1425
        %v1663 = vadd.f32 %v1142, %v1504
        %v1664 = vadd.f32 %v1221, %v1583
        %v1665 = vadd.f32 %v1066, %v1428
        %v1666 = vadd.f32 %v1145, %v1507
        %v1667 = vadd.f32 %v1224, %v1586
        %v1668 = vadd.f32 %v1068, %v1430
        %v1669 = vadd.f32 %v1147, %v1509
        %v1670 = vadd.f32 %v1226, %v1588
        %v1671 = vadd.f32 %v1071, %v1433
        %v1672 = vadd.f32 %v1150, %v1512
        %v1673 = vadd.f32 %v1229, %v1591
        %v1674 = vadd.f32 %v1073, %v1435
        %v1675 = vadd.f32 %v1152, %v1514
        %v1676 = vadd.f32 %v1231, %v1593
        %v1677 = vadd.f32 %v1076, %v1438
        %v1678 = vadd.f32 %v1155, %v1517
        %v1679 = vadd.f32 %v1234, %v1596
        %v1680 = vadd.f32 %v1078, %v1440
        %v1681 = vadd.f32 %v1157, %v1519
        %v1682 = vadd.f32 %v1236, %v1598
        %v1683 = vadd.f32 %v1081, %v1443
        %v1684 = vadd.f32 %v1160, %v1522
        %v1685 = vadd.f32 %v1239, %v1601
        %v1686 = vadd.f32 %v1083, %v1445
        %v1687 = vadd.f32 %v1162, %v1524
        %v1688 = vadd.f32 %v1241, %v1603
        %v1689 = vpack.c.bf16 %v413, %v412
        %s1690 = scalar_lea.vmem %s1, 432
        %v1691 = vld [vmem:[%s1690] sm:$0xff]
        %v1692 = vld [vmem:[%s1690 + $0x8] sm:$0xf]
        %v1693 = vld [vmem:[%s1690 + $0xc] sm:$0xff]
        %v1694 = vld [vmem:[%s1690 + $0x14] sm:$0xf]
        %v1695 = vld [vmem:[%s1690 + $0x18] sm:$0xff]
        %v1696 = vld [vmem:[%s1690 + $0x20] sm:$0xf]
        %v1697 = vld [vmem:[%s1690 + $0x24] sm:$0xff]
        %v1698 = vld [vmem:[%s1690 + $0x2c] sm:$0xf]
        %v1699 = vld [vmem:[%s1690 + $0x30] sm:$0xff]
        %v1700 = vld [vmem:[%s1690 + $0x38] sm:$0xf]
        %v1701 = vld [vmem:[%s1690 + $0x3c] sm:$0xff]
        %v1702 = vld [vmem:[%s1690 + $0x44] sm:$0xf]
        %v1703 = vld [vmem:[%s1690 + $0x48] sm:$0xff]
        %v1704 = vld [vmem:[%s1690 + $0x50] sm:$0xf]
        %v1705 = vld [vmem:[%s1690 + $0x54] sm:$0xff]
        %v1706 = vld [vmem:[%s1690 + $0x5c] sm:$0xf]
        %v1707 = vld [vmem:[%s1690 + $0x60] sm:$0xff]
        %v1708 = vld [vmem:[%s1690 + $0x68] sm:$0xf]
        %v1709 = vld [vmem:[%s1690 + $0x6c] sm:$0xff]
        %v1710 = vld [vmem:[%s1690 + $0x74] sm:$0xf]
        %v1711 = vld [vmem:[%s1690 + $0x78] sm:$0xff]
        %v1712 = vld [vmem:[%s1690 + $0x80] sm:$0xf]
        %v1713 = vld [vmem:[%s1690 + $0x84] sm:$0xff]
        %v1714 = vld [vmem:[%s1690 + $0x8c] sm:$0xf]
        %v1739 = vunpack.c.l.b16 %v1691
        %v1740 = vunpack.c.h.b16 %v1691
        %v1741 = vunpack.c.l.b16 %v1692
        %v1742 = vunpack.c.l.b16 %v1693
        %v1743 = vunpack.c.h.b16 %v1693
        %v1744 = vunpack.c.l.b16 %v1694
        %v1745 = vunpack.c.l.b16 %v1695
        %v1746 = vunpack.c.h.b16 %v1695
        %v1747 = vunpack.c.l.b16 %v1696
        %v1748 = vunpack.c.l.b16 %v1697
        %v1749 = vunpack.c.h.b16 %v1697
        %v1750 = vunpack.c.l.b16 %v1698
        %v1751 = vunpack.c.l.b16 %v1699
        %v1752 = vunpack.c.h.b16 %v1699
        %v1753 = vunpack.c.l.b16 %v1700
        %v1754 = vunpack.c.l.b16 %v1701
        %v1755 = vunpack.c.h.b16 %v1701
        %v1756 = vunpack.c.l.b16 %v1702
        %v1757 = vunpack.c.l.b16 %v1703
        %v1758 = vunpack.c.h.b16 %v1703
        %v1759 = vunpack.c.l.b16 %v1704
        %v1760 = vunpack.c.l.b16 %v1705
        %v1761 = vunpack.c.h.b16 %v1705
        %v1762 = vunpack.c.l.b16 %v1706
        %v1763 = vunpack.c.l.b16 %v1707
        %v1764 = vunpack.c.h.b16 %v1707
        %v1765 = vunpack.c.l.b16 %v1708
        %v1766 = vunpack.c.l.b16 %v1709
        %v1767 = vunpack.c.h.b16 %v1709
        %v1768 = vunpack.c.l.b16 %v1710
        %v1769 = vunpack.c.l.b16 %v1711
        %v1770 = vunpack.c.h.b16 %v1711
        %v1771 = vunpack.c.l.b16 %v1712
        %v1772 = vunpack.c.l.b16 %v1713
        %v1773 = vunpack.c.h.b16 %v1713
        %v1774 = vunpack.c.l.b16 %v1714
        %v1775 = vpack.c.b16 %v1742, %v1739
        %v1776 = vpack.c.b16 %v1743, %v1740
        %v1777 = vpack.c.b16 %v1744, %v1741
        %v1778 = vpack.c.b16 %v1748, %v1745
        %v1779 = vpack.c.b16 %v1749, %v1746
        %v1780 = vpack.c.b16 %v1750, %v1747
        %v1781 = vpack.c.b16 %v1754, %v1751
        %v1782 = vpack.c.b16 %v1755, %v1752
        %v1783 = vpack.c.b16 %v1756, %v1753
        %v1784 = vpack.c.b16 %v1760, %v1757
        %v1785 = vpack.c.b16 %v1761, %v1758
        %v1786 = vpack.c.b16 %v1762, %v1759
        %v1787 = vpack.c.b16 %v1766, %v1763
        %v1788 = vpack.c.b16 %v1767, %v1764
        %v1789 = vpack.c.b16 %v1768, %v1765
        %v1790 = vpack.c.b16 %v1772, %v1769
        %v1791 = vpack.c.b16 %v1773, %v1770
        %v1792 = vpack.c.b16 %v1774, %v1771
        %v1812 = vsel %vm588, %v1689, 0
        %1814 = vmatpush.bf16.msra.mxu0 0
        %1815 = vmatpush.bf16.msra.mxu0 0
        %1816 = vmatpush.bf16.msra.mxu0 %v1790
        %1817 = vmatpush.bf16.msra.mxu0 %v1787
        %1818 = vmatpush.bf16.msra.mxu0 %v1784
        %1819 = vmatpush.bf16.msra.mxu0 %v1781
        %1820 = vmatpush.bf16.msra.mxu0 %v1778
        %1821 = vmatpush.bf16.msra.mxu0 %v1775
        %1822 = vmatmul.bf16.gmra.mxu0 %v593
        %v1823 = vpop.f32.mrf.mxu0
        %v1824 = vadd.f32 0.0, %v1823
        %v1825 = vpop.f32.mrf.mxu0
        %v1826 = vadd.f32 0.0, %v1825
        %1827 = vmatmul.bf16.gmra.mxu0 %v596
        %v1828 = vpop.f32.mrf.mxu0
        %v1829 = vadd.f32 0.0, %v1828
        %v1830 = vpop.f32.mrf.mxu0
        %v1831 = vadd.f32 0.0, %v1830
        %1832 = vmatmul.bf16.gmra.mxu0 %v599
        %v1833 = vpop.f32.mrf.mxu0
        %v1834 = vadd.f32 0.0, %v1833
        %v1835 = vpop.f32.mrf.mxu0
        %v1836 = vadd.f32 0.0, %v1835
        %1837 = vmatmul.bf16.gmra.mxu0 %v602
        %v1838 = vpop.f32.mrf.mxu0
        %v1839 = vadd.f32 0.0, %v1838
        %v1840 = vpop.f32.mrf.mxu0
        %v1841 = vadd.f32 0.0, %v1840
        %1842 = vmatmul.bf16.gmra.mxu0 %v605
        %v1843 = vpop.f32.mrf.mxu0
        %v1844 = vadd.f32 0.0, %v1843
        %v1845 = vpop.f32.mrf.mxu0
        %v1846 = vadd.f32 0.0, %v1845
        %1847 = vmatmul.bf16.gmra.mxu0 %v608
        %v1848 = vpop.f32.mrf.mxu0
        %v1849 = vadd.f32 0.0, %v1848
        %v1850 = vpop.f32.mrf.mxu0
        %v1851 = vadd.f32 0.0, %v1850
        %1852 = vmatmul.bf16.gmra.mxu0 %v611
        %v1853 = vpop.f32.mrf.mxu0
        %v1854 = vadd.f32 0.0, %v1853
        %v1855 = vpop.f32.mrf.mxu0
        %v1856 = vadd.f32 0.0, %v1855
        %1857 = vmatmul.bf16.gmra.mxu0 %v614
        %v1858 = vpop.f32.mrf.mxu0
        %v1859 = vadd.f32 0.0, %v1858
        %v1860 = vpop.f32.mrf.mxu0
        %v1861 = vadd.f32 0.0, %v1860
        %1862 = vmatmul.bf16.gmra.mxu0 %v617
        %v1863 = vpop.f32.mrf.mxu0
        %v1864 = vadd.f32 0.0, %v1863
        %v1865 = vpop.f32.mrf.mxu0
        %v1866 = vadd.f32 0.0, %v1865
        %1867 = vmatmul.bf16.gmra.mxu0 %v620
        %v1868 = vpop.f32.mrf.mxu0
        %v1869 = vadd.f32 0.0, %v1868
        %v1870 = vpop.f32.mrf.mxu0
        %v1871 = vadd.f32 0.0, %v1870
        %1872 = vmatmul.bf16.gmra.mxu0 %v623
        %v1873 = vpop.f32.mrf.mxu0
        %v1874 = vadd.f32 0.0, %v1873
        %v1875 = vpop.f32.mrf.mxu0
        %v1876 = vadd.f32 0.0, %v1875
        %1877 = vmatmul.bf16.gmra.mxu0 %v626
        %v1878 = vpop.f32.mrf.mxu0
        %v1879 = vadd.f32 0.0, %v1878
        %v1880 = vpop.f32.mrf.mxu0
        %v1881 = vadd.f32 0.0, %v1880
        %1882 = vmatmul.bf16.gmra.mxu0 %v629
        %v1883 = vpop.f32.mrf.mxu0
        %v1884 = vadd.f32 0.0, %v1883
        %v1885 = vpop.f32.mrf.mxu0
        %v1886 = vadd.f32 0.0, %v1885
        %1887 = vmatmul.bf16.gmra.mxu0 %v1812
        %v1888 = vpop.f32.mrf.mxu0
        %v1889 = vadd.f32 0.0, %v1888
        %v1890 = vpop.f32.mrf.mxu0
        %v1891 = vadd.f32 0.0, %v1890
        %1892 = vdwg.mxu0
        %1893 = vmatpush.bf16.msra.mxu0 0
        %1894 = vmatpush.bf16.msra.mxu0 0
        %1895 = vmatpush.bf16.msra.mxu0 %v1791
        %1896 = vmatpush.bf16.msra.mxu0 %v1788
        %1897 = vmatpush.bf16.msra.mxu0 %v1785
        %1898 = vmatpush.bf16.msra.mxu0 %v1782
        %1899 = vmatpush.bf16.msra.mxu0 %v1779
        %1900 = vmatpush.bf16.msra.mxu0 %v1776
        %1901 = vmatmul.bf16.gmra.mxu0 %v593
        %v1902 = vpop.f32.mrf.mxu0
        %v1903 = vadd.f32 0.0, %v1902
        %v1904 = vpop.f32.mrf.mxu0
        %v1905 = vadd.f32 0.0, %v1904
        %1906 = vmatmul.bf16.gmra.mxu0 %v596
        %v1907 = vpop.f32.mrf.mxu0
        %v1908 = vadd.f32 0.0, %v1907
        %v1909 = vpop.f32.mrf.mxu0
        %v1910 = vadd.f32 0.0, %v1909
        %1911 = vmatmul.bf16.gmra.mxu0 %v599
        %v1912 = vpop.f32.mrf.mxu0
        %v1913 = vadd.f32 0.0, %v1912
        %v1914 = vpop.f32.mrf.mxu0
        %v1915 = vadd.f32 0.0, %v1914
        %1916 = vmatmul.bf16.gmra.mxu0 %v602
        %v1917 = vpop.f32.mrf.mxu0
        %v1918 = vadd.f32 0.0, %v1917
        %v1919 = vpop.f32.mrf.mxu0
        %v1920 = vadd.f32 0.0, %v1919
        %1921 = vmatmul.bf16.gmra.mxu0 %v605
        %v1922 = vpop.f32.mrf.mxu0
        %v1923 = vadd.f32 0.0, %v1922
        %v1924 = vpop.f32.mrf.mxu0
        %v1925 = vadd.f32 0.0, %v1924
        %1926 = vmatmul.bf16.gmra.mxu0 %v608
        %v1927 = vpop.f32.mrf.mxu0
        %v1928 = vadd.f32 0.0, %v1927
        %v1929 = vpop.f32.mrf.mxu0
        %v1930 = vadd.f32 0.0, %v1929
        %1931 = vmatmul.bf16.gmra.mxu0 %v611
        %v1932 = vpop.f32.mrf.mxu0
        %v1933 = vadd.f32 0.0, %v1932
        %v1934 = vpop.f32.mrf.mxu0
        %v1935 = vadd.f32 0.0, %v1934
        %1936 = vmatmul.bf16.gmra.mxu0 %v614
        %v1937 = vpop.f32.mrf.mxu0
        %v1938 = vadd.f32 0.0, %v1937
        %v1939 = vpop.f32.mrf.mxu0
        %v1940 = vadd.f32 0.0, %v1939
        %1941 = vmatmul.bf16.gmra.mxu0 %v617
        %v1942 = vpop.f32.mrf.mxu0
        %v1943 = vadd.f32 0.0, %v1942
        %v1944 = vpop.f32.mrf.mxu0
        %v1945 = vadd.f32 0.0, %v1944
        %1946 = vmatmul.bf16.gmra.mxu0 %v620
        %v1947 = vpop.f32.mrf.mxu0
        %v1948 = vadd.f32 0.0, %v1947
        %v1949 = vpop.f32.mrf.mxu0
        %v1950 = vadd.f32 0.0, %v1949
        %1951 = vmatmul.bf16.gmra.mxu0 %v623
        %v1952 = vpop.f32.mrf.mxu0
        %v1953 = vadd.f32 0.0, %v1952
        %v1954 = vpop.f32.mrf.mxu0
        %v1955 = vadd.f32 0.0, %v1954
        %1956 = vmatmul.bf16.gmra.mxu0 %v626
        %v1957 = vpop.f32.mrf.mxu0
        %v1958 = vadd.f32 0.0, %v1957
        %v1959 = vpop.f32.mrf.mxu0
        %v1960 = vadd.f32 0.0, %v1959
        %1961 = vmatmul.bf16.gmra.mxu0 %v629
        %v1962 = vpop.f32.mrf.mxu0
        %v1963 = vadd.f32 0.0, %v1962
        %v1964 = vpop.f32.mrf.mxu0
        %v1965 = vadd.f32 0.0, %v1964
        %1966 = vmatmul.bf16.gmra.mxu0 %v1812
        %v1967 = vpop.f32.mrf.mxu0
        %v1968 = vadd.f32 0.0, %v1967
        %v1969 = vpop.f32.mrf.mxu0
        %v1970 = vadd.f32 0.0, %v1969
        %1971 = vdwg.mxu0
        %1972 = vmatpush.bf16.msra.mxu0 0
        %1973 = vmatpush.bf16.msra.mxu0 0
        %1974 = vmatpush.bf16.msra.mxu0 %v1792
        %1975 = vmatpush.bf16.msra.mxu0 %v1789
        %1976 = vmatpush.bf16.msra.mxu0 %v1786
        %1977 = vmatpush.bf16.msra.mxu0 %v1783
        %1978 = vmatpush.bf16.msra.mxu0 %v1780
        %1979 = vmatpush.bf16.msra.mxu0 %v1777
        %1980 = vmatmul.bf16.gmra.mxu0 %v593
        %v1981 = vpop.f32.mrf.mxu0
        %v1982 = vadd.f32 0.0, %v1981
        %v1983 = vpop.f32.mrf.mxu0
        %v1984 = vadd.f32 0.0, %v1983
        %1985 = vmatmul.bf16.gmra.mxu0 %v596
        %v1986 = vpop.f32.mrf.mxu0
        %v1987 = vadd.f32 0.0, %v1986
        %v1988 = vpop.f32.mrf.mxu0
        %v1989 = vadd.f32 0.0, %v1988
        %1990 = vmatmul.bf16.gmra.mxu0 %v599
        %v1991 = vpop.f32.mrf.mxu0
        %v1992 = vadd.f32 0.0, %v1991
        %v1993 = vpop.f32.mrf.mxu0
        %v1994 = vadd.f32 0.0, %v1993
        %1995 = vmatmul.bf16.gmra.mxu0 %v602
        %v1996 = vpop.f32.mrf.mxu0
        %v1997 = vadd.f32 0.0, %v1996
        %v1998 = vpop.f32.mrf.mxu0
        %v1999 = vadd.f32 0.0, %v1998
        %2000 = vmatmul.bf16.gmra.mxu0 %v605
        %v2001 = vpop.f32.mrf.mxu0
        %v2002 = vadd.f32 0.0, %v2001
        %v2003 = vpop.f32.mrf.mxu0
        %v2004 = vadd.f32 0.0, %v2003
        %2005 = vmatmul.bf16.gmra.mxu0 %v608
        %v2006 = vpop.f32.mrf.mxu0
        %v2007 = vadd.f32 0.0, %v2006
        %v2008 = vpop.f32.mrf.mxu0
        %v2009 = vadd.f32 0.0, %v2008
        %2010 = vmatmul.bf16.gmra.mxu0 %v611
        %v2011 = vpop.f32.mrf.mxu0
        %v2012 = vadd.f32 0.0, %v2011
        %v2013 = vpop.f32.mrf.mxu0
        %v2014 = vadd.f32 0.0, %v2013
        %2015 = vmatmul.bf16.gmra.mxu0 %v614
        %v2016 = vpop.f32.mrf.mxu0
        %v2017 = vadd.f32 0.0, %v2016
        %v2018 = vpop.f32.mrf.mxu0
        %v2019 = vadd.f32 0.0, %v2018
        %2020 = vmatmul.bf16.gmra.mxu0 %v617
        %v2021 = vpop.f32.mrf.mxu0
        %v2022 = vadd.f32 0.0, %v2021
        %v2023 = vpop.f32.mrf.mxu0
        %v2024 = vadd.f32 0.0, %v2023
        %2025 = vmatmul.bf16.gmra.mxu0 %v620
        %v2026 = vpop.f32.mrf.mxu0
        %v2027 = vadd.f32 0.0, %v2026
        %v2028 = vpop.f32.mrf.mxu0
        %v2029 = vadd.f32 0.0, %v2028
        %2030 = vmatmul.bf16.gmra.mxu0 %v623
        %v2031 = vpop.f32.mrf.mxu0
        %v2032 = vadd.f32 0.0, %v2031
        %v2033 = vpop.f32.mrf.mxu0
        %v2034 = vadd.f32 0.0, %v2033
        %2035 = vmatmul.bf16.gmra.mxu0 %v626
        %v2036 = vpop.f32.mrf.mxu0
        %v2037 = vadd.f32 0.0, %v2036
        %v2038 = vpop.f32.mrf.mxu0
        %v2039 = vadd.f32 0.0, %v2038
        %2040 = vmatmul.bf16.gmra.mxu0 %v629
        %v2041 = vpop.f32.mrf.mxu0
        %v2042 = vadd.f32 0.0, %v2041
        %v2043 = vpop.f32.mrf.mxu0
        %v2044 = vadd.f32 0.0, %v2043
        %2045 = vmatmul.bf16.gmra.mxu0 %v1812
        %v2046 = vpop.f32.mrf.mxu0
        %v2047 = vadd.f32 0.0, %v2046
        %v2048 = vpop.f32.mrf.mxu0
        %v2049 = vadd.f32 0.0, %v2048
        %2050 = vdwg.mxu0
        %v2051 = vadd.f32 %v1605, %v1824
        %v2052 = vadd.f32 %v1606, %v1903
        %v2053 = vadd.f32 %v1607, %v1982
        %v2054 = vadd.f32 %v1608, %v1826
        %v2055 = vadd.f32 %v1609, %v1905
        %v2056 = vadd.f32 %v1610, %v1984
        %v2057 = vadd.f32 %v1611, %v1829
        %v2058 = vadd.f32 %v1612, %v1908
        %v2059 = vadd.f32 %v1613, %v1987
        %v2060 = vadd.f32 %v1614, %v1831
        %v2061 = vadd.f32 %v1615, %v1910
        %v2062 = vadd.f32 %v1616, %v1989
        %v2063 = vadd.f32 %v1617, %v1834
        %v2064 = vadd.f32 %v1618, %v1913
        %v2065 = vadd.f32 %v1619, %v1992
        %v2066 = vadd.f32 %v1620, %v1836
        %v2067 = vadd.f32 %v1621, %v1915
        %v2068 = vadd.f32 %v1622, %v1994
        %v2069 = vadd.f32 %v1623, %v1839
        %v2070 = vadd.f32 %v1624, %v1918
        %v2071 = vadd.f32 %v1625, %v1997
        %v2072 = vadd.f32 %v1626, %v1841
        %v2073 = vadd.f32 %v1627, %v1920
        %v2074 = vadd.f32 %v1628, %v1999
        %v2075 = vadd.f32 %v1629, %v1844
        %v2076 = vadd.f32 %v1630, %v1923
        %v2077 = vadd.f32 %v1631, %v2002
        %v2078 = vadd.f32 %v1632, %v1846
        %v2079 = vadd.f32 %v1633, %v1925
        %v2080 = vadd.f32 %v1634, %v2004
        %v2081 = vadd.f32 %v1635, %v1849
        %v2082 = vadd.f32 %v1636, %v1928
        %v2083 = vadd.f32 %v1637, %v2007
        %v2084 = vadd.f32 %v1638, %v1851
        %v2085 = vadd.f32 %v1639, %v1930
        %v2086 = vadd.f32 %v1640, %v2009
        %v2087 = vadd.f32 %v1641, %v1854
        %v2088 = vadd.f32 %v1642, %v1933
        %v2089 = vadd.f32 %v1643, %v2012
        %v2090 = vadd.f32 %v1644, %v1856
        %v2091 = vadd.f32 %v1645, %v1935
        %v2092 = vadd.f32 %v1646, %v2014
        %v2093 = vadd.f32 %v1647, %v1859
        %v2094 = vadd.f32 %v1648, %v1938
        %v2095 = vadd.f32 %v1649, %v2017
        %v2096 = vadd.f32 %v1650, %v1861
        %v2097 = vadd.f32 %v1651, %v1940
        %v2098 = vadd.f32 %v1652, %v2019
        %v2099 = vadd.f32 %v1653, %v1864
        %v2100 = vadd.f32 %v1654, %v1943
        %v2101 = vadd.f32 %v1655, %v2022
        %v2102 = vadd.f32 %v1656, %v1866
        %v2103 = vadd.f32 %v1657, %v1945
        %v2104 = vadd.f32 %v1658, %v2024
        %v2105 = vadd.f32 %v1659, %v1869
        %v2106 = vadd.f32 %v1660, %v1948
        %v2107 = vadd.f32 %v1661, %v2027
        %v2108 = vadd.f32 %v1662, %v1871
        %v2109 = vadd.f32 %v1663, %v1950
        %v2110 = vadd.f32 %v1664, %v2029
        %v2111 = vadd.f32 %v1665, %v1874
        %v2112 = vadd.f32 %v1666, %v1953
        %v2113 = vadd.f32 %v1667, %v2032
        %v2114 = vadd.f32 %v1668, %v1876
        %v2115 = vadd.f32 %v1669, %v1955
        %v2116 = vadd.f32 %v1670, %v2034
        %v2117 = vadd.f32 %v1671, %v1879
        %v2118 = vadd.f32 %v1672, %v1958
        %v2119 = vadd.f32 %v1673, %v2037
        %v2120 = vadd.f32 %v1674, %v1881
        %v2121 = vadd.f32 %v1675, %v1960
        %v2122 = vadd.f32 %v1676, %v2039
        %v2123 = vadd.f32 %v1677, %v1884
        %v2124 = vadd.f32 %v1678, %v1963
        %v2125 = vadd.f32 %v1679, %v2042
        %v2126 = vadd.f32 %v1680, %v1886
        %v2127 = vadd.f32 %v1681, %v1965
        %v2128 = vadd.f32 %v1682, %v2044
        %v2129 = vadd.f32 %v1683, %v1889
        %v2130 = vadd.f32 %v1684, %v1968
        %v2131 = vadd.f32 %v1685, %v2047
        %v2132 = vadd.f32 %v1686, %v1891
        %v2133 = vadd.f32 %v1687, %v1970
        %v2134 = vadd.f32 %v1688, %v2049
        %v2135 = vpack.c.bf16 %v414, %v413
        %s2136 = scalar_lea.vmem %s1, 576
        %v2137 = vld [vmem:[%s2136] sm:$0xff]
        %v2138 = vld [vmem:[%s2136 + $0x8] sm:$0xf]
        %v2139 = vld [vmem:[%s2136 + $0xc] sm:$0xff]
        %v2140 = vld [vmem:[%s2136 + $0x14] sm:$0xf]
        %v2141 = vld [vmem:[%s2136 + $0x18] sm:$0xff]
        %v2142 = vld [vmem:[%s2136 + $0x20] sm:$0xf]
        %v2143 = vld [vmem:[%s2136 + $0x24] sm:$0xff]
        %v2144 = vld [vmem:[%s2136 + $0x2c] sm:$0xf]
        %v2145 = vld [vmem:[%s2136 + $0x30] sm:$0xff]
        %v2146 = vld [vmem:[%s2136 + $0x38] sm:$0xf]
        %v2147 = vld [vmem:[%s2136 + $0x3c] sm:$0xff]
        %v2148 = vld [vmem:[%s2136 + $0x44] sm:$0xf]
        %v2149 = vld [vmem:[%s2136 + $0x48] sm:$0xff]
        %v2150 = vld [vmem:[%s2136 + $0x50] sm:$0xf]
        %v2151 = vld [vmem:[%s2136 + $0x54] sm:$0xff]
        %v2152 = vld [vmem:[%s2136 + $0x5c] sm:$0xf]
        %v2153 = vld [vmem:[%s2136 + $0x60] sm:$0xff]
        %v2154 = vld [vmem:[%s2136 + $0x68] sm:$0xf]
        %v2155 = vld [vmem:[%s2136 + $0x6c] sm:$0xff]
        %v2156 = vld [vmem:[%s2136 + $0x74] sm:$0xf]
        %v2157 = vld [vmem:[%s2136 + $0x78] sm:$0xff]
        %v2158 = vld [vmem:[%s2136 + $0x80] sm:$0xf]
        %v2159 = vld [vmem:[%s2136 + $0x84] sm:$0xff]
        %v2160 = vld [vmem:[%s2136 + $0x8c] sm:$0xf]
        %v2185 = vunpack.c.l.b16 %v2137
        %v2186 = vunpack.c.h.b16 %v2137
        %v2187 = vunpack.c.l.b16 %v2138
        %v2188 = vunpack.c.l.b16 %v2139
        %v2189 = vunpack.c.h.b16 %v2139
        %v2190 = vunpack.c.l.b16 %v2140
        %v2191 = vunpack.c.l.b16 %v2141
        %v2192 = vunpack.c.h.b16 %v2141
        %v2193 = vunpack.c.l.b16 %v2142
        %v2194 = vunpack.c.l.b16 %v2143
        %v2195 = vunpack.c.h.b16 %v2143
        %v2196 = vunpack.c.l.b16 %v2144
        %v2197 = vunpack.c.l.b16 %v2145
        %v2198 = vunpack.c.h.b16 %v2145
        %v2199 = vunpack.c.l.b16 %v2146
        %v2200 = vunpack.c.l.b16 %v2147
        %v2201 = vunpack.c.h.b16 %v2147
        %v2202 = vunpack.c.l.b16 %v2148
        %v2203 = vunpack.c.l.b16 %v2149
        %v2204 = vunpack.c.h.b16 %v2149
        %v2205 = vunpack.c.l.b16 %v2150
        %v2206 = vunpack.c.l.b16 %v2151
        %v2207 = vunpack.c.h.b16 %v2151
        %v2208 = vunpack.c.l.b16 %v2152
        %v2209 = vunpack.c.l.b16 %v2153
        %v2210 = vunpack.c.h.b16 %v2153
        %v2211 = vunpack.c.l.b16 %v2154
        %v2212 = vunpack.c.l.b16 %v2155
        %v2213 = vunpack.c.h.b16 %v2155
        %v2214 = vunpack.c.l.b16 %v2156
        %v2215 = vunpack.c.l.b16 %v2157
        %v2216 = vunpack.c.h.b16 %v2157
        %v2217 = vunpack.c.l.b16 %v2158
        %v2218 = vunpack.c.l.b16 %v2159
        %v2219 = vunpack.c.h.b16 %v2159
        %v2220 = vunpack.c.l.b16 %v2160
        %v2221 = vpack.c.b16 %v2188, %v2185
        %v2222 = vpack.c.b16 %v2189, %v2186
        %v2223 = vpack.c.b16 %v2190, %v2187
        %v2224 = vpack.c.b16 %v2194, %v2191
        %v2225 = vpack.c.b16 %v2195, %v2192
        %v2226 = vpack.c.b16 %v2196, %v2193
        %v2227 = vpack.c.b16 %v2200, %v2197
        %v2228 = vpack.c.b16 %v2201, %v2198
        %v2229 = vpack.c.b16 %v2202, %v2199
        %v2230 = vpack.c.b16 %v2206, %v2203
        %v2231 = vpack.c.b16 %v2207, %v2204
        %v2232 = vpack.c.b16 %v2208, %v2205
        %v2233 = vpack.c.b16 %v2212, %v2209
        %v2234 = vpack.c.b16 %v2213, %v2210
        %v2235 = vpack.c.b16 %v2214, %v2211
        %v2236 = vpack.c.b16 %v2218, %v2215
        %v2237 = vpack.c.b16 %v2219, %v2216
        %v2238 = vpack.c.b16 %v2220, %v2217
        %v2258 = vsel %vm588, %v2135, 0
        %2260 = vmatpush.bf16.msra.mxu0 0
        %2261 = vmatpush.bf16.msra.mxu0 0
        %2262 = vmatpush.bf16.msra.mxu0 %v2236
        %2263 = vmatpush.bf16.msra.mxu0 %v2233
        %2264 = vmatpush.bf16.msra.mxu0 %v2230
        %2265 = vmatpush.bf16.msra.mxu0 %v2227
        %2266 = vmatpush.bf16.msra.mxu0 %v2224
        %2267 = vmatpush.bf16.msra.mxu0 %v2221
        %2268 = vmatmul.bf16.gmra.mxu0 %v971
        %v2269 = vpop.f32.mrf.mxu0
        %v2270 = vadd.f32 0.0, %v2269
        %v2271 = vpop.f32.mrf.mxu0
        %v2272 = vadd.f32 0.0, %v2271
        %2273 = vmatmul.bf16.gmra.mxu0 %v974
        %v2274 = vpop.f32.mrf.mxu0
        %v2275 = vadd.f32 0.0, %v2274
        %v2276 = vpop.f32.mrf.mxu0
        %v2277 = vadd.f32 0.0, %v2276
        %2278 = vmatmul.bf16.gmra.mxu0 %v977
        %v2279 = vpop.f32.mrf.mxu0
        %v2280 = vadd.f32 0.0, %v2279
        %v2281 = vpop.f32.mrf.mxu0
        %v2282 = vadd.f32 0.0, %v2281
        %2283 = vmatmul.bf16.gmra.mxu0 %v980
        %v2284 = vpop.f32.mrf.mxu0
        %v2285 = vadd.f32 0.0, %v2284
        %v2286 = vpop.f32.mrf.mxu0
        %v2287 = vadd.f32 0.0, %v2286
        %2288 = vmatmul.bf16.gmra.mxu0 %v983
        %v2289 = vpop.f32.mrf.mxu0
        %v2290 = vadd.f32 0.0, %v2289
        %v2291 = vpop.f32.mrf.mxu0
        %v2292 = vadd.f32 0.0, %v2291
        %2293 = vmatmul.bf16.gmra.mxu0 %v986
        %v2294 = vpop.f32.mrf.mxu0
        %v2295 = vadd.f32 0.0, %v2294
        %v2296 = vpop.f32.mrf.mxu0
        %v2297 = vadd.f32 0.0, %v2296
        %2298 = vmatmul.bf16.gmra.mxu0 %v989
        %v2299 = vpop.f32.mrf.mxu0
        %v2300 = vadd.f32 0.0, %v2299
        %v2301 = vpop.f32.mrf.mxu0
        %v2302 = vadd.f32 0.0, %v2301
        %2303 = vmatmul.bf16.gmra.mxu0 %v992
        %v2304 = vpop.f32.mrf.mxu0
        %v2305 = vadd.f32 0.0, %v2304
        %v2306 = vpop.f32.mrf.mxu0
        %v2307 = vadd.f32 0.0, %v2306
        %2308 = vmatmul.bf16.gmra.mxu0 %v995
        %v2309 = vpop.f32.mrf.mxu0
        %v2310 = vadd.f32 0.0, %v2309
        %v2311 = vpop.f32.mrf.mxu0
        %v2312 = vadd.f32 0.0, %v2311
        %2313 = vmatmul.bf16.gmra.mxu0 %v998
        %v2314 = vpop.f32.mrf.mxu0
        %v2315 = vadd.f32 0.0, %v2314
        %v2316 = vpop.f32.mrf.mxu0
        %v2317 = vadd.f32 0.0, %v2316
        %2318 = vmatmul.bf16.gmra.mxu0 %v1001
        %v2319 = vpop.f32.mrf.mxu0
        %v2320 = vadd.f32 0.0, %v2319
        %v2321 = vpop.f32.mrf.mxu0
        %v2322 = vadd.f32 0.0, %v2321
        %2323 = vmatmul.bf16.gmra.mxu0 %v1004
        %v2324 = vpop.f32.mrf.mxu0
        %v2325 = vadd.f32 0.0, %v2324
        %v2326 = vpop.f32.mrf.mxu0
        %v2327 = vadd.f32 0.0, %v2326
        %2328 = vmatmul.bf16.gmra.mxu0 %v1366
        %v2329 = vpop.f32.mrf.mxu0
        %v2330 = vadd.f32 0.0, %v2329
        %v2331 = vpop.f32.mrf.mxu0
        %v2332 = vadd.f32 0.0, %v2331
        %2333 = vmatmul.bf16.gmra.mxu0 %v2258
        %v2334 = vpop.f32.mrf.mxu0
        %v2335 = vadd.f32 0.0, %v2334
        %v2336 = vpop.f32.mrf.mxu0
        %v2337 = vadd.f32 0.0, %v2336
        %2338 = vdwg.mxu0
        %2339 = vmatpush.bf16.msra.mxu0 0
        %2340 = vmatpush.bf16.msra.mxu0 0
        %2341 = vmatpush.bf16.msra.mxu0 %v2237
        %2342 = vmatpush.bf16.msra.mxu0 %v2234
        %2343 = vmatpush.bf16.msra.mxu0 %v2231
        %2344 = vmatpush.bf16.msra.mxu0 %v2228
        %2345 = vmatpush.bf16.msra.mxu0 %v2225
        %2346 = vmatpush.bf16.msra.mxu0 %v2222
        %2347 = vmatmul.bf16.gmra.mxu0 %v971
        %v2348 = vpop.f32.mrf.mxu0
        %v2349 = vadd.f32 0.0, %v2348
        %v2350 = vpop.f32.mrf.mxu0
        %v2351 = vadd.f32 0.0, %v2350
        %2352 = vmatmul.bf16.gmra.mxu0 %v974
        %v2353 = vpop.f32.mrf.mxu0
        %v2354 = vadd.f32 0.0, %v2353
        %v2355 = vpop.f32.mrf.mxu0
        %v2356 = vadd.f32 0.0, %v2355
        %2357 = vmatmul.bf16.gmra.mxu0 %v977
        %v2358 = vpop.f32.mrf.mxu0
        %v2359 = vadd.f32 0.0, %v2358
        %v2360 = vpop.f32.mrf.mxu0
        %v2361 = vadd.f32 0.0, %v2360
        %2362 = vmatmul.bf16.gmra.mxu0 %v980
        %v2363 = vpop.f32.mrf.mxu0
        %v2364 = vadd.f32 0.0, %v2363
        %v2365 = vpop.f32.mrf.mxu0
        %v2366 = vadd.f32 0.0, %v2365
        %2367 = vmatmul.bf16.gmra.mxu0 %v983
        %v2368 = vpop.f32.mrf.mxu0
        %v2369 = vadd.f32 0.0, %v2368
        %v2370 = vpop.f32.mrf.mxu0
        %v2371 = vadd.f32 0.0, %v2370
        %2372 = vmatmul.bf16.gmra.mxu0 %v986
        %v2373 = vpop.f32.mrf.mxu0
        %v2374 = vadd.f32 0.0, %v2373
        %v2375 = vpop.f32.mrf.mxu0
        %v2376 = vadd.f32 0.0, %v2375
        %2377 = vmatmul.bf16.gmra.mxu0 %v989
        %v2378 = vpop.f32.mrf.mxu0
        %v2379 = vadd.f32 0.0, %v2378
        %v2380 = vpop.f32.mrf.mxu0
        %v2381 = vadd.f32 0.0, %v2380
        %2382 = vmatmul.bf16.gmra.mxu0 %v992
        %v2383 = vpop.f32.mrf.mxu0
        %v2384 = vadd.f32 0.0, %v2383
        %v2385 = vpop.f32.mrf.mxu0
        %v2386 = vadd.f32 0.0, %v2385
        %2387 = vmatmul.bf16.gmra.mxu0 %v995
        %v2388 = vpop.f32.mrf.mxu0
        %v2389 = vadd.f32 0.0, %v2388
        %v2390 = vpop.f32.mrf.mxu0
        %v2391 = vadd.f32 0.0, %v2390
        %2392 = vmatmul.bf16.gmra.mxu0 %v998
        %v2393 = vpop.f32.mrf.mxu0
        %v2394 = vadd.f32 0.0, %v2393
        %v2395 = vpop.f32.mrf.mxu0
        %v2396 = vadd.f32 0.0, %v2395
        %2397 = vmatmul.bf16.gmra.mxu0 %v1001
        %v2398 = vpop.f32.mrf.mxu0
        %v2399 = vadd.f32 0.0, %v2398
        %v2400 = vpop.f32.mrf.mxu0
        %v2401 = vadd.f32 0.0, %v2400
        %2402 = vmatmul.bf16.gmra.mxu0 %v1004
        %v2403 = vpop.f32.mrf.mxu0
        %v2404 = vadd.f32 0.0, %v2403
        %v2405 = vpop.f32.mrf.mxu0
        %v2406 = vadd.f32 0.0, %v2405
        %2407 = vmatmul.bf16.gmra.mxu0 %v1366
        %v2408 = vpop.f32.mrf.mxu0
        %v2409 = vadd.f32 0.0, %v2408
        %v2410 = vpop.f32.mrf.mxu0
        %v2411 = vadd.f32 0.0, %v2410
        %2412 = vmatmul.bf16.gmra.mxu0 %v2258
        %v2413 = vpop.f32.mrf.mxu0
        %v2414 = vadd.f32 0.0, %v2413
        %v2415 = vpop.f32.mrf.mxu0
        %v2416 = vadd.f32 0.0, %v2415
        %2417 = vdwg.mxu0
        %2418 = vmatpush.bf16.msra.mxu0 0
        %2419 = vmatpush.bf16.msra.mxu0 0
        %2420 = vmatpush.bf16.msra.mxu0 %v2238
        %2421 = vmatpush.bf16.msra.mxu0 %v2235
        %2422 = vmatpush.bf16.msra.mxu0 %v2232
        %2423 = vmatpush.bf16.msra.mxu0 %v2229
        %2424 = vmatpush.bf16.msra.mxu0 %v2226
        %2425 = vmatpush.bf16.msra.mxu0 %v2223
        %2426 = vmatmul.bf16.gmra.mxu0 %v971
        %v2427 = vpop.f32.mrf.mxu0
        %v2428 = vadd.f32 0.0, %v2427
        %v2429 = vpop.f32.mrf.mxu0
        %v2430 = vadd.f32 0.0, %v2429
        %2431 = vmatmul.bf16.gmra.mxu0 %v974
        %v2432 = vpop.f32.mrf.mxu0
        %v2433 = vadd.f32 0.0, %v2432
        %v2434 = vpop.f32.mrf.mxu0
        %v2435 = vadd.f32 0.0, %v2434
        %2436 = vmatmul.bf16.gmra.mxu0 %v977
        %v2437 = vpop.f32.mrf.mxu0
        %v2438 = vadd.f32 0.0, %v2437
        %v2439 = vpop.f32.mrf.mxu0
        %v2440 = vadd.f32 0.0, %v2439
        %2441 = vmatmul.bf16.gmra.mxu0 %v980
        %v2442 = vpop.f32.mrf.mxu0
        %v2443 = vadd.f32 0.0, %v2442
        %v2444 = vpop.f32.mrf.mxu0
        %v2445 = vadd.f32 0.0, %v2444
        %2446 = vmatmul.bf16.gmra.mxu0 %v983
        %v2447 = vpop.f32.mrf.mxu0
        %v2448 = vadd.f32 0.0, %v2447
        %v2449 = vpop.f32.mrf.mxu0
        %v2450 = vadd.f32 0.0, %v2449
        %2451 = vmatmul.bf16.gmra.mxu0 %v986
        %v2452 = vpop.f32.mrf.mxu0
        %v2453 = vadd.f32 0.0, %v2452
        %v2454 = vpop.f32.mrf.mxu0
        %v2455 = vadd.f32 0.0, %v2454
        %2456 = vmatmul.bf16.gmra.mxu0 %v989
        %v2457 = vpop.f32.mrf.mxu0
        %v2458 = vadd.f32 0.0, %v2457
        %v2459 = vpop.f32.mrf.mxu0
        %v2460 = vadd.f32 0.0, %v2459
        %2461 = vmatmul.bf16.gmra.mxu0 %v992
        %v2462 = vpop.f32.mrf.mxu0
        %v2463 = vadd.f32 0.0, %v2462
        %v2464 = vpop.f32.mrf.mxu0
        %v2465 = vadd.f32 0.0, %v2464
        %2466 = vmatmul.bf16.gmra.mxu0 %v995
        %v2467 = vpop.f32.mrf.mxu0
        %v2468 = vadd.f32 0.0, %v2467
        %v2469 = vpop.f32.mrf.mxu0
        %v2470 = vadd.f32 0.0, %v2469
        %2471 = vmatmul.bf16.gmra.mxu0 %v998
        %v2472 = vpop.f32.mrf.mxu0
        %v2473 = vadd.f32 0.0, %v2472
        %v2474 = vpop.f32.mrf.mxu0
        %v2475 = vadd.f32 0.0, %v2474
        %2476 = vmatmul.bf16.gmra.mxu0 %v1001
        %v2477 = vpop.f32.mrf.mxu0
        %v2478 = vadd.f32 0.0, %v2477
        %v2479 = vpop.f32.mrf.mxu0
        %v2480 = vadd.f32 0.0, %v2479
        %2481 = vmatmul.bf16.gmra.mxu0 %v1004
        %v2482 = vpop.f32.mrf.mxu0
        %v2483 = vadd.f32 0.0, %v2482
        %v2484 = vpop.f32.mrf.mxu0
        %v2485 = vadd.f32 0.0, %v2484
        %2486 = vmatmul.bf16.gmra.mxu0 %v1366
        %v2487 = vpop.f32.mrf.mxu0
        %v2488 = vadd.f32 0.0, %v2487
        %v2489 = vpop.f32.mrf.mxu0
        %v2490 = vadd.f32 0.0, %v2489
        %2491 = vmatmul.bf16.gmra.mxu0 %v2258
        %v2492 = vpop.f32.mrf.mxu0
        %v2493 = vadd.f32 0.0, %v2492
        %v2494 = vpop.f32.mrf.mxu0
        %v2495 = vadd.f32 0.0, %v2494
        %2496 = vdwg.mxu0
        %v2497 = vadd.f32 %v2051, %v2270
        %v2498 = vadd.f32 %v2052, %v2349
        %v2499 = vadd.f32 %v2053, %v2428
        %v2500 = vadd.f32 %v2054, %v2272
        %v2501 = vadd.f32 %v2055, %v2351
        %v2502 = vadd.f32 %v2056, %v2430
        %v2503 = vadd.f32 %v2057, %v2275
        %v2504 = vadd.f32 %v2058, %v2354
        %v2505 = vadd.f32 %v2059, %v2433
        %v2506 = vadd.f32 %v2060, %v2277
        %v2507 = vadd.f32 %v2061, %v2356
        %v2508 = vadd.f32 %v2062, %v2435
        %v2509 = vadd.f32 %v2063, %v2280
        %v2510 = vadd.f32 %v2064, %v2359
        %v2511 = vadd.f32 %v2065, %v2438
        %v2512 = vadd.f32 %v2066, %v2282
        %v2513 = vadd.f32 %v2067, %v2361
        %v2514 = vadd.f32 %v2068, %v2440
        %v2515 = vadd.f32 %v2069, %v2285
        %v2516 = vadd.f32 %v2070, %v2364
        %v2517 = vadd.f32 %v2071, %v2443
        %v2518 = vadd.f32 %v2072, %v2287
        %v2519 = vadd.f32 %v2073, %v2366
        %v2520 = vadd.f32 %v2074, %v2445
        %v2521 = vadd.f32 %v2075, %v2290
        %v2522 = vadd.f32 %v2076, %v2369
        %v2523 = vadd.f32 %v2077, %v2448
        %v2524 = vadd.f32 %v2078, %v2292
        %v2525 = vadd.f32 %v2079, %v2371
        %v2526 = vadd.f32 %v2080, %v2450
        %v2527 = vadd.f32 %v2081, %v2295
        %v2528 = vadd.f32 %v2082, %v2374
        %v2529 = vadd.f32 %v2083, %v2453
        %v2530 = vadd.f32 %v2084, %v2297
        %v2531 = vadd.f32 %v2085, %v2376
        %v2532 = vadd.f32 %v2086, %v2455
        %v2533 = vadd.f32 %v2087, %v2300
        %v2534 = vadd.f32 %v2088, %v2379
        %v2535 = vadd.f32 %v2089, %v2458
        %v2536 = vadd.f32 %v2090, %v2302
        %v2537 = vadd.f32 %v2091, %v2381
        %v2538 = vadd.f32 %v2092, %v2460
        %v2539 = vadd.f32 %v2093, %v2305
        %v2540 = vadd.f32 %v2094, %v2384
        %v2541 = vadd.f32 %v2095, %v2463
        %v2542 = vadd.f32 %v2096, %v2307
        %v2543 = vadd.f32 %v2097, %v2386
        %v2544 = vadd.f32 %v2098, %v2465
        %v2545 = vadd.f32 %v2099, %v2310
        %v2546 = vadd.f32 %v2100, %v2389
        %v2547 = vadd.f32 %v2101, %v2468
        %v2548 = vadd.f32 %v2102, %v2312
        %v2549 = vadd.f32 %v2103, %v2391
        %v2550 = vadd.f32 %v2104, %v2470
        %v2551 = vadd.f32 %v2105, %v2315
        %v2552 = vadd.f32 %v2106, %v2394
        %v2553 = vadd.f32 %v2107, %v2473
        %v2554 = vadd.f32 %v2108, %v2317
        %v2555 = vadd.f32 %v2109, %v2396
        %v2556 = vadd.f32 %v2110, %v2475
        %v2557 = vadd.f32 %v2111, %v2320
        %v2558 = vadd.f32 %v2112, %v2399
        %v2559 = vadd.f32 %v2113, %v2478
        %v2560 = vadd.f32 %v2114, %v2322
        %v2561 = vadd.f32 %v2115, %v2401
        %v2562 = vadd.f32 %v2116, %v2480
        %v2563 = vadd.f32 %v2117, %v2325
        %v2564 = vadd.f32 %v2118, %v2404
        %v2565 = vadd.f32 %v2119, %v2483
        %v2566 = vadd.f32 %v2120, %v2327
        %v2567 = vadd.f32 %v2121, %v2406
        %v2568 = vadd.f32 %v2122, %v2485
        %v2569 = vadd.f32 %v2123, %v2330
        %v2570 = vadd.f32 %v2124, %v2409
        %v2571 = vadd.f32 %v2125, %v2488
        %v2572 = vadd.f32 %v2126, %v2332
        %v2573 = vadd.f32 %v2127, %v2411
        %v2574 = vadd.f32 %v2128, %v2490
        %v2575 = vadd.f32 %v2129, %v2335
        %v2576 = vadd.f32 %v2130, %v2414
        %v2577 = vadd.f32 %v2131, %v2493
        %v2578 = vadd.f32 %v2132, %v2337
        %v2579 = vadd.f32 %v2133, %v2416
        %v2580 = vadd.f32 %v2134, %v2495
        %v2581 = vmax.f32 %v2497, %v2500
        %v2582 = vmax.f32 %v2498, %v2501
        %vm2583 = vcmask 195584
        %v2584 = vsel %vm2583, %v2499, -inf
        %v2585 = vsel %vm2583, %v2502, -inf
        %v2586 = vmax.f32 %v2584, %v2585
        %v2587 = vmax.f32 %v2503, %v2506
        %v2588 = vmax.f32 %v2504, %v2507
        %v2589 = vsel %vm2583, %v2505, -inf
        %v2590 = vsel %vm2583, %v2508, -inf
        %v2591 = vmax.f32 %v2589, %v2590
        %v2592 = vmax.f32 %v2509, %v2512
        %v2593 = vmax.f32 %v2510, %v2513
        %v2594 = vsel %vm2583, %v2511, -inf
        %v2595 = vsel %vm2583, %v2514, -inf
        %v2596 = vmax.f32 %v2594, %v2595
        %v2597 = vmax.f32 %v2515, %v2518
        %v2598 = vmax.f32 %v2516, %v2519
        %v2599 = vsel %vm2583, %v2517, -inf
        %v2600 = vsel %vm2583, %v2520, -inf
        %v2601 = vmax.f32 %v2599, %v2600
        %v2602 = vmax.f32 %v2521, %v2524
        %v2603 = vmax.f32 %v2522, %v2525
        %v2604 = vsel %vm2583, %v2523, -inf
        %v2605 = vsel %vm2583, %v2526, -inf
        %v2606 = vmax.f32 %v2604, %v2605
        %v2607 = vmax.f32 %v2527, %v2530
        %v2608 = vmax.f32 %v2528, %v2531
        %v2609 = vsel %vm2583, %v2529, -inf
        %v2610 = vsel %vm2583, %v2532, -inf
        %v2611 = vmax.f32 %v2609, %v2610
        %v2612 = vmax.f32 %v2533, %v2536
        %v2613 = vmax.f32 %v2534, %v2537
        %v2614 = vsel %vm2583, %v2535, -inf
        %v2615 = vsel %vm2583, %v2538, -inf
        %v2616 = vmax.f32 %v2614, %v2615
        %v2617 = vmax.f32 %v2539, %v2542
        %v2618 = vmax.f32 %v2540, %v2543
        %v2619 = vsel %vm2583, %v2541, -inf
        %v2620 = vsel %vm2583, %v2544, -inf
        %v2621 = vmax.f32 %v2619, %v2620
        %v2622 = vmax.f32 %v2545, %v2548
        %v2623 = vmax.f32 %v2546, %v2549
        %v2624 = vsel %vm2583, %v2547, -inf
        %v2625 = vsel %vm2583, %v2550, -inf
        %v2626 = vmax.f32 %v2624, %v2625
        %v2627 = vmax.f32 %v2551, %v2554
        %v2628 = vmax.f32 %v2552, %v2555
        %v2629 = vsel %vm2583, %v2553, -inf
        %v2630 = vsel %vm2583, %v2556, -inf
        %v2631 = vmax.f32 %v2629, %v2630
        %v2632 = vmax.f32 %v2557, %v2560
        %v2633 = vmax.f32 %v2558, %v2561
        %v2634 = vsel %vm2583, %v2559, -inf
        %v2635 = vsel %vm2583, %v2562, -inf
        %v2636 = vmax.f32 %v2634, %v2635
        %v2637 = vmax.f32 %v2563, %v2566
        %v2638 = vmax.f32 %v2564, %v2567
        %v2639 = vsel %vm2583, %v2565, -inf
        %v2640 = vsel %vm2583, %v2568, -inf
        %v2641 = vmax.f32 %v2639, %v2640
        %v2642 = vmax.f32 %v2569, %v2572
        %v2643 = vmax.f32 %v2570, %v2573
        %v2644 = vsel %vm2583, %v2571, -inf
        %v2645 = vsel %vm2583, %v2574, -inf
        %v2646 = vmax.f32 %v2644, %v2645
        %v2647 = vmax.f32 %v2575, %v2578
        %v2648 = vmax.f32 %v2576, %v2579
        %v2649 = vsel %vm2583, %v2577, -inf
        %v2650 = vsel %vm2583, %v2580, -inf
        %v2651 = vmax.f32 %v2649, %v2650
        %2694 = vrot.lane.b32.xlu0 %v2581, 118
        %v2695 = vpop.permute.xlu0 %2694
        %2696 = vrot.lane.b32.xlu0 %v2582, 118
        %v2697 = vpop.permute.xlu0 %2696
        %2698 = vrot.lane.b32.xlu0 %v2586, 118
        %v2699 = vpop.permute.xlu0 %2698
        %2700 = vrot.lane.b32.xlu0 %v2587, 118
        %v2701 = vpop.permute.xlu0 %2700
        %2702 = vrot.lane.b32.xlu0 %v2588, 118
        %v2703 = vpop.permute.xlu0 %2702
        %2704 = vrot.lane.b32.xlu0 %v2591, 118
        %v2705 = vpop.permute.xlu0 %2704
        %2706 = vrot.lane.b32.xlu0 %v2592, 118
        %v2707 = vpop.permute.xlu0 %2706
        %2708 = vrot.lane.b32.xlu0 %v2593, 118
        %v2709 = vpop.permute.xlu0 %2708
        %2710 = vrot.lane.b32.xlu0 %v2596, 118
        %v2711 = vpop.permute.xlu0 %2710
        %2712 = vrot.lane.b32.xlu0 %v2597, 118
        %v2713 = vpop.permute.xlu0 %2712
        %2714 = vrot.lane.b32.xlu0 %v2598, 118
        %v2715 = vpop.permute.xlu0 %2714
        %2716 = vrot.lane.b32.xlu0 %v2601, 118
        %v2717 = vpop.permute.xlu0 %2716
        %2718 = vrot.lane.b32.xlu0 %v2602, 118
        %v2719 = vpop.permute.xlu0 %2718
        %2720 = vrot.lane.b32.xlu0 %v2603, 118
        %v2721 = vpop.permute.xlu0 %2720
        %2722 = vrot.lane.b32.xlu0 %v2606, 118
        %v2723 = vpop.permute.xlu0 %2722
        %2724 = vrot.lane.b32.xlu0 %v2607, 118
        %v2725 = vpop.permute.xlu0 %2724
        %2726 = vrot.lane.b32.xlu0 %v2608, 118
        %v2727 = vpop.permute.xlu0 %2726
        %2728 = vrot.lane.b32.xlu0 %v2611, 118
        %v2729 = vpop.permute.xlu0 %2728
        %2730 = vrot.lane.b32.xlu0 %v2612, 118
        %v2731 = vpop.permute.xlu0 %2730
        %2732 = vrot.lane.b32.xlu0 %v2613, 118
        %v2733 = vpop.permute.xlu0 %2732
        %2734 = vrot.lane.b32.xlu0 %v2616, 118
        %v2735 = vpop.permute.xlu0 %2734
        %2736 = vrot.lane.b32.xlu0 %v2617, 118
        %v2737 = vpop.permute.xlu0 %2736
        %2738 = vrot.lane.b32.xlu0 %v2618, 118
        %v2739 = vpop.permute.xlu0 %2738
        %2740 = vrot.lane.b32.xlu0 %v2621, 118
        %v2741 = vpop.permute.xlu0 %2740
        %2742 = vrot.lane.b32.xlu0 %v2622, 118
        %v2743 = vpop.permute.xlu0 %2742
        %2744 = vrot.lane.b32.xlu0 %v2623, 118
        %v2745 = vpop.permute.xlu0 %2744
        %2746 = vrot.lane.b32.xlu0 %v2626, 118
        %v2747 = vpop.permute.xlu0 %2746
        %2748 = vrot.lane.b32.xlu0 %v2627, 118
        %v2749 = vpop.permute.xlu0 %2748
        %2750 = vrot.lane.b32.xlu0 %v2628, 118
        %v2751 = vpop.permute.xlu0 %2750
        %2752 = vrot.lane.b32.xlu0 %v2631, 118
        %v2753 = vpop.permute.xlu0 %2752
        %2754 = vrot.lane.b32.xlu0 %v2632, 118
        %v2755 = vpop.permute.xlu0 %2754
        %2756 = vrot.lane.b32.xlu0 %v2633, 118
        %v2757 = vpop.permute.xlu0 %2756
        %2758 = vrot.lane.b32.xlu0 %v2636, 118
        %v2759 = vpop.permute.xlu0 %2758
        %2760 = vrot.lane.b32.xlu0 %v2637, 118
        %v2761 = vpop.permute.xlu0 %2760
        %2762 = vrot.lane.b32.xlu0 %v2638, 118
        %v2763 = vpop.permute.xlu0 %2762
        %2764 = vrot.lane.b32.xlu0 %v2641, 118
        %v2765 = vpop.permute.xlu0 %2764
        %2766 = vrot.lane.b32.xlu0 %v2642, 118
        %v2767 = vpop.permute.xlu0 %2766
        %2768 = vrot.lane.b32.xlu0 %v2643, 118
        %v2769 = vpop.permute.xlu0 %2768
        %2770 = vrot.lane.b32.xlu0 %v2646, 118
        %v2771 = vpop.permute.xlu0 %2770
        %2772 = vrot.lane.b32.xlu0 %v2647, 118
        %v2773 = vpop.permute.xlu0 %2772
        %2774 = vrot.lane.b32.xlu0 %v2648, 118
        %v2775 = vpop.permute.xlu0 %2774
        %2776 = vrot.lane.b32.xlu0 %v2651, 118
        %v2777 = vpop.permute.xlu0 %2776
        %vm2778 = vcmask 965632
        %v2779 = vsel %vm2778, %v2695, %v2697
        %v2780 = vsel %vm2778, %v2697, %v2699
        %v2781 = vsel %vm2778, %v2701, %v2703
        %v2782 = vsel %vm2778, %v2703, %v2705
        %v2783 = vsel %vm2778, %v2707, %v2709
        %v2784 = vsel %vm2778, %v2709, %v2711
        %v2785 = vsel %vm2778, %v2713, %v2715
        %v2786 = vsel %vm2778, %v2715, %v2717
        %v2787 = vsel %vm2778, %v2719, %v2721
        %v2788 = vsel %vm2778, %v2721, %v2723
        %v2789 = vsel %vm2778, %v2725, %v2727
        %v2790 = vsel %vm2778, %v2727, %v2729
        %v2791 = vsel %vm2778, %v2731, %v2733
        %v2792 = vsel %vm2778, %v2733, %v2735
        %v2793 = vsel %vm2778, %v2737, %v2739
        %v2794 = vsel %vm2778, %v2739, %v2741
        %v2795 = vsel %vm2778, %v2743, %v2745
        %v2796 = vsel %vm2778, %v2745, %v2747
        %v2797 = vsel %vm2778, %v2749, %v2751
        %v2798 = vsel %vm2778, %v2751, %v2753
        %v2799 = vsel %vm2778, %v2755, %v2757
        %v2800 = vsel %vm2778, %v2757, %v2759
        %v2801 = vsel %vm2778, %v2761, %v2763
        %v2802 = vsel %vm2778, %v2763, %v2765
        %v2803 = vsel %vm2778, %v2767, %v2769
        %v2804 = vsel %vm2778, %v2769, %v2771
        %v2805 = vsel %vm2778, %v2773, %v2775
        %v2806 = vsel %vm2778, %v2775, %v2777
        %v2849 = vmax.f32 %v2581, %v2779
        %v2850 = vmax.f32 %v2582, %v2780
        %v2851 = vmax.f32 %v2586, %v2699
        %v2852 = vmax.f32 %v2587, %v2781
        %v2853 = vmax.f32 %v2588, %v2782
        %v2854 = vmax.f32 %v2591, %v2705
        %v2855 = vmax.f32 %v2592, %v2783
        %v2856 = vmax.f32 %v2593, %v2784
        %v2857 = vmax.f32 %v2596, %v2711
        %v2858 = vmax.f32 %v2597, %v2785
        %v2859 = vmax.f32 %v2598, %v2786
        %v2860 = vmax.f32 %v2601, %v2717
        %v2861 = vmax.f32 %v2602, %v2787
        %v2862 = vmax.f32 %v2603, %v2788
        %v2863 = vmax.f32 %v2606, %v2723
        %v2864 = vmax.f32 %v2607, %v2789
        %v2865 = vmax.f32 %v2608, %v2790
        %v2866 = vmax.f32 %v2611, %v2729
        %v2867 = vmax.f32 %v2612, %v2791
        %v2868 = vmax.f32 %v2613, %v2792
        %v2869 = vmax.f32 %v2616, %v2735
        %v2870 = vmax.f32 %v2617, %v2793
        %v2871 = vmax.f32 %v2618, %v2794
        %v2872 = vmax.f32 %v2621, %v2741
        %v2873 = vmax.f32 %v2622, %v2795
        %v2874 = vmax.f32 %v2623, %v2796
        %v2875 = vmax.f32 %v2626, %v2747
        %v2876 = vmax.f32 %v2627, %v2797
        %v2877 = vmax.f32 %v2628, %v2798
        %v2878 = vmax.f32 %v2631, %v2753
        %v2879 = vmax.f32 %v2632, %v2799
        %v2880 = vmax.f32 %v2633, %v2800
        %v2881 = vmax.f32 %v2636, %v2759
        %v2882 = vmax.f32 %v2637, %v2801
        %v2883 = vmax.f32 %v2638, %v2802
        %v2884 = vmax.f32 %v2641, %v2765
        %v2885 = vmax.f32 %v2642, %v2803
        %v2886 = vmax.f32 %v2643, %v2804
        %v2887 = vmax.f32 %v2646, %v2771
        %v2888 = vmax.f32 %v2647, %v2805
        %v2889 = vmax.f32 %v2648, %v2806
        %v2890 = vmax.f32 %v2651, %v2777
        %v2891 = vmax.f32 %v2849, 0.0
        %v2892 = vmax.f32 %v2850, 0.0
        %v2893 = vmax.f32 %v2851, 0.0
        %v2894 = vmax.f32 %v2852, 0.0
        %v2895 = vmax.f32 %v2853, 0.0
        %v2896 = vmax.f32 %v2854, 0.0
        %v2897 = vmax.f32 %v2855, 0.0
        %v2898 = vmax.f32 %v2856, 0.0
        %v2899 = vmax.f32 %v2857, 0.0
        %v2900 = vmax.f32 %v2858, 0.0
        %v2901 = vmax.f32 %v2859, 0.0
        %v2902 = vmax.f32 %v2860, 0.0
        %v2903 = vmax.f32 %v2861, 0.0
        %v2904 = vmax.f32 %v2862, 0.0
        %v2905 = vmax.f32 %v2863, 0.0
        %v2906 = vmax.f32 %v2864, 0.0
        %v2907 = vmax.f32 %v2865, 0.0
        %v2908 = vmax.f32 %v2866, 0.0
        %v2909 = vmax.f32 %v2867, 0.0
        %v2910 = vmax.f32 %v2868, 0.0
        %v2911 = vmax.f32 %v2869, 0.0
        %v2912 = vmax.f32 %v2870, 0.0
        %v2913 = vmax.f32 %v2871, 0.0
        %v2914 = vmax.f32 %v2872, 0.0
        %v2915 = vmax.f32 %v2873, 0.0
        %v2916 = vmax.f32 %v2874, 0.0
        %v2917 = vmax.f32 %v2875, 0.0
        %v2918 = vmax.f32 %v2876, 0.0
        %v2919 = vmax.f32 %v2877, 0.0
        %v2920 = vmax.f32 %v2878, 0.0
        %v2921 = vmax.f32 %v2879, 0.0
        %v2922 = vmax.f32 %v2880, 0.0
        %v2923 = vmax.f32 %v2881, 0.0
        %v2924 = vmax.f32 %v2882, 0.0
        %v2925 = vmax.f32 %v2883, 0.0
        %v2926 = vmax.f32 %v2884, 0.0
        %v2927 = vmax.f32 %v2885, 0.0
        %v2928 = vmax.f32 %v2886, 0.0
        %v2929 = vmax.f32 %v2887, 0.0
        %v2930 = vmax.f32 %v2888, 0.0
        %v2931 = vmax.f32 %v2889, 0.0
        %v2932 = vmax.f32 %v2890, 0.0
        %v2933 = vpack.c.bf16 %v2894, %v2891
        %v2934 = vpack.c.bf16 %v2895, %v2892
        %v2935 = vpack.c.bf16 %v2896, %v2893
        %v2936 = vpack.c.bf16 %v2900, %v2897
        %v2937 = vpack.c.bf16 %v2901, %v2898
        %v2938 = vpack.c.bf16 %v2902, %v2899
        %v2939 = vpack.c.bf16 %v2906, %v2903
        %v2940 = vpack.c.bf16 %v2907, %v2904
        %v2941 = vpack.c.bf16 %v2908, %v2905
        %v2942 = vpack.c.bf16 %v2912, %v2909
        %v2943 = vpack.c.bf16 %v2913, %v2910
        %v2944 = vpack.c.bf16 %v2914, %v2911
        %v2945 = vpack.c.bf16 %v2918, %v2915
        %v2946 = vpack.c.bf16 %v2919, %v2916
        %v2947 = vpack.c.bf16 %v2920, %v2917
        %v2948 = vld [vmem:[%s2] sm:$0xff]
        %v2949 = vld [vmem:[%s2 + $0x8] sm:$0xff]
        %v2950 = vld [vmem:[%s2 + $0x10] sm:$0xff]
        %v2951 = vld [vmem:[%s2 + $0x18] sm:$0xff]
        %v2952 = vld [vmem:[%s2 + $0x20] sm:$0xff]
        %v2953 = vld [vmem:[%s2 + $0x28] sm:$0xff]
        %v2954 = vld [vmem:[%s2 + $0x30] sm:$0xff]
        %v2955 = vld [vmem:[%s2 + $0x38] sm:$0xff]
        %v2956 = vld [vmem:[%s2 + $0x40] sm:$0xff]
        %v2957 = vld [vmem:[%s2 + $0x48] sm:$0xff]
        %v2958 = vld [vmem:[%s2 + $0x50] sm:$0xff]
        %v2959 = vld [vmem:[%s2 + $0x58] sm:$0xff]
        %v2960 = vld [vmem:[%s2 + $0x60] sm:$0xff]
        %v2961 = vld [vmem:[%s2 + $0x68] sm:$0xff]
        %v2962 = vld [vmem:[%s2 + $0x70] sm:$0xff]
        %v2963 = vld [vmem:[%s2 + $0x78] sm:$0xff]
        %v2964 = vld [vmem:[%s2 + $0x80] sm:$0xff]
        %v2965 = vld [vmem:[%s2 + $0x88] sm:$0xff]
        %v2966 = vld [vmem:[%s2 + $0x90] sm:$0xff]
        %v2967 = vld [vmem:[%s2 + $0x98] sm:$0xff]
        %v2968 = vld [vmem:[%s2 + $0xa0] sm:$0xff]
        %v2969 = vld [vmem:[%s2 + $0xa8] sm:$0xff]
        %v2970 = vld [vmem:[%s2 + $0xb0] sm:$0xff]
        %v2971 = vld [vmem:[%s2 + $0xb8] sm:$0xff]
        %v2972 = vld [vmem:[%s2 + $0xc0] sm:$0xff]
        %v2973 = vld [vmem:[%s2 + $0xc8] sm:$0xff]
        %v2974 = vld [vmem:[%s2 + $0xd0] sm:$0xff]
        %v2975 = vld [vmem:[%s2 + $0xd8] sm:$0xff]
        %v2976 = vld [vmem:[%s2 + $0xe0] sm:$0xff]
        %v2977 = vld [vmem:[%s2 + $0xe8] sm:$0xff]
        %v2978 = vld [vmem:[%s2 + $0xf0] sm:$0xff]
        %v2979 = vld [vmem:[%s2 + $0xf8] sm:$0xff]
        %v2980 = vld [vmem:[%s2 + $0x100] sm:$0xff]
        %v2981 = vld [vmem:[%s2 + $0x108] sm:$0x77]
        %v2982 = vpack.c.bf16 %v2897, %v2894
        %v2983 = vpack.c.bf16 %v2898, %v2895
        %v2984 = vpack.c.bf16 %v2899, %v2896
        %v2985 = vpack.c.bf16 %v2903, %v2900
        %v2986 = vpack.c.bf16 %v2904, %v2901
        %v2987 = vpack.c.bf16 %v2905, %v2902
        %v2988 = vpack.c.bf16 %v2909, %v2906
        %v2989 = vpack.c.bf16 %v2910, %v2907
        %v2990 = vpack.c.bf16 %v2911, %v2908
        %v2991 = vpack.c.bf16 %v2915, %v2912
        %v2992 = vpack.c.bf16 %v2916, %v2913
        %v2993 = vpack.c.bf16 %v2917, %v2914
        %v2994 = vpack.c.bf16 %v2921, %v2918
        %v2995 = vpack.c.bf16 %v2922, %v2919
        %v2996 = vpack.c.bf16 %v2923, %v2920
        %s2997 = scalar_lea.vmem %s2, 272
        %v2998 = vld [vmem:[%s2997] sm:$0xff]
        %v2999 = vld [vmem:[%s2997 + $0x8] sm:$0xff]
        %v3000 = vld [vmem:[%s2997 + $0x10] sm:$0xff]
        %v3001 = vld [vmem:[%s2997 + $0x18] sm:$0xff]
        %v3002 = vld [vmem:[%s2997 + $0x20] sm:$0xff]
        %v3003 = vld [vmem:[%s2997 + $0x28] sm:$0xff]
        %v3004 = vld [vmem:[%s2997 + $0x30] sm:$0xff]
        %v3005 = vld [vmem:[%s2997 + $0x38] sm:$0xff]
        %v3006 = vld [vmem:[%s2997 + $0x40] sm:$0xff]
        %v3007 = vld [vmem:[%s2997 + $0x48] sm:$0xff]
        %v3008 = vld [vmem:[%s2997 + $0x50] sm:$0xff]
        %v3009 = vld [vmem:[%s2997 + $0x58] sm:$0xff]
        %v3010 = vld [vmem:[%s2997 + $0x60] sm:$0xff]
        %v3011 = vld [vmem:[%s2997 + $0x68] sm:$0xff]
        %v3012 = vld [vmem:[%s2997 + $0x70] sm:$0xff]
        %v3013 = vld [vmem:[%s2997 + $0x78] sm:$0xff]
        %v3014 = vld [vmem:[%s2997 + $0x80] sm:$0xff]
        %v3015 = vld [vmem:[%s2997 + $0x88] sm:$0xff]
        %v3016 = vld [vmem:[%s2997 + $0x90] sm:$0xff]
        %v3017 = vld [vmem:[%s2997 + $0x98] sm:$0xff]
        %v3018 = vld [vmem:[%s2997 + $0xa0] sm:$0xff]
        %v3019 = vld [vmem:[%s2997 + $0xa8] sm:$0xff]
        %v3020 = vld [vmem:[%s2997 + $0xb0] sm:$0xff]
        %v3021 = vld [vmem:[%s2997 + $0xb8] sm:$0xff]
        %v3022 = vld [vmem:[%s2997 + $0xc0] sm:$0xff]
        %v3023 = vld [vmem:[%s2997 + $0xc8] sm:$0xff]
        %v3024 = vld [vmem:[%s2997 + $0xd0] sm:$0xff]
        %v3025 = vld [vmem:[%s2997 + $0xd8] sm:$0xff]
        %v3026 = vld [vmem:[%s2997 + $0xe0] sm:$0xff]
        %v3027 = vld [vmem:[%s2997 + $0xe8] sm:$0xff]
        %v3028 = vld [vmem:[%s2997 + $0xf0] sm:$0xff]
        %v3029 = vld [vmem:[%s2997 + $0xf8] sm:$0xff]
        %v3030 = vld [vmem:[%s2997 + $0x100] sm:$0xff]
        %v3031 = vld [vmem:[%s2997 + $0x108] sm:$0x77]
        %v3066 = vunpack.c.l.b16 %v2998
        %v3067 = vunpack.c.h.b16 %v2998
        %v3068 = vunpack.c.l.b16 %v2999
        %v3069 = vunpack.c.h.b16 %v2999
        %v3070 = vunpack.c.l.b16 %v3000
        %v3071 = vunpack.c.h.b16 %v3000
        %v3072 = vunpack.c.l.b16 %v3001
        %v3073 = vunpack.c.h.b16 %v3001
        %v3074 = vunpack.c.l.b16 %v3002
        %v3075 = vunpack.c.h.b16 %v3002
        %v3076 = vunpack.c.l.b16 %v3003
        %v3077 = vunpack.c.h.b16 %v3003
        %v3078 = vunpack.c.l.b16 %v3004
        %v3079 = vunpack.c.h.b16 %v3004
        %v3080 = vunpack.c.l.b16 %v3005
        %v3081 = vunpack.c.h.b16 %v3005
        %v3082 = vunpack.c.l.b16 %v3006
        %v3083 = vunpack.c.h.b16 %v3006
        %v3084 = vunpack.c.l.b16 %v3007
        %v3085 = vunpack.c.h.b16 %v3007
        %v3086 = vunpack.c.l.b16 %v3008
        %v3087 = vunpack.c.h.b16 %v3008
        %v3088 = vunpack.c.l.b16 %v3009
        %v3089 = vunpack.c.h.b16 %v3009
        %v3090 = vunpack.c.l.b16 %v3010
        %v3091 = vunpack.c.h.b16 %v3010
        %v3092 = vunpack.c.l.b16 %v3011
        %v3093 = vunpack.c.h.b16 %v3011
        %v3094 = vunpack.c.l.b16 %v3012
        %v3095 = vunpack.c.h.b16 %v3012
        %v3096 = vunpack.c.l.b16 %v3013
        %v3097 = vunpack.c.h.b16 %v3013
        %v3098 = vunpack.c.l.b16 %v3014
        %v3099 = vunpack.c.h.b16 %v3014
        %v3100 = vunpack.c.l.b16 %v3015
        %v3101 = vunpack.c.h.b16 %v3015
        %v3102 = vunpack.c.l.b16 %v3016
        %v3103 = vunpack.c.h.b16 %v3016
        %v3104 = vunpack.c.l.b16 %v3017
        %v3105 = vunpack.c.h.b16 %v3017
        %v3106 = vunpack.c.l.b16 %v3018
        %v3107 = vunpack.c.h.b16 %v3018
        %v3108 = vunpack.c.l.b16 %v3019
        %v3109 = vunpack.c.h.b16 %v3019
        %v3110 = vunpack.c.l.b16 %v3020
        %v3111 = vunpack.c.h.b16 %v3020
        %v3112 = vunpack.c.l.b16 %v3021
        %v3113 = vunpack.c.h.b16 %v3021
        %v3114 = vunpack.c.l.b16 %v3022
        %v3115 = vunpack.c.h.b16 %v3022
        %v3116 = vunpack.c.l.b16 %v3023
        %v3117 = vunpack.c.h.b16 %v3023
        %v3118 = vunpack.c.l.b16 %v3024
        %v3119 = vunpack.c.h.b16 %v3024
        %v3120 = vunpack.c.l.b16 %v3025
        %v3121 = vunpack.c.h.b16 %v3025
        %v3122 = vunpack.c.l.b16 %v3026
        %v3123 = vunpack.c.h.b16 %v3026
        %v3124 = vunpack.c.l.b16 %v3027
        %v3125 = vunpack.c.h.b16 %v3027
        %v3126 = vunpack.c.l.b16 %v3028
        %v3127 = vunpack.c.h.b16 %v3028
        %v3128 = vunpack.c.l.b16 %v3029
        %v3129 = vunpack.c.h.b16 %v3029
        %v3130 = vunpack.c.l.b16 %v3030
        %v3131 = vunpack.c.h.b16 %v3030
        %v3132 = vunpack.c.l.b16 %v3031
        %v3133 = vunpack.c.h.b16 %v3031
        %v3134 = vpack.c.b16 %v3068, %v3066
        %v3135 = vpack.c.b16 %v3069, %v3067
        %v3136 = vpack.c.b16 %v3072, %v3070
        %v3137 = vpack.c.b16 %v3073, %v3071
        %v3138 = vpack.c.b16 %v3076, %v3074
        %v3139 = vpack.c.b16 %v3077, %v3075
        %v3140 = vpack.c.b16 %v3080, %v3078
        %v3141 = vpack.c.b16 %v3081, %v3079
        %v3142 = vpack.c.b16 %v3084, %v3082
        %v3143 = vpack.c.b16 %v3085, %v3083
        %v3144 = vpack.c.b16 %v3088, %v3086
        %v3145 = vpack.c.b16 %v3089, %v3087
        %v3146 = vpack.c.b16 %v3092, %v3090
        %v3147 = vpack.c.b16 %v3093, %v3091
        %v3148 = vpack.c.b16 %v3096, %v3094
        %v3149 = vpack.c.b16 %v3097, %v3095
        %v3150 = vpack.c.b16 %v3100, %v3098
        %v3151 = vpack.c.b16 %v3101, %v3099
        %v3152 = vpack.c.b16 %v3104, %v3102
        %v3153 = vpack.c.b16 %v3105, %v3103
        %v3154 = vpack.c.b16 %v3108, %v3106
        %v3155 = vpack.c.b16 %v3109, %v3107
        %v3156 = vpack.c.b16 %v3112, %v3110
        %v3157 = vpack.c.b16 %v3113, %v3111
        %v3158 = vpack.c.b16 %v3116, %v3114
        %v3159 = vpack.c.b16 %v3117, %v3115
        %v3160 = vpack.c.b16 %v3120, %v3118
        %v3161 = vpack.c.b16 %v3121, %v3119
        %v3162 = vpack.c.b16 %v3124, %v3122
        %v3163 = vpack.c.b16 %v3125, %v3123
        %v3164 = vpack.c.b16 %v3128, %v3126
        %v3165 = vpack.c.b16 %v3129, %v3127
        %v3166 = vpack.c.b16 %v3132, %v3130
        %v3167 = vpack.c.b16 %v3133, %v3131
        %vm3200 = vcmask 113664
        %v3202 = vsel %vm3200, %v2984, 0
        %v3205 = vsel %vm3200, %v2987, 0
        %v3208 = vsel %vm3200, %v2990, 0
        %v3211 = vsel %vm3200, %v2993, 0
        %v3214 = vsel %vm3200, %v2996, 0
        %vm3216 = vcmask 1046528
        %v3218 = vsel %vm3216, %v3166, 0
        %v3221 = vsel %vm3216, %v3167, 0
        %3223 = vmatpush.bf16.msra.mxu0 %v3148
        %3224 = vmatpush.bf16.msra.mxu0 %v3146
        %3225 = vmatpush.bf16.msra.mxu0 %v3144
        %3226 = vmatpush.bf16.msra.mxu0 %v3142
        %3227 = vmatpush.bf16.msra.mxu0 %v3140
        %3228 = vmatpush.bf16.msra.mxu0 %v3138
        %3229 = vmatpush.bf16.msra.mxu0 %v3136
        %3230 = vmatpush.bf16.msra.mxu0 %v3134
        %3231 = vmatmul.bf16.gmra.mxu0 %v2982
        %v3232 = vpop.f32.mrf.mxu0
        %v3233 = vadd.f32 0.0, %v3232
        %v3234 = vpop.f32.mrf.mxu0
        %v3235 = vadd.f32 0.0, %v3234
        %3236 = vmatmul.bf16.gmra.mxu0 %v2985
        %v3237 = vpop.f32.mrf.mxu0
        %v3238 = vadd.f32 0.0, %v3237
        %v3239 = vpop.f32.mrf.mxu0
        %v3240 = vadd.f32 0.0, %v3239
        %3241 = vmatmul.bf16.gmra.mxu0 %v2988
        %v3242 = vpop.f32.mrf.mxu0
        %v3243 = vadd.f32 0.0, %v3242
        %v3244 = vpop.f32.mrf.mxu0
        %v3245 = vadd.f32 0.0, %v3244
        %3246 = vmatmul.bf16.gmra.mxu0 %v2991
        %v3247 = vpop.f32.mrf.mxu0
        %v3248 = vadd.f32 0.0, %v3247
        %v3249 = vpop.f32.mrf.mxu0
        %v3250 = vadd.f32 0.0, %v3249
        %3251 = vmatmul.bf16.gmra.mxu0 %v2994
        %v3252 = vpop.f32.mrf.mxu0
        %v3253 = vadd.f32 0.0, %v3252
        %v3254 = vpop.f32.mrf.mxu0
        %v3255 = vadd.f32 0.0, %v3254
        %3256 = vdwg.mxu0
        %3257 = vmatpush.bf16.msra.mxu0 %v3164
        %3258 = vmatpush.bf16.msra.mxu0 %v3162
        %3259 = vmatpush.bf16.msra.mxu0 %v3160
        %3260 = vmatpush.bf16.msra.mxu0 %v3158
        %3261 = vmatpush.bf16.msra.mxu0 %v3156
        %3262 = vmatpush.bf16.msra.mxu0 %v3154
        %3263 = vmatpush.bf16.msra.mxu0 %v3152
        %3264 = vmatpush.bf16.msra.mxu0 %v3150
        %3265 = vmatmul.bf16.gmra.mxu0 %v2983
        %v3266 = vpop.f32.mrf.mxu0
        %v3267 = vadd.f32 %v3233, %v3266
        %v3268 = vpop.f32.mrf.mxu0
        %v3269 = vadd.f32 %v3235, %v3268
        %3270 = vmatmul.bf16.gmra.mxu0 %v2986
        %v3271 = vpop.f32.mrf.mxu0
        %v3272 = vadd.f32 %v3238, %v3271
        %v3273 = vpop.f32.mrf.mxu0
        %v3274 = vadd.f32 %v3240, %v3273
        %3275 = vmatmul.bf16.gmra.mxu0 %v2989
        %v3276 = vpop.f32.mrf.mxu0
        %v3277 = vadd.f32 %v3243, %v3276
        %v3278 = vpop.f32.mrf.mxu0
        %v3279 = vadd.f32 %v3245, %v3278
        %3280 = vmatmul.bf16.gmra.mxu0 %v2992
        %v3281 = vpop.f32.mrf.mxu0
        %v3282 = vadd.f32 %v3248, %v3281
        %v3283 = vpop.f32.mrf.mxu0
        %v3284 = vadd.f32 %v3250, %v3283
        %3285 = vmatmul.bf16.gmra.mxu0 %v2995
        %v3286 = vpop.f32.mrf.mxu0
        %v3287 = vadd.f32 %v3253, %v3286
        %v3288 = vpop.f32.mrf.mxu0
        %v3289 = vadd.f32 %v3255, %v3288
        %3290 = vdwg.mxu0
        %3291 = vmatpush.bf16.msra.mxu0 0
        %3292 = vmatpush.bf16.msra.mxu0 0
        %3293 = vmatpush.bf16.msra.mxu0 0
        %3294 = vmatpush.bf16.msra.mxu0 0
        %3295 = vmatpush.bf16.msra.mxu0 0
        %3296 = vmatpush.bf16.msra.mxu0 0
        %3297 = vmatpush.bf16.msra.mxu0 0
        %3298 = vmatpush.bf16.msra.mxu0 %v3218
        %3299 = vmatmul.bf16.gmra.mxu0 %v3202
        %v3300 = vpop.f32.mrf.mxu0
        %v3301 = vadd.f32 %v3267, %v3300
        %v3302 = vpop.f32.mrf.mxu0
        %v3303 = vadd.f32 %v3269, %v3302
        %3304 = vmatmul.bf16.gmra.mxu0 %v3205
        %v3305 = vpop.f32.mrf.mxu0
        %v3306 = vadd.f32 %v3272, %v3305
        %v3307 = vpop.f32.mrf.mxu0
        %v3308 = vadd.f32 %v3274, %v3307
        %3309 = vmatmul.bf16.gmra.mxu0 %v3208
        %v3310 = vpop.f32.mrf.mxu0
        %v3311 = vadd.f32 %v3277, %v3310
        %v3312 = vpop.f32.mrf.mxu0
        %v3313 = vadd.f32 %v3279, %v3312
        %3314 = vmatmul.bf16.gmra.mxu0 %v3211
        %v3315 = vpop.f32.mrf.mxu0
        %v3316 = vadd.f32 %v3282, %v3315
        %v3317 = vpop.f32.mrf.mxu0
        %v3318 = vadd.f32 %v3284, %v3317
        %3319 = vmatmul.bf16.gmra.mxu0 %v3214
        %v3320 = vpop.f32.mrf.mxu0
        %v3321 = vadd.f32 %v3287, %v3320
        %v3322 = vpop.f32.mrf.mxu0
        %v3323 = vadd.f32 %v3289, %v3322
        %3324 = vdwg.mxu0
        %3325 = vmatpush.bf16.msra.mxu0 %v3149
        %3326 = vmatpush.bf16.msra.mxu0 %v3147
        %3327 = vmatpush.bf16.msra.mxu0 %v3145
        %3328 = vmatpush.bf16.msra.mxu0 %v3143
        %3329 = vmatpush.bf16.msra.mxu0 %v3141
        %3330 = vmatpush.bf16.msra.mxu0 %v3139
        %3331 = vmatpush.bf16.msra.mxu0 %v3137
        %3332 = vmatpush.bf16.msra.mxu0 %v3135
        %3333 = vmatmul.bf16.gmra.mxu0 %v2982
        %v3334 = vpop.f32.mrf.mxu0
        %v3335 = vadd.f32 0.0, %v3334
        %v3336 = vpop.f32.mrf.mxu0
        %v3337 = vadd.f32 0.0, %v3336
        %3338 = vmatmul.bf16.gmra.mxu0 %v2985
        %v3339 = vpop.f32.mrf.mxu0
        %v3340 = vadd.f32 0.0, %v3339
        %v3341 = vpop.f32.mrf.mxu0
        %v3342 = vadd.f32 0.0, %v3341
        %3343 = vmatmul.bf16.gmra.mxu0 %v2988
        %v3344 = vpop.f32.mrf.mxu0
        %v3345 = vadd.f32 0.0, %v3344
        %v3346 = vpop.f32.mrf.mxu0
        %v3347 = vadd.f32 0.0, %v3346
        %3348 = vmatmul.bf16.gmra.mxu0 %v2991
        %v3349 = vpop.f32.mrf.mxu0
        %v3350 = vadd.f32 0.0, %v3349
        %v3351 = vpop.f32.mrf.mxu0
        %v3352 = vadd.f32 0.0, %v3351
        %3353 = vmatmul.bf16.gmra.mxu0 %v2994
        %v3354 = vpop.f32.mrf.mxu0
        %v3355 = vadd.f32 0.0, %v3354
        %v3356 = vpop.f32.mrf.mxu0
        %v3357 = vadd.f32 0.0, %v3356
        %3358 = vdwg.mxu0
        %3359 = vmatpush.bf16.msra.mxu0 %v3165
        %3360 = vmatpush.bf16.msra.mxu0 %v3163
        %3361 = vmatpush.bf16.msra.mxu0 %v3161
        %3362 = vmatpush.bf16.msra.mxu0 %v3159
        %3363 = vmatpush.bf16.msra.mxu0 %v3157
        %3364 = vmatpush.bf16.msra.mxu0 %v3155
        %3365 = vmatpush.bf16.msra.mxu0 %v3153
        %3366 = vmatpush.bf16.msra.mxu0 %v3151
        %3367 = vmatmul.bf16.gmra.mxu0 %v2983
        %v3368 = vpop.f32.mrf.mxu0
        %v3369 = vadd.f32 %v3335, %v3368
        %v3370 = vpop.f32.mrf.mxu0
        %v3371 = vadd.f32 %v3337, %v3370
        %3372 = vmatmul.bf16.gmra.mxu0 %v2986
        %v3373 = vpop.f32.mrf.mxu0
        %v3374 = vadd.f32 %v3340, %v3373
        %v3375 = vpop.f32.mrf.mxu0
        %v3376 = vadd.f32 %v3342, %v3375
        %3377 = vmatmul.bf16.gmra.mxu0 %v2989
        %v3378 = vpop.f32.mrf.mxu0
        %v3379 = vadd.f32 %v3345, %v3378
        %v3380 = vpop.f32.mrf.mxu0
        %v3381 = vadd.f32 %v3347, %v3380
        %3382 = vmatmul.bf16.gmra.mxu0 %v2992
        %v3383 = vpop.f32.mrf.mxu0
        %v3384 = vadd.f32 %v3350, %v3383
        %v3385 = vpop.f32.mrf.mxu0
        %v3386 = vadd.f32 %v3352, %v3385
        %3387 = vmatmul.bf16.gmra.mxu0 %v2995
        %v3388 = vpop.f32.mrf.mxu0
        %v3389 = vadd.f32 %v3355, %v3388
        %v3390 = vpop.f32.mrf.mxu0
        %v3391 = vadd.f32 %v3357, %v3390
        %3392 = vdwg.mxu0
        %3393 = vmatpush.bf16.msra.mxu0 0
        %3394 = vmatpush.bf16.msra.mxu0 0
        %3395 = vmatpush.bf16.msra.mxu0 0
        %3396 = vmatpush.bf16.msra.mxu0 0
        %3397 = vmatpush.bf16.msra.mxu0 0
        %3398 = vmatpush.bf16.msra.mxu0 0
        %3399 = vmatpush.bf16.msra.mxu0 0
        %3400 = vmatpush.bf16.msra.mxu0 %v3221
        %3401 = vmatmul.bf16.gmra.mxu0 %v3202
        %v3402 = vpop.f32.mrf.mxu0
        %v3403 = vadd.f32 %v3369, %v3402
        %v3404 = vpop.f32.mrf.mxu0
        %v3405 = vadd.f32 %v3371, %v3404
        %3406 = vmatmul.bf16.gmra.mxu0 %v3205
        %v3407 = vpop.f32.mrf.mxu0
        %v3408 = vadd.f32 %v3374, %v3407
        %v3409 = vpop.f32.mrf.mxu0
        %v3410 = vadd.f32 %v3376, %v3409
        %3411 = vmatmul.bf16.gmra.mxu0 %v3208
        %v3412 = vpop.f32.mrf.mxu0
        %v3413 = vadd.f32 %v3379, %v3412
        %v3414 = vpop.f32.mrf.mxu0
        %v3415 = vadd.f32 %v3381, %v3414
        %3416 = vmatmul.bf16.gmra.mxu0 %v3211
        %v3417 = vpop.f32.mrf.mxu0
        %v3418 = vadd.f32 %v3384, %v3417
        %v3419 = vpop.f32.mrf.mxu0
        %v3420 = vadd.f32 %v3386, %v3419
        %3421 = vmatmul.bf16.gmra.mxu0 %v3214
        %v3422 = vpop.f32.mrf.mxu0
        %v3423 = vadd.f32 %v3389, %v3422
        %v3424 = vpop.f32.mrf.mxu0
        %v3425 = vadd.f32 %v3391, %v3424
        %3426 = vdwg.mxu0
        %v3461 = vunpack.c.l.b16 %v2948
        %v3462 = vunpack.c.h.b16 %v2948
        %v3463 = vunpack.c.l.b16 %v2949
        %v3464 = vunpack.c.h.b16 %v2949
        %v3465 = vunpack.c.l.b16 %v2950
        %v3466 = vunpack.c.h.b16 %v2950
        %v3467 = vunpack.c.l.b16 %v2951
        %v3468 = vunpack.c.h.b16 %v2951
        %v3469 = vunpack.c.l.b16 %v2952
        %v3470 = vunpack.c.h.b16 %v2952
        %v3471 = vunpack.c.l.b16 %v2953
        %v3472 = vunpack.c.h.b16 %v2953
        %v3473 = vunpack.c.l.b16 %v2954
        %v3474 = vunpack.c.h.b16 %v2954
        %v3475 = vunpack.c.l.b16 %v2955
        %v3476 = vunpack.c.h.b16 %v2955
        %v3477 = vunpack.c.l.b16 %v2956
        %v3478 = vunpack.c.h.b16 %v2956
        %v3479 = vunpack.c.l.b16 %v2957
        %v3480 = vunpack.c.h.b16 %v2957
        %v3481 = vunpack.c.l.b16 %v2958
        %v3482 = vunpack.c.h.b16 %v2958
        %v3483 = vunpack.c.l.b16 %v2959
        %v3484 = vunpack.c.h.b16 %v2959
        %v3485 = vunpack.c.l.b16 %v2960
        %v3486 = vunpack.c.h.b16 %v2960
        %v3487 = vunpack.c.l.b16 %v2961
        %v3488 = vunpack.c.h.b16 %v2961
        %v3489 = vunpack.c.l.b16 %v2962
        %v3490 = vunpack.c.h.b16 %v2962
        %v3491 = vunpack.c.l.b16 %v2963
        %v3492 = vunpack.c.h.b16 %v2963
        %v3493 = vunpack.c.l.b16 %v2964
        %v3494 = vunpack.c.h.b16 %v2964
        %v3495 = vunpack.c.l.b16 %v2965
        %v3496 = vunpack.c.h.b16 %v2965
        %v3497 = vunpack.c.l.b16 %v2966
        %v3498 = vunpack.c.h.b16 %v2966
        %v3499 = vunpack.c.l.b16 %v2967
        %v3500 = vunpack.c.h.b16 %v2967
        %v3501 = vunpack.c.l.b16 %v2968
        %v3502 = vunpack.c.h.b16 %v2968
        %v3503 = vunpack.c.l.b16 %v2969
        %v3504 = vunpack.c.h.b16 %v2969
        %v3505 = vunpack.c.l.b16 %v2970
        %v3506 = vunpack.c.h.b16 %v2970
        %v3507 = vunpack.c.l.b16 %v2971
        %v3508 = vunpack.c.h.b16 %v2971
        %v3509 = vunpack.c.l.b16 %v2972
        %v3510 = vunpack.c.h.b16 %v2972
        %v3511 = vunpack.c.l.b16 %v2973
        %v3512 = vunpack.c.h.b16 %v2973
        %v3513 = vunpack.c.l.b16 %v2974
        %v3514 = vunpack.c.h.b16 %v2974
        %v3515 = vunpack.c.l.b16 %v2975
        %v3516 = vunpack.c.h.b16 %v2975
        %v3517 = vunpack.c.l.b16 %v2976
        %v3518 = vunpack.c.h.b16 %v2976
        %v3519 = vunpack.c.l.b16 %v2977
        %v3520 = vunpack.c.h.b16 %v2977
        %v3521 = vunpack.c.l.b16 %v2978
        %v3522 = vunpack.c.h.b16 %v2978
        %v3523 = vunpack.c.l.b16 %v2979
        %v3524 = vunpack.c.h.b16 %v2979
        %v3525 = vunpack.c.l.b16 %v2980
        %v3526 = vunpack.c.h.b16 %v2980
        %v3527 = vunpack.c.l.b16 %v2981
        %v3528 = vunpack.c.h.b16 %v2981
        %v3529 = vpack.c.b16 %v3463, %v3461
        %v3530 = vpack.c.b16 %v3464, %v3462
        %v3531 = vpack.c.b16 %v3467, %v3465
        %v3532 = vpack.c.b16 %v3468, %v3466
        %v3533 = vpack.c.b16 %v3471, %v3469
        %v3534 = vpack.c.b16 %v3472, %v3470
        %v3535 = vpack.c.b16 %v3475, %v3473
        %v3536 = vpack.c.b16 %v3476, %v3474
        %v3537 = vpack.c.b16 %v3479, %v3477
        %v3538 = vpack.c.b16 %v3480, %v3478
        %v3539 = vpack.c.b16 %v3483, %v3481
        %v3540 = vpack.c.b16 %v3484, %v3482
        %v3541 = vpack.c.b16 %v3487, %v3485
        %v3542 = vpack.c.b16 %v3488, %v3486
        %v3543 = vpack.c.b16 %v3491, %v3489
        %v3544 = vpack.c.b16 %v3492, %v3490
        %v3545 = vpack.c.b16 %v3495, %v3493
        %v3546 = vpack.c.b16 %v3496, %v3494
        %v3547 = vpack.c.b16 %v3499, %v3497
        %v3548 = vpack.c.b16 %v3500, %v3498
        %v3549 = vpack.c.b16 %v3503, %v3501
        %v3550 = vpack.c.b16 %v3504, %v3502
        %v3551 = vpack.c.b16 %v3507, %v3505
        %v3552 = vpack.c.b16 %v3508, %v3506
        %v3553 = vpack.c.b16 %v3511, %v3509
        %v3554 = vpack.c.b16 %v3512, %v3510
        %v3555 = vpack.c.b16 %v3515, %v3513
        %v3556 = vpack.c.b16 %v3516, %v3514
        %v3557 = vpack.c.b16 %v3519, %v3517
        %v3558 = vpack.c.b16 %v3520, %v3518
        %v3559 = vpack.c.b16 %v3523, %v3521
        %v3560 = vpack.c.b16 %v3524, %v3522
        %v3561 = vpack.c.b16 %v3527, %v3525
        %v3562 = vpack.c.b16 %v3528, %v3526
        %v3596 = vsel %vm3200, %v2935, 0
        %v3599 = vsel %vm3200, %v2938, 0
        %v3602 = vsel %vm3200, %v2941, 0
        %v3605 = vsel %vm3200, %v2944, 0
        %v3608 = vsel %vm3200, %v2947, 0
        %v3611 = vsel %vm3216, %v3561, 0
        %v3614 = vsel %vm3216, %v3562, 0
        %3616 = vmatpush.bf16.msra.mxu0 %v3543
        %3617 = vmatpush.bf16.msra.mxu0 %v3541
        %3618 = vmatpush.bf16.msra.mxu0 %v3539
        %3619 = vmatpush.bf16.msra.mxu0 %v3537
        %3620 = vmatpush.bf16.msra.mxu0 %v3535
        %3621 = vmatpush.bf16.msra.mxu0 %v3533
        %3622 = vmatpush.bf16.msra.mxu0 %v3531
        %3623 = vmatpush.bf16.msra.mxu0 %v3529
        %3624 = vmatmul.bf16.gmra.mxu0 %v2933
        %v3625 = vpop.f32.mrf.mxu0
        %v3626 = vadd.f32 %v3301, %v3625
        %v3627 = vpop.f32.mrf.mxu0
        %v3628 = vadd.f32 %v3303, %v3627
        %3629 = vmatmul.bf16.gmra.mxu0 %v2936
        %v3630 = vpop.f32.mrf.mxu0
        %v3631 = vadd.f32 %v3306, %v3630
        %v3632 = vpop.f32.mrf.mxu0
        %v3633 = vadd.f32 %v3308, %v3632
        %3634 = vmatmul.bf16.gmra.mxu0 %v2939
        %v3635 = vpop.f32.mrf.mxu0
        %v3636 = vadd.f32 %v3311, %v3635
        %v3637 = vpop.f32.mrf.mxu0
        %v3638 = vadd.f32 %v3313, %v3637
        %3639 = vmatmul.bf16.gmra.mxu0 %v2942
        %v3640 = vpop.f32.mrf.mxu0
        %v3641 = vadd.f32 %v3316, %v3640
        %v3642 = vpop.f32.mrf.mxu0
        %v3643 = vadd.f32 %v3318, %v3642
        %3644 = vmatmul.bf16.gmra.mxu0 %v2945
        %v3645 = vpop.f32.mrf.mxu0
        %v3646 = vadd.f32 %v3321, %v3645
        %v3647 = vpop.f32.mrf.mxu0
        %v3648 = vadd.f32 %v3323, %v3647
        %3649 = vdwg.mxu0
        %3650 = vmatpush.bf16.msra.mxu0 %v3559
        %3651 = vmatpush.bf16.msra.mxu0 %v3557
        %3652 = vmatpush.bf16.msra.mxu0 %v3555
        %3653 = vmatpush.bf16.msra.mxu0 %v3553
        %3654 = vmatpush.bf16.msra.mxu0 %v3551
        %3655 = vmatpush.bf16.msra.mxu0 %v3549
        %3656 = vmatpush.bf16.msra.mxu0 %v3547
        %3657 = vmatpush.bf16.msra.mxu0 %v3545
        %3658 = vmatmul.bf16.gmra.mxu0 %v2934
        %v3659 = vpop.f32.mrf.mxu0
        %v3660 = vadd.f32 %v3626, %v3659
        %v3661 = vpop.f32.mrf.mxu0
        %v3662 = vadd.f32 %v3628, %v3661
        %3663 = vmatmul.bf16.gmra.mxu0 %v2937
        %v3664 = vpop.f32.mrf.mxu0
        %v3665 = vadd.f32 %v3631, %v3664
        %v3666 = vpop.f32.mrf.mxu0
        %v3667 = vadd.f32 %v3633, %v3666
        %3668 = vmatmul.bf16.gmra.mxu0 %v2940
        %v3669 = vpop.f32.mrf.mxu0
        %v3670 = vadd.f32 %v3636, %v3669
        %v3671 = vpop.f32.mrf.mxu0
        %v3672 = vadd.f32 %v3638, %v3671
        %3673 = vmatmul.bf16.gmra.mxu0 %v2943
        %v3674 = vpop.f32.mrf.mxu0
        %v3675 = vadd.f32 %v3641, %v3674
        %v3676 = vpop.f32.mrf.mxu0
        %v3677 = vadd.f32 %v3643, %v3676
        %3678 = vmatmul.bf16.gmra.mxu0 %v2946
        %v3679 = vpop.f32.mrf.mxu0
        %v3680 = vadd.f32 %v3646, %v3679
        %v3681 = vpop.f32.mrf.mxu0
        %v3682 = vadd.f32 %v3648, %v3681
        %3683 = vdwg.mxu0
        %3684 = vmatpush.bf16.msra.mxu0 0
        %3685 = vmatpush.bf16.msra.mxu0 0
        %3686 = vmatpush.bf16.msra.mxu0 0
        %3687 = vmatpush.bf16.msra.mxu0 0
        %3688 = vmatpush.bf16.msra.mxu0 0
        %3689 = vmatpush.bf16.msra.mxu0 0
        %3690 = vmatpush.bf16.msra.mxu0 0
        %3691 = vmatpush.bf16.msra.mxu0 %v3611
        %3692 = vmatmul.bf16.gmra.mxu0 %v3596
        %v3693 = vpop.f32.mrf.mxu0
        %v3694 = vadd.f32 %v3660, %v3693
        %v3695 = vpop.f32.mrf.mxu0
        %v3696 = vadd.f32 %v3662, %v3695
        %3697 = vmatmul.bf16.gmra.mxu0 %v3599
        %v3698 = vpop.f32.mrf.mxu0
        %v3699 = vadd.f32 %v3665, %v3698
        %v3700 = vpop.f32.mrf.mxu0
        %v3701 = vadd.f32 %v3667, %v3700
        %3702 = vmatmul.bf16.gmra.mxu0 %v3602
        %v3703 = vpop.f32.mrf.mxu0
        %v3704 = vadd.f32 %v3670, %v3703
        %v3705 = vpop.f32.mrf.mxu0
        %v3706 = vadd.f32 %v3672, %v3705
        %3707 = vmatmul.bf16.gmra.mxu0 %v3605
        %v3708 = vpop.f32.mrf.mxu0
        %v3709 = vadd.f32 %v3675, %v3708
        %v3710 = vpop.f32.mrf.mxu0
        %v3711 = vadd.f32 %v3677, %v3710
        %3712 = vmatmul.bf16.gmra.mxu0 %v3608
        %v3713 = vpop.f32.mrf.mxu0
        %v3714 = vadd.f32 %v3680, %v3713
        %v3715 = vpop.f32.mrf.mxu0
        %v3716 = vadd.f32 %v3682, %v3715
        %3717 = vdwg.mxu0
        %3718 = vmatpush.bf16.msra.mxu0 %v3544
        %3719 = vmatpush.bf16.msra.mxu0 %v3542
        %3720 = vmatpush.bf16.msra.mxu0 %v3540
        %3721 = vmatpush.bf16.msra.mxu0 %v3538
        %3722 = vmatpush.bf16.msra.mxu0 %v3536
        %3723 = vmatpush.bf16.msra.mxu0 %v3534
        %3724 = vmatpush.bf16.msra.mxu0 %v3532
        %3725 = vmatpush.bf16.msra.mxu0 %v3530
        %3726 = vmatmul.bf16.gmra.mxu0 %v2933
        %v3727 = vpop.f32.mrf.mxu0
        %v3728 = vadd.f32 %v3403, %v3727
        %v3729 = vpop.f32.mrf.mxu0
        %v3730 = vadd.f32 %v3405, %v3729
        %3731 = vmatmul.bf16.gmra.mxu0 %v2936
        %v3732 = vpop.f32.mrf.mxu0
        %v3733 = vadd.f32 %v3408, %v3732
        %v3734 = vpop.f32.mrf.mxu0
        %v3735 = vadd.f32 %v3410, %v3734
        %3736 = vmatmul.bf16.gmra.mxu0 %v2939
        %v3737 = vpop.f32.mrf.mxu0
        %v3738 = vadd.f32 %v3413, %v3737
        %v3739 = vpop.f32.mrf.mxu0
        %v3740 = vadd.f32 %v3415, %v3739
        %3741 = vmatmul.bf16.gmra.mxu0 %v2942
        %v3742 = vpop.f32.mrf.mxu0
        %v3743 = vadd.f32 %v3418, %v3742
        %v3744 = vpop.f32.mrf.mxu0
        %v3745 = vadd.f32 %v3420, %v3744
        %3746 = vmatmul.bf16.gmra.mxu0 %v2945
        %v3747 = vpop.f32.mrf.mxu0
        %v3748 = vadd.f32 %v3423, %v3747
        %v3749 = vpop.f32.mrf.mxu0
        %v3750 = vadd.f32 %v3425, %v3749
        %3751 = vdwg.mxu0
        %3752 = vmatpush.bf16.msra.mxu0 %v3560
        %3753 = vmatpush.bf16.msra.mxu0 %v3558
        %3754 = vmatpush.bf16.msra.mxu0 %v3556
        %3755 = vmatpush.bf16.msra.mxu0 %v3554
        %3756 = vmatpush.bf16.msra.mxu0 %v3552
        %3757 = vmatpush.bf16.msra.mxu0 %v3550
        %3758 = vmatpush.bf16.msra.mxu0 %v3548
        %3759 = vmatpush.bf16.msra.mxu0 %v3546
        %3760 = vmatmul.bf16.gmra.mxu0 %v2934
        %v3761 = vpop.f32.mrf.mxu0
        %v3762 = vadd.f32 %v3728, %v3761
        %v3763 = vpop.f32.mrf.mxu0
        %v3764 = vadd.f32 %v3730, %v3763
        %3765 = vmatmul.bf16.gmra.mxu0 %v2937
        %v3766 = vpop.f32.mrf.mxu0
        %v3767 = vadd.f32 %v3733, %v3766
        %v3768 = vpop.f32.mrf.mxu0
        %v3769 = vadd.f32 %v3735, %v3768
        %3770 = vmatmul.bf16.gmra.mxu0 %v2940
        %v3771 = vpop.f32.mrf.mxu0
        %v3772 = vadd.f32 %v3738, %v3771
        %v3773 = vpop.f32.mrf.mxu0
        %v3774 = vadd.f32 %v3740, %v3773
        %3775 = vmatmul.bf16.gmra.mxu0 %v2943
        %v3776 = vpop.f32.mrf.mxu0
        %v3777 = vadd.f32 %v3743, %v3776
        %v3778 = vpop.f32.mrf.mxu0
        %v3779 = vadd.f32 %v3745, %v3778
        %3780 = vmatmul.bf16.gmra.mxu0 %v2946
        %v3781 = vpop.f32.mrf.mxu0
        %v3782 = vadd.f32 %v3748, %v3781
        %v3783 = vpop.f32.mrf.mxu0
        %v3784 = vadd.f32 %v3750, %v3783
        %3785 = vdwg.mxu0
        %3786 = vmatpush.bf16.msra.mxu0 0
        %3787 = vmatpush.bf16.msra.mxu0 0
        %3788 = vmatpush.bf16.msra.mxu0 0
        %3789 = vmatpush.bf16.msra.mxu0 0
        %3790 = vmatpush.bf16.msra.mxu0 0
        %3791 = vmatpush.bf16.msra.mxu0 0
        %3792 = vmatpush.bf16.msra.mxu0 0
        %3793 = vmatpush.bf16.msra.mxu0 %v3614
        %3794 = vmatmul.bf16.gmra.mxu0 %v3596
        %v3795 = vpop.f32.mrf.mxu0
        %v3796 = vadd.f32 %v3762, %v3795
        %v3797 = vpop.f32.mrf.mxu0
        %v3798 = vadd.f32 %v3764, %v3797
        %3799 = vmatmul.bf16.gmra.mxu0 %v3599
        %v3800 = vpop.f32.mrf.mxu0
        %v3801 = vadd.f32 %v3767, %v3800
        %v3802 = vpop.f32.mrf.mxu0
        %v3803 = vadd.f32 %v3769, %v3802
        %3804 = vmatmul.bf16.gmra.mxu0 %v3602
        %v3805 = vpop.f32.mrf.mxu0
        %v3806 = vadd.f32 %v3772, %v3805
        %v3807 = vpop.f32.mrf.mxu0
        %v3808 = vadd.f32 %v3774, %v3807
        %3809 = vmatmul.bf16.gmra.mxu0 %v3605
        %v3810 = vpop.f32.mrf.mxu0
        %v3811 = vadd.f32 %v3777, %v3810
        %v3812 = vpop.f32.mrf.mxu0
        %v3813 = vadd.f32 %v3779, %v3812
        %3814 = vmatmul.bf16.gmra.mxu0 %v3608
        %v3815 = vpop.f32.mrf.mxu0
        %v3816 = vadd.f32 %v3782, %v3815
        %v3817 = vpop.f32.mrf.mxu0
        %v3818 = vadd.f32 %v3784, %v3817
        %3819 = vdwg.mxu0
        %v3820 = vpack.c.bf16 %v2924, %v2921
        %v3821 = vpack.c.bf16 %v2925, %v2922
        %v3822 = vpack.c.bf16 %v2926, %v2923
        %s3823 = scalar_lea.vmem %s2, 544
        %v3824 = vld [vmem:[%s3823] sm:$0xff]
        %v3825 = vld [vmem:[%s3823 + $0x8] sm:$0xff]
        %v3826 = vld [vmem:[%s3823 + $0x10] sm:$0xff]
        %v3827 = vld [vmem:[%s3823 + $0x18] sm:$0xff]
        %v3828 = vld [vmem:[%s3823 + $0x20] sm:$0xff]
        %v3829 = vld [vmem:[%s3823 + $0x28] sm:$0xff]
        %v3830 = vld [vmem:[%s3823 + $0x30] sm:$0xff]
        %v3831 = vld [vmem:[%s3823 + $0x38] sm:$0xff]
        %v3832 = vld [vmem:[%s3823 + $0x40] sm:$0xff]
        %v3833 = vld [vmem:[%s3823 + $0x48] sm:$0xff]
        %v3834 = vld [vmem:[%s3823 + $0x50] sm:$0xff]
        %v3835 = vld [vmem:[%s3823 + $0x58] sm:$0xff]
        %v3836 = vld [vmem:[%s3823 + $0x60] sm:$0xff]
        %v3837 = vld [vmem:[%s3823 + $0x68] sm:$0xff]
        %v3838 = vld [vmem:[%s3823 + $0x70] sm:$0xff]
        %v3839 = vld [vmem:[%s3823 + $0x78] sm:$0xff]
        %v3840 = vld [vmem:[%s3823 + $0x80] sm:$0xff]
        %v3841 = vld [vmem:[%s3823 + $0x88] sm:$0xff]
        %v3842 = vld [vmem:[%s3823 + $0x90] sm:$0xff]
        %v3843 = vld [vmem:[%s3823 + $0x98] sm:$0xff]
        %v3844 = vld [vmem:[%s3823 + $0xa0] sm:$0xff]
        %v3845 = vld [vmem:[%s3823 + $0xa8] sm:$0xff]
        %v3846 = vld [vmem:[%s3823 + $0xb0] sm:$0xff]
        %v3847 = vld [vmem:[%s3823 + $0xb8] sm:$0xff]
        %v3848 = vld [vmem:[%s3823 + $0xc0] sm:$0xff]
        %v3849 = vld [vmem:[%s3823 + $0xc8] sm:$0xff]
        %v3850 = vld [vmem:[%s3823 + $0xd0] sm:$0xff]
        %v3851 = vld [vmem:[%s3823 + $0xd8] sm:$0xff]
        %v3852 = vld [vmem:[%s3823 + $0xe0] sm:$0xff]
        %v3853 = vld [vmem:[%s3823 + $0xe8] sm:$0xff]
        %v3854 = vld [vmem:[%s3823 + $0xf0] sm:$0xff]
        %v3855 = vld [vmem:[%s3823 + $0xf8] sm:$0xff]
        %v3856 = vld [vmem:[%s3823 + $0x100] sm:$0xff]
        %v3857 = vld [vmem:[%s3823 + $0x108] sm:$0x77]
        %v3892 = vunpack.c.l.b16 %v3824
        %v3893 = vunpack.c.h.b16 %v3824
        %v3894 = vunpack.c.l.b16 %v3825
        %v3895 = vunpack.c.h.b16 %v3825
        %v3896 = vunpack.c.l.b16 %v3826
        %v3897 = vunpack.c.h.b16 %v3826
        %v3898 = vunpack.c.l.b16 %v3827
        %v3899 = vunpack.c.h.b16 %v3827
        %v3900 = vunpack.c.l.b16 %v3828
        %v3901 = vunpack.c.h.b16 %v3828
        %v3902 = vunpack.c.l.b16 %v3829
        %v3903 = vunpack.c.h.b16 %v3829
        %v3904 = vunpack.c.l.b16 %v3830
        %v3905 = vunpack.c.h.b16 %v3830
        %v3906 = vunpack.c.l.b16 %v3831
        %v3907 = vunpack.c.h.b16 %v3831
        %v3908 = vunpack.c.l.b16 %v3832
        %v3909 = vunpack.c.h.b16 %v3832
        %v3910 = vunpack.c.l.b16 %v3833
        %v3911 = vunpack.c.h.b16 %v3833
        %v3912 = vunpack.c.l.b16 %v3834
        %v3913 = vunpack.c.h.b16 %v3834
        %v3914 = vunpack.c.l.b16 %v3835
        %v3915 = vunpack.c.h.b16 %v3835
        %v3916 = vunpack.c.l.b16 %v3836
        %v3917 = vunpack.c.h.b16 %v3836
        %v3918 = vunpack.c.l.b16 %v3837
        %v3919 = vunpack.c.h.b16 %v3837
        %v3920 = vunpack.c.l.b16 %v3838
        %v3921 = vunpack.c.h.b16 %v3838
        %v3922 = vunpack.c.l.b16 %v3839
        %v3923 = vunpack.c.h.b16 %v3839
        %v3924 = vunpack.c.l.b16 %v3840
        %v3925 = vunpack.c.h.b16 %v3840
        %v3926 = vunpack.c.l.b16 %v3841
        %v3927 = vunpack.c.h.b16 %v3841
        %v3928 = vunpack.c.l.b16 %v3842
        %v3929 = vunpack.c.h.b16 %v3842
        %v3930 = vunpack.c.l.b16 %v3843
        %v3931 = vunpack.c.h.b16 %v3843
        %v3932 = vunpack.c.l.b16 %v3844
        %v3933 = vunpack.c.h.b16 %v3844
        %v3934 = vunpack.c.l.b16 %v3845
        %v3935 = vunpack.c.h.b16 %v3845
        %v3936 = vunpack.c.l.b16 %v3846
        %v3937 = vunpack.c.h.b16 %v3846
        %v3938 = vunpack.c.l.b16 %v3847
        %v3939 = vunpack.c.h.b16 %v3847
        %v3940 = vunpack.c.l.b16 %v3848
        %v3941 = vunpack.c.h.b16 %v3848
        %v3942 = vunpack.c.l.b16 %v3849
        %v3943 = vunpack.c.h.b16 %v3849
        %v3944 = vunpack.c.l.b16 %v3850
        %v3945 = vunpack.c.h.b16 %v3850
        %v3946 = vunpack.c.l.b16 %v3851
        %v3947 = vunpack.c.h.b16 %v3851
        %v3948 = vunpack.c.l.b16 %v3852
        %v3949 = vunpack.c.h.b16 %v3852
        %v3950 = vunpack.c.l.b16 %v3853
        %v3951 = vunpack.c.h.b16 %v3853
        %v3952 = vunpack.c.l.b16 %v3854
        %v3953 = vunpack.c.h.b16 %v3854
        %v3954 = vunpack.c.l.b16 %v3855
        %v3955 = vunpack.c.h.b16 %v3855
        %v3956 = vunpack.c.l.b16 %v3856
        %v3957 = vunpack.c.h.b16 %v3856
        %v3958 = vunpack.c.l.b16 %v3857
        %v3959 = vunpack.c.h.b16 %v3857
        %v3960 = vpack.c.b16 %v3894, %v3892
        %v3961 = vpack.c.b16 %v3895, %v3893
        %v3962 = vpack.c.b16 %v3898, %v3896
        %v3963 = vpack.c.b16 %v3899, %v3897
        %v3964 = vpack.c.b16 %v3902, %v3900
        %v3965 = vpack.c.b16 %v3903, %v3901
        %v3966 = vpack.c.b16 %v3906, %v3904
        %v3967 = vpack.c.b16 %v3907, %v3905
        %v3968 = vpack.c.b16 %v3910, %v3908
        %v3969 = vpack.c.b16 %v3911, %v3909
        %v3970 = vpack.c.b16 %v3914, %v3912
        %v3971 = vpack.c.b16 %v3915, %v3913
        %v3972 = vpack.c.b16 %v3918, %v3916
        %v3973 = vpack.c.b16 %v3919, %v3917
        %v3974 = vpack.c.b16 %v3922, %v3920
        %v3975 = vpack.c.b16 %v3923, %v3921
        %v3976 = vpack.c.b16 %v3926, %v3924
        %v3977 = vpack.c.b16 %v3927, %v3925
        %v3978 = vpack.c.b16 %v3930, %v3928
        %v3979 = vpack.c.b16 %v3931, %v3929
        %v3980 = vpack.c.b16 %v3934, %v3932
        %v3981 = vpack.c.b16 %v3935, %v3933
        %v3982 = vpack.c.b16 %v3938, %v3936
        %v3983 = vpack.c.b16 %v3939, %v3937
        %v3984 = vpack.c.b16 %v3942, %v3940
        %v3985 = vpack.c.b16 %v3943, %v3941
        %v3986 = vpack.c.b16 %v3946, %v3944
        %v3987 = vpack.c.b16 %v3947, %v3945
        %v3988 = vpack.c.b16 %v3950, %v3948
        %v3989 = vpack.c.b16 %v3951, %v3949
        %v3990 = vpack.c.b16 %v3954, %v3952
        %v3991 = vpack.c.b16 %v3955, %v3953
        %v3992 = vpack.c.b16 %v3958, %v3956
        %v3993 = vpack.c.b16 %v3959, %v3957
        %v4027 = vsel %vm3200, %v3822, 0
        %v4030 = vsel %vm3216, %v3992, 0
        %v4033 = vsel %vm3216, %v3993, 0
        %4035 = vmatpush.bf16.msra.mxu0 %v3974
        %4036 = vmatpush.bf16.msra.mxu0 %v3972
        %4037 = vmatpush.bf16.msra.mxu0 %v3970
        %4038 = vmatpush.bf16.msra.mxu0 %v3968
        %4039 = vmatpush.bf16.msra.mxu0 %v3966
        %4040 = vmatpush.bf16.msra.mxu0 %v3964
        %4041 = vmatpush.bf16.msra.mxu0 %v3962
        %4042 = vmatpush.bf16.msra.mxu0 %v3960
        %4043 = vmatmul.bf16.gmra.mxu0 %v2936
        %v4044 = vpop.f32.mrf.mxu0
        %v4045 = vadd.f32 0.0, %v4044
        %v4046 = vpop.f32.mrf.mxu0
        %v4047 = vadd.f32 0.0, %v4046
        %4048 = vmatmul.bf16.gmra.mxu0 %v2939
        %v4049 = vpop.f32.mrf.mxu0
        %v4050 = vadd.f32 0.0, %v4049
        %v4051 = vpop.f32.mrf.mxu0
        %v4052 = vadd.f32 0.0, %v4051
        %4053 = vmatmul.bf16.gmra.mxu0 %v2942
        %v4054 = vpop.f32.mrf.mxu0
        %v4055 = vadd.f32 0.0, %v4054
        %v4056 = vpop.f32.mrf.mxu0
        %v4057 = vadd.f32 0.0, %v4056
        %4058 = vmatmul.bf16.gmra.mxu0 %v2945
        %v4059 = vpop.f32.mrf.mxu0
        %v4060 = vadd.f32 0.0, %v4059
        %v4061 = vpop.f32.mrf.mxu0
        %v4062 = vadd.f32 0.0, %v4061
        %4063 = vmatmul.bf16.gmra.mxu0 %v3820
        %v4064 = vpop.f32.mrf.mxu0
        %v4065 = vadd.f32 0.0, %v4064
        %v4066 = vpop.f32.mrf.mxu0
        %v4067 = vadd.f32 0.0, %v4066
        %4068 = vdwg.mxu0
        %4069 = vmatpush.bf16.msra.mxu0 %v3990
        %4070 = vmatpush.bf16.msra.mxu0 %v3988
        %4071 = vmatpush.bf16.msra.mxu0 %v3986
        %4072 = vmatpush.bf16.msra.mxu0 %v3984
        %4073 = vmatpush.bf16.msra.mxu0 %v3982
        %4074 = vmatpush.bf16.msra.mxu0 %v3980
        %4075 = vmatpush.bf16.msra.mxu0 %v3978
        %4076 = vmatpush.bf16.msra.mxu0 %v3976
        %4077 = vmatmul.bf16.gmra.mxu0 %v2937
        %v4078 = vpop.f32.mrf.mxu0
        %v4079 = vadd.f32 %v4045, %v4078
        %v4080 = vpop.f32.mrf.mxu0
        %v4081 = vadd.f32 %v4047, %v4080
        %4082 = vmatmul.bf16.gmra.mxu0 %v2940
        %v4083 = vpop.f32.mrf.mxu0
        %v4084 = vadd.f32 %v4050, %v4083
        %v4085 = vpop.f32.mrf.mxu0
        %v4086 = vadd.f32 %v4052, %v4085
        %4087 = vmatmul.bf16.gmra.mxu0 %v2943
        %v4088 = vpop.f32.mrf.mxu0
        %v4089 = vadd.f32 %v4055, %v4088
        %v4090 = vpop.f32.mrf.mxu0
        %v4091 = vadd.f32 %v4057, %v4090
        %4092 = vmatmul.bf16.gmra.mxu0 %v2946
        %v4093 = vpop.f32.mrf.mxu0
        %v4094 = vadd.f32 %v4060, %v4093
        %v4095 = vpop.f32.mrf.mxu0
        %v4096 = vadd.f32 %v4062, %v4095
        %4097 = vmatmul.bf16.gmra.mxu0 %v3821
        %v4098 = vpop.f32.mrf.mxu0
        %v4099 = vadd.f32 %v4065, %v4098
        %v4100 = vpop.f32.mrf.mxu0
        %v4101 = vadd.f32 %v4067, %v4100
        %4102 = vdwg.mxu0
        %4103 = vmatpush.bf16.msra.mxu0 0
        %4104 = vmatpush.bf16.msra.mxu0 0
        %4105 = vmatpush.bf16.msra.mxu0 0
        %4106 = vmatpush.bf16.msra.mxu0 0
        %4107 = vmatpush.bf16.msra.mxu0 0
        %4108 = vmatpush.bf16.msra.mxu0 0
        %4109 = vmatpush.bf16.msra.mxu0 0
        %4110 = vmatpush.bf16.msra.mxu0 %v4030
        %4111 = vmatmul.bf16.gmra.mxu0 %v3599
        %v4112 = vpop.f32.mrf.mxu0
        %v4113 = vadd.f32 %v4079, %v4112
        %v4114 = vpop.f32.mrf.mxu0
        %v4115 = vadd.f32 %v4081, %v4114
        %4116 = vmatmul.bf16.gmra.mxu0 %v3602
        %v4117 = vpop.f32.mrf.mxu0
        %v4118 = vadd.f32 %v4084, %v4117
        %v4119 = vpop.f32.mrf.mxu0
        %v4120 = vadd.f32 %v4086, %v4119
        %4121 = vmatmul.bf16.gmra.mxu0 %v3605
        %v4122 = vpop.f32.mrf.mxu0
        %v4123 = vadd.f32 %v4089, %v4122
        %v4124 = vpop.f32.mrf.mxu0
        %v4125 = vadd.f32 %v4091, %v4124
        %4126 = vmatmul.bf16.gmra.mxu0 %v3608
        %v4127 = vpop.f32.mrf.mxu0
        %v4128 = vadd.f32 %v4094, %v4127
        %v4129 = vpop.f32.mrf.mxu0
        %v4130 = vadd.f32 %v4096, %v4129
        %4131 = vmatmul.bf16.gmra.mxu0 %v4027
        %v4132 = vpop.f32.mrf.mxu0
        %v4133 = vadd.f32 %v4099, %v4132
        %v4134 = vpop.f32.mrf.mxu0
        %v4135 = vadd.f32 %v4101, %v4134
        %4136 = vdwg.mxu0
        %4137 = vmatpush.bf16.msra.mxu0 %v3975
        %4138 = vmatpush.bf16.msra.mxu0 %v3973
        %4139 = vmatpush.bf16.msra.mxu0 %v3971
        %4140 = vmatpush.bf16.msra.mxu0 %v3969
        %4141 = vmatpush.bf16.msra.mxu0 %v3967
        %4142 = vmatpush.bf16.msra.mxu0 %v3965
        %4143 = vmatpush.bf16.msra.mxu0 %v3963
        %4144 = vmatpush.bf16.msra.mxu0 %v3961
        %4145 = vmatmul.bf16.gmra.mxu0 %v2936
        %v4146 = vpop.f32.mrf.mxu0
        %v4147 = vadd.f32 0.0, %v4146
        %v4148 = vpop.f32.mrf.mxu0
        %v4149 = vadd.f32 0.0, %v4148
        %4150 = vmatmul.bf16.gmra.mxu0 %v2939
        %v4151 = vpop.f32.mrf.mxu0
        %v4152 = vadd.f32 0.0, %v4151
        %v4153 = vpop.f32.mrf.mxu0
        %v4154 = vadd.f32 0.0, %v4153
        %4155 = vmatmul.bf16.gmra.mxu0 %v2942
        %v4156 = vpop.f32.mrf.mxu0
        %v4157 = vadd.f32 0.0, %v4156
        %v4158 = vpop.f32.mrf.mxu0
        %v4159 = vadd.f32 0.0, %v4158
        %4160 = vmatmul.bf16.gmra.mxu0 %v2945
        %v4161 = vpop.f32.mrf.mxu0
        %v4162 = vadd.f32 0.0, %v4161
        %v4163 = vpop.f32.mrf.mxu0
        %v4164 = vadd.f32 0.0, %v4163
        %4165 = vmatmul.bf16.gmra.mxu0 %v3820
        %v4166 = vpop.f32.mrf.mxu0
        %v4167 = vadd.f32 0.0, %v4166
        %v4168 = vpop.f32.mrf.mxu0
        %v4169 = vadd.f32 0.0, %v4168
        %4170 = vdwg.mxu0
        %4171 = vmatpush.bf16.msra.mxu0 %v3991
        %4172 = vmatpush.bf16.msra.mxu0 %v3989
        %4173 = vmatpush.bf16.msra.mxu0 %v3987
        %4174 = vmatpush.bf16.msra.mxu0 %v3985
        %4175 = vmatpush.bf16.msra.mxu0 %v3983
        %4176 = vmatpush.bf16.msra.mxu0 %v3981
        %4177 = vmatpush.bf16.msra.mxu0 %v3979
        %4178 = vmatpush.bf16.msra.mxu0 %v3977
        %4179 = vmatmul.bf16.gmra.mxu0 %v2937
        %v4180 = vpop.f32.mrf.mxu0
        %v4181 = vadd.f32 %v4147, %v4180
        %v4182 = vpop.f32.mrf.mxu0
        %v4183 = vadd.f32 %v4149, %v4182
        %4184 = vmatmul.bf16.gmra.mxu0 %v2940
        %v4185 = vpop.f32.mrf.mxu0
        %v4186 = vadd.f32 %v4152, %v4185
        %v4187 = vpop.f32.mrf.mxu0
        %v4188 = vadd.f32 %v4154, %v4187
        %4189 = vmatmul.bf16.gmra.mxu0 %v2943
        %v4190 = vpop.f32.mrf.mxu0
        %v4191 = vadd.f32 %v4157, %v4190
        %v4192 = vpop.f32.mrf.mxu0
        %v4193 = vadd.f32 %v4159, %v4192
        %4194 = vmatmul.bf16.gmra.mxu0 %v2946
        %v4195 = vpop.f32.mrf.mxu0
        %v4196 = vadd.f32 %v4162, %v4195
        %v4197 = vpop.f32.mrf.mxu0
        %v4198 = vadd.f32 %v4164, %v4197
        %4199 = vmatmul.bf16.gmra.mxu0 %v3821
        %v4200 = vpop.f32.mrf.mxu0
        %v4201 = vadd.f32 %v4167, %v4200
        %v4202 = vpop.f32.mrf.mxu0
        %v4203 = vadd.f32 %v4169, %v4202
        %4204 = vdwg.mxu0
        %4205 = vmatpush.bf16.msra.mxu0 0
        %4206 = vmatpush.bf16.msra.mxu0 0
        %4207 = vmatpush.bf16.msra.mxu0 0
        %4208 = vmatpush.bf16.msra.mxu0 0
        %4209 = vmatpush.bf16.msra.mxu0 0
        %4210 = vmatpush.bf16.msra.mxu0 0
        %4211 = vmatpush.bf16.msra.mxu0 0
        %4212 = vmatpush.bf16.msra.mxu0 %v4033
        %4213 = vmatmul.bf16.gmra.mxu0 %v3599
        %v4214 = vpop.f32.mrf.mxu0
        %v4215 = vadd.f32 %v4181, %v4214
        %v4216 = vpop.f32.mrf.mxu0
        %v4217 = vadd.f32 %v4183, %v4216
        %4218 = vmatmul.bf16.gmra.mxu0 %v3602
        %v4219 = vpop.f32.mrf.mxu0
        %v4220 = vadd.f32 %v4186, %v4219
        %v4221 = vpop.f32.mrf.mxu0
        %v4222 = vadd.f32 %v4188, %v4221
        %4223 = vmatmul.bf16.gmra.mxu0 %v3605
        %v4224 = vpop.f32.mrf.mxu0
        %v4225 = vadd.f32 %v4191, %v4224
        %v4226 = vpop.f32.mrf.mxu0
        %v4227 = vadd.f32 %v4193, %v4226
        %4228 = vmatmul.bf16.gmra.mxu0 %v3608
        %v4229 = vpop.f32.mrf.mxu0
        %v4230 = vadd.f32 %v4196, %v4229
        %v4231 = vpop.f32.mrf.mxu0
        %v4232 = vadd.f32 %v4198, %v4231
        %4233 = vmatmul.bf16.gmra.mxu0 %v4027
        %v4234 = vpop.f32.mrf.mxu0
        %v4235 = vadd.f32 %v4201, %v4234
        %v4236 = vpop.f32.mrf.mxu0
        %v4237 = vadd.f32 %v4203, %v4236
        %4238 = vdwg.mxu0
        %v4239 = vadd.f32 %v3694, %v4113
        %v4240 = vadd.f32 %v3796, %v4215
        %v4241 = vadd.f32 %v3696, %v4115
        %v4242 = vadd.f32 %v3798, %v4217
        %v4243 = vadd.f32 %v3699, %v4118
        %v4244 = vadd.f32 %v3801, %v4220
        %v4245 = vadd.f32 %v3701, %v4120
        %v4246 = vadd.f32 %v3803, %v4222
        %v4247 = vadd.f32 %v3704, %v4123
        %v4248 = vadd.f32 %v3806, %v4225
        %v4249 = vadd.f32 %v3706, %v4125
        %v4250 = vadd.f32 %v3808, %v4227
        %v4251 = vadd.f32 %v3709, %v4128
        %v4252 = vadd.f32 %v3811, %v4230
        %v4253 = vadd.f32 %v3711, %v4130
        %v4254 = vadd.f32 %v3813, %v4232
        %v4255 = vadd.f32 %v3714, %v4133
        %v4256 = vadd.f32 %v3816, %v4235
        %v4257 = vadd.f32 %v3716, %v4135
        %v4258 = vadd.f32 %v3818, %v4237
        %v4259 = vpack.c.bf16 %v2927, %v2924
        %v4260 = vpack.c.bf16 %v2928, %v2925
        %v4261 = vpack.c.bf16 %v2929, %v2926
        %s4262 = scalar_lea.vmem %s2, 816
        %v4263 = vld [vmem:[%s4262] sm:$0xff]
        %v4264 = vld [vmem:[%s4262 + $0x8] sm:$0xff]
        %v4265 = vld [vmem:[%s4262 + $0x10] sm:$0xff]
        %v4266 = vld [vmem:[%s4262 + $0x18] sm:$0xff]
        %v4267 = vld [vmem:[%s4262 + $0x20] sm:$0xff]
        %v4268 = vld [vmem:[%s4262 + $0x28] sm:$0xff]
        %v4269 = vld [vmem:[%s4262 + $0x30] sm:$0xff]
        %v4270 = vld [vmem:[%s4262 + $0x38] sm:$0xff]
        %v4271 = vld [vmem:[%s4262 + $0x40] sm:$0xff]
        %v4272 = vld [vmem:[%s4262 + $0x48] sm:$0xff]
        %v4273 = vld [vmem:[%s4262 + $0x50] sm:$0xff]
        %v4274 = vld [vmem:[%s4262 + $0x58] sm:$0xff]
        %v4275 = vld [vmem:[%s4262 + $0x60] sm:$0xff]
        %v4276 = vld [vmem:[%s4262 + $0x68] sm:$0xff]
        %v4277 = vld [vmem:[%s4262 + $0x70] sm:$0xff]
        %v4278 = vld [vmem:[%s4262 + $0x78] sm:$0xff]
        %v4279 = vld [vmem:[%s4262 + $0x80] sm:$0xff]
        %v4280 = vld [vmem:[%s4262 + $0x88] sm:$0xff]
        %v4281 = vld [vmem:[%s4262 + $0x90] sm:$0xff]
        %v4282 = vld [vmem:[%s4262 + $0x98] sm:$0xff]
        %v4283 = vld [vmem:[%s4262 + $0xa0] sm:$0xff]
        %v4284 = vld [vmem:[%s4262 + $0xa8] sm:$0xff]
        %v4285 = vld [vmem:[%s4262 + $0xb0] sm:$0xff]
        %v4286 = vld [vmem:[%s4262 + $0xb8] sm:$0xff]
        %v4287 = vld [vmem:[%s4262 + $0xc0] sm:$0xff]
        %v4288 = vld [vmem:[%s4262 + $0xc8] sm:$0xff]
        %v4289 = vld [vmem:[%s4262 + $0xd0] sm:$0xff]
        %v4290 = vld [vmem:[%s4262 + $0xd8] sm:$0xff]
        %v4291 = vld [vmem:[%s4262 + $0xe0] sm:$0xff]
        %v4292 = vld [vmem:[%s4262 + $0xe8] sm:$0xff]
        %v4293 = vld [vmem:[%s4262 + $0xf0] sm:$0xff]
        %v4294 = vld [vmem:[%s4262 + $0xf8] sm:$0xff]
        %v4295 = vld [vmem:[%s4262 + $0x100] sm:$0xff]
        %v4296 = vld [vmem:[%s4262 + $0x108] sm:$0x77]
        %v4331 = vunpack.c.l.b16 %v4263
        %v4332 = vunpack.c.h.b16 %v4263
        %v4333 = vunpack.c.l.b16 %v4264
        %v4334 = vunpack.c.h.b16 %v4264
        %v4335 = vunpack.c.l.b16 %v4265
        %v4336 = vunpack.c.h.b16 %v4265
        %v4337 = vunpack.c.l.b16 %v4266
        %v4338 = vunpack.c.h.b16 %v4266
        %v4339 = vunpack.c.l.b16 %v4267
        %v4340 = vunpack.c.h.b16 %v4267
        %v4341 = vunpack.c.l.b16 %v4268
        %v4342 = vunpack.c.h.b16 %v4268
        %v4343 = vunpack.c.l.b16 %v4269
        %v4344 = vunpack.c.h.b16 %v4269
        %v4345 = vunpack.c.l.b16 %v4270
        %v4346 = vunpack.c.h.b16 %v4270
        %v4347 = vunpack.c.l.b16 %v4271
        %v4348 = vunpack.c.h.b16 %v4271
        %v4349 = vunpack.c.l.b16 %v4272
        %v4350 = vunpack.c.h.b16 %v4272
        %v4351 = vunpack.c.l.b16 %v4273
        %v4352 = vunpack.c.h.b16 %v4273
        %v4353 = vunpack.c.l.b16 %v4274
        %v4354 = vunpack.c.h.b16 %v4274
        %v4355 = vunpack.c.l.b16 %v4275
        %v4356 = vunpack.c.h.b16 %v4275
        %v4357 = vunpack.c.l.b16 %v4276
        %v4358 = vunpack.c.h.b16 %v4276
        %v4359 = vunpack.c.l.b16 %v4277
        %v4360 = vunpack.c.h.b16 %v4277
        %v4361 = vunpack.c.l.b16 %v4278
        %v4362 = vunpack.c.h.b16 %v4278
        %v4363 = vunpack.c.l.b16 %v4279
        %v4364 = vunpack.c.h.b16 %v4279
        %v4365 = vunpack.c.l.b16 %v4280
        %v4366 = vunpack.c.h.b16 %v4280
        %v4367 = vunpack.c.l.b16 %v4281
        %v4368 = vunpack.c.h.b16 %v4281
        %v4369 = vunpack.c.l.b16 %v4282
        %v4370 = vunpack.c.h.b16 %v4282
        %v4371 = vunpack.c.l.b16 %v4283
        %v4372 = vunpack.c.h.b16 %v4283
        %v4373 = vunpack.c.l.b16 %v4284
        %v4374 = vunpack.c.h.b16 %v4284
        %v4375 = vunpack.c.l.b16 %v4285
        %v4376 = vunpack.c.h.b16 %v4285
        %v4377 = vunpack.c.l.b16 %v4286
        %v4378 = vunpack.c.h.b16 %v4286
        %v4379 = vunpack.c.l.b16 %v4287
        %v4380 = vunpack.c.h.b16 %v4287
        %v4381 = vunpack.c.l.b16 %v4288
        %v4382 = vunpack.c.h.b16 %v4288
        %v4383 = vunpack.c.l.b16 %v4289
        %v4384 = vunpack.c.h.b16 %v4289
        %v4385 = vunpack.c.l.b16 %v4290
        %v4386 = vunpack.c.h.b16 %v4290
        %v4387 = vunpack.c.l.b16 %v4291
        %v4388 = vunpack.c.h.b16 %v4291
        %v4389 = vunpack.c.l.b16 %v4292
        %v4390 = vunpack.c.h.b16 %v4292
        %v4391 = vunpack.c.l.b16 %v4293
        %v4392 = vunpack.c.h.b16 %v4293
        %v4393 = vunpack.c.l.b16 %v4294
        %v4394 = vunpack.c.h.b16 %v4294
        %v4395 = vunpack.c.l.b16 %v4295
        %v4396 = vunpack.c.h.b16 %v4295
        %v4397 = vunpack.c.l.b16 %v4296
        %v4398 = vunpack.c.h.b16 %v4296
        %v4399 = vpack.c.b16 %v4333, %v4331
        %v4400 = vpack.c.b16 %v4334, %v4332
        %v4401 = vpack.c.b16 %v4337, %v4335
        %v4402 = vpack.c.b16 %v4338, %v4336
        %v4403 = vpack.c.b16 %v4341, %v4339
        %v4404 = vpack.c.b16 %v4342, %v4340
        %v4405 = vpack.c.b16 %v4345, %v4343
        %v4406 = vpack.c.b16 %v4346, %v4344
        %v4407 = vpack.c.b16 %v4349, %v4347
        %v4408 = vpack.c.b16 %v4350, %v4348
        %v4409 = vpack.c.b16 %v4353, %v4351
        %v4410 = vpack.c.b16 %v4354, %v4352
        %v4411 = vpack.c.b16 %v4357, %v4355
        %v4412 = vpack.c.b16 %v4358, %v4356
        %v4413 = vpack.c.b16 %v4361, %v4359
        %v4414 = vpack.c.b16 %v4362, %v4360
        %v4415 = vpack.c.b16 %v4365, %v4363
        %v4416 = vpack.c.b16 %v4366, %v4364
        %v4417 = vpack.c.b16 %v4369, %v4367
        %v4418 = vpack.c.b16 %v4370, %v4368
        %v4419 = vpack.c.b16 %v4373, %v4371
        %v4420 = vpack.c.b16 %v4374, %v4372
        %v4421 = vpack.c.b16 %v4377, %v4375
        %v4422 = vpack.c.b16 %v4378, %v4376
        %v4423 = vpack.c.b16 %v4381, %v4379
        %v4424 = vpack.c.b16 %v4382, %v4380
        %v4425 = vpack.c.b16 %v4385, %v4383
        %v4426 = vpack.c.b16 %v4386, %v4384
        %v4427 = vpack.c.b16 %v4389, %v4387
        %v4428 = vpack.c.b16 %v4390, %v4388
        %v4429 = vpack.c.b16 %v4393, %v4391
        %v4430 = vpack.c.b16 %v4394, %v4392
        %v4431 = vpack.c.b16 %v4397, %v4395
        %v4432 = vpack.c.b16 %v4398, %v4396
        %v4466 = vsel %vm3200, %v4261, 0
        %v4469 = vsel %vm3216, %v4431, 0
        %v4472 = vsel %vm3216, %v4432, 0
        %4474 = vmatpush.bf16.msra.mxu0 %v4413
        %4475 = vmatpush.bf16.msra.mxu0 %v4411
        %4476 = vmatpush.bf16.msra.mxu0 %v4409
        %4477 = vmatpush.bf16.msra.mxu0 %v4407
        %4478 = vmatpush.bf16.msra.mxu0 %v4405
        %4479 = vmatpush.bf16.msra.mxu0 %v4403
        %4480 = vmatpush.bf16.msra.mxu0 %v4401
        %4481 = vmatpush.bf16.msra.mxu0 %v4399
        %4482 = vmatmul.bf16.gmra.mxu0 %v2985
        %v4483 = vpop.f32.mrf.mxu0
        %v4484 = vadd.f32 0.0, %v4483
        %v4485 = vpop.f32.mrf.mxu0
        %v4486 = vadd.f32 0.0, %v4485
        %4487 = vmatmul.bf16.gmra.mxu0 %v2988
        %v4488 = vpop.f32.mrf.mxu0
        %v4489 = vadd.f32 0.0, %v4488
        %v4490 = vpop.f32.mrf.mxu0
        %v4491 = vadd.f32 0.0, %v4490
        %4492 = vmatmul.bf16.gmra.mxu0 %v2991
        %v4493 = vpop.f32.mrf.mxu0
        %v4494 = vadd.f32 0.0, %v4493
        %v4495 = vpop.f32.mrf.mxu0
        %v4496 = vadd.f32 0.0, %v4495
        %4497 = vmatmul.bf16.gmra.mxu0 %v2994
        %v4498 = vpop.f32.mrf.mxu0
        %v4499 = vadd.f32 0.0, %v4498
        %v4500 = vpop.f32.mrf.mxu0
        %v4501 = vadd.f32 0.0, %v4500
        %4502 = vmatmul.bf16.gmra.mxu0 %v4259
        %v4503 = vpop.f32.mrf.mxu0
        %v4504 = vadd.f32 0.0, %v4503
        %v4505 = vpop.f32.mrf.mxu0
        %v4506 = vadd.f32 0.0, %v4505
        %4507 = vdwg.mxu0
        %4508 = vmatpush.bf16.msra.mxu0 %v4429
        %4509 = vmatpush.bf16.msra.mxu0 %v4427
        %4510 = vmatpush.bf16.msra.mxu0 %v4425
        %4511 = vmatpush.bf16.msra.mxu0 %v4423
        %4512 = vmatpush.bf16.msra.mxu0 %v4421
        %4513 = vmatpush.bf16.msra.mxu0 %v4419
        %4514 = vmatpush.bf16.msra.mxu0 %v4417
        %4515 = vmatpush.bf16.msra.mxu0 %v4415
        %4516 = vmatmul.bf16.gmra.mxu0 %v2986
        %v4517 = vpop.f32.mrf.mxu0
        %v4518 = vadd.f32 %v4484, %v4517
        %v4519 = vpop.f32.mrf.mxu0
        %v4520 = vadd.f32 %v4486, %v4519
        %4521 = vmatmul.bf16.gmra.mxu0 %v2989
        %v4522 = vpop.f32.mrf.mxu0
        %v4523 = vadd.f32 %v4489, %v4522
        %v4524 = vpop.f32.mrf.mxu0
        %v4525 = vadd.f32 %v4491, %v4524
        %4526 = vmatmul.bf16.gmra.mxu0 %v2992
        %v4527 = vpop.f32.mrf.mxu0
        %v4528 = vadd.f32 %v4494, %v4527
        %v4529 = vpop.f32.mrf.mxu0
        %v4530 = vadd.f32 %v4496, %v4529
        %4531 = vmatmul.bf16.gmra.mxu0 %v2995
        %v4532 = vpop.f32.mrf.mxu0
        %v4533 = vadd.f32 %v4499, %v4532
        %v4534 = vpop.f32.mrf.mxu0
        %v4535 = vadd.f32 %v4501, %v4534
        %4536 = vmatmul.bf16.gmra.mxu0 %v4260
        %v4537 = vpop.f32.mrf.mxu0
        %v4538 = vadd.f32 %v4504, %v4537
        %v4539 = vpop.f32.mrf.mxu0
        %v4540 = vadd.f32 %v4506, %v4539
        %4541 = vdwg.mxu0
        %4542 = vmatpush.bf16.msra.mxu0 0
        %4543 = vmatpush.bf16.msra.mxu0 0
        %4544 = vmatpush.bf16.msra.mxu0 0
        %4545 = vmatpush.bf16.msra.mxu0 0
        %4546 = vmatpush.bf16.msra.mxu0 0
        %4547 = vmatpush.bf16.msra.mxu0 0
        %4548 = vmatpush.bf16.msra.mxu0 0
        %4549 = vmatpush.bf16.msra.mxu0 %v4469
        %4550 = vmatmul.bf16.gmra.mxu0 %v3205
        %v4551 = vpop.f32.mrf.mxu0
        %v4552 = vadd.f32 %v4518, %v4551
        %v4553 = vpop.f32.mrf.mxu0
        %v4554 = vadd.f32 %v4520, %v4553
        %4555 = vmatmul.bf16.gmra.mxu0 %v3208
        %v4556 = vpop.f32.mrf.mxu0
        %v4557 = vadd.f32 %v4523, %v4556
        %v4558 = vpop.f32.mrf.mxu0
        %v4559 = vadd.f32 %v4525, %v4558
        %4560 = vmatmul.bf16.gmra.mxu0 %v3211
        %v4561 = vpop.f32.mrf.mxu0
        %v4562 = vadd.f32 %v4528, %v4561
        %v4563 = vpop.f32.mrf.mxu0
        %v4564 = vadd.f32 %v4530, %v4563
        %4565 = vmatmul.bf16.gmra.mxu0 %v3214
        %v4566 = vpop.f32.mrf.mxu0
        %v4567 = vadd.f32 %v4533, %v4566
        %v4568 = vpop.f32.mrf.mxu0
        %v4569 = vadd.f32 %v4535, %v4568
        %4570 = vmatmul.bf16.gmra.mxu0 %v4466
        %v4571 = vpop.f32.mrf.mxu0
        %v4572 = vadd.f32 %v4538, %v4571
        %v4573 = vpop.f32.mrf.mxu0
        %v4574 = vadd.f32 %v4540, %v4573
        %4575 = vdwg.mxu0
        %4576 = vmatpush.bf16.msra.mxu0 %v4414
        %4577 = vmatpush.bf16.msra.mxu0 %v4412
        %4578 = vmatpush.bf16.msra.mxu0 %v4410
        %4579 = vmatpush.bf16.msra.mxu0 %v4408
        %4580 = vmatpush.bf16.msra.mxu0 %v4406
        %4581 = vmatpush.bf16.msra.mxu0 %v4404
        %4582 = vmatpush.bf16.msra.mxu0 %v4402
        %4583 = vmatpush.bf16.msra.mxu0 %v4400
        %4584 = vmatmul.bf16.gmra.mxu0 %v2985
        %v4585 = vpop.f32.mrf.mxu0
        %v4586 = vadd.f32 0.0, %v4585
        %v4587 = vpop.f32.mrf.mxu0
        %v4588 = vadd.f32 0.0, %v4587
        %4589 = vmatmul.bf16.gmra.mxu0 %v2988
        %v4590 = vpop.f32.mrf.mxu0
        %v4591 = vadd.f32 0.0, %v4590
        %v4592 = vpop.f32.mrf.mxu0
        %v4593 = vadd.f32 0.0, %v4592
        %4594 = vmatmul.bf16.gmra.mxu0 %v2991
        %v4595 = vpop.f32.mrf.mxu0
        %v4596 = vadd.f32 0.0, %v4595
        %v4597 = vpop.f32.mrf.mxu0
        %v4598 = vadd.f32 0.0, %v4597
        %4599 = vmatmul.bf16.gmra.mxu0 %v2994
        %v4600 = vpop.f32.mrf.mxu0
        %v4601 = vadd.f32 0.0, %v4600
        %v4602 = vpop.f32.mrf.mxu0
        %v4603 = vadd.f32 0.0, %v4602
        %4604 = vmatmul.bf16.gmra.mxu0 %v4259
        %v4605 = vpop.f32.mrf.mxu0
        %v4606 = vadd.f32 0.0, %v4605
        %v4607 = vpop.f32.mrf.mxu0
        %v4608 = vadd.f32 0.0, %v4607
        %4609 = vdwg.mxu0
        %4610 = vmatpush.bf16.msra.mxu0 %v4430
        %4611 = vmatpush.bf16.msra.mxu0 %v4428
        %4612 = vmatpush.bf16.msra.mxu0 %v4426
        %4613 = vmatpush.bf16.msra.mxu0 %v4424
        %4614 = vmatpush.bf16.msra.mxu0 %v4422
        %4615 = vmatpush.bf16.msra.mxu0 %v4420
        %4616 = vmatpush.bf16.msra.mxu0 %v4418
        %4617 = vmatpush.bf16.msra.mxu0 %v4416
        %4618 = vmatmul.bf16.gmra.mxu0 %v2986
        %v4619 = vpop.f32.mrf.mxu0
        %v4620 = vadd.f32 %v4586, %v4619
        %v4621 = vpop.f32.mrf.mxu0
        %v4622 = vadd.f32 %v4588, %v4621
        %4623 = vmatmul.bf16.gmra.mxu0 %v2989
        %v4624 = vpop.f32.mrf.mxu0
        %v4625 = vadd.f32 %v4591, %v4624
        %v4626 = vpop.f32.mrf.mxu0
        %v4627 = vadd.f32 %v4593, %v4626
        %4628 = vmatmul.bf16.gmra.mxu0 %v2992
        %v4629 = vpop.f32.mrf.mxu0
        %v4630 = vadd.f32 %v4596, %v4629
        %v4631 = vpop.f32.mrf.mxu0
        %v4632 = vadd.f32 %v4598, %v4631
        %4633 = vmatmul.bf16.gmra.mxu0 %v2995
        %v4634 = vpop.f32.mrf.mxu0
        %v4635 = vadd.f32 %v4601, %v4634
        %v4636 = vpop.f32.mrf.mxu0
        %v4637 = vadd.f32 %v4603, %v4636
        %4638 = vmatmul.bf16.gmra.mxu0 %v4260
        %v4639 = vpop.f32.mrf.mxu0
        %v4640 = vadd.f32 %v4606, %v4639
        %v4641 = vpop.f32.mrf.mxu0
        %v4642 = vadd.f32 %v4608, %v4641
        %4643 = vdwg.mxu0
        %4644 = vmatpush.bf16.msra.mxu0 0
        %4645 = vmatpush.bf16.msra.mxu0 0
        %4646 = vmatpush.bf16.msra.mxu0 0
        %4647 = vmatpush.bf16.msra.mxu0 0
        %4648 = vmatpush.bf16.msra.mxu0 0
        %4649 = vmatpush.bf16.msra.mxu0 0
        %4650 = vmatpush.bf16.msra.mxu0 0
        %4651 = vmatpush.bf16.msra.mxu0 %v4472
        %4652 = vmatmul.bf16.gmra.mxu0 %v3205
        %v4653 = vpop.f32.mrf.mxu0
        %v4654 = vadd.f32 %v4620, %v4653
        %v4655 = vpop.f32.mrf.mxu0
        %v4656 = vadd.f32 %v4622, %v4655
        %4657 = vmatmul.bf16.gmra.mxu0 %v3208
        %v4658 = vpop.f32.mrf.mxu0
        %v4659 = vadd.f32 %v4625, %v4658
        %v4660 = vpop.f32.mrf.mxu0
        %v4661 = vadd.f32 %v4627, %v4660
        %4662 = vmatmul.bf16.gmra.mxu0 %v3211
        %v4663 = vpop.f32.mrf.mxu0
        %v4664 = vadd.f32 %v4630, %v4663
        %v4665 = vpop.f32.mrf.mxu0
        %v4666 = vadd.f32 %v4632, %v4665
        %4667 = vmatmul.bf16.gmra.mxu0 %v3214
        %v4668 = vpop.f32.mrf.mxu0
        %v4669 = vadd.f32 %v4635, %v4668
        %v4670 = vpop.f32.mrf.mxu0
        %v4671 = vadd.f32 %v4637, %v4670
        %4672 = vmatmul.bf16.gmra.mxu0 %v4466
        %v4673 = vpop.f32.mrf.mxu0
        %v4674 = vadd.f32 %v4640, %v4673
        %v4675 = vpop.f32.mrf.mxu0
        %v4676 = vadd.f32 %v4642, %v4675
        %4677 = vdwg.mxu0
        %v4678 = vadd.f32 %v4239, %v4552
        %v4679 = vadd.f32 %v4240, %v4654
        %v4680 = vadd.f32 %v4241, %v4554
        %v4681 = vadd.f32 %v4242, %v4656
        %v4682 = vadd.f32 %v4243, %v4557
        %v4683 = vadd.f32 %v4244, %v4659
        %v4684 = vadd.f32 %v4245, %v4559
        %v4685 = vadd.f32 %v4246, %v4661
        %v4686 = vadd.f32 %v4247, %v4562
        %v4687 = vadd.f32 %v4248, %v4664
        %v4688 = vadd.f32 %v4249, %v4564
        %v4689 = vadd.f32 %v4250, %v4666
        %v4690 = vadd.f32 %v4251, %v4567
        %v4691 = vadd.f32 %v4252, %v4669
        %v4692 = vadd.f32 %v4253, %v4569
        %v4693 = vadd.f32 %v4254, %v4671
        %v4694 = vadd.f32 %v4255, %v4572
        %v4695 = vadd.f32 %v4256, %v4674
        %v4696 = vadd.f32 %v4257, %v4574
        %v4697 = vadd.f32 %v4258, %v4676
        %v4698 = vpack.c.bf16 %v2930, %v2927
        %v4699 = vpack.c.bf16 %v2931, %v2928
        %v4700 = vpack.c.bf16 %v2932, %v2929
        %s4701 = scalar_lea.vmem %s2, 1088
        %v4702 = vld [vmem:[%s4701] sm:$0xff]
        %v4703 = vld [vmem:[%s4701 + $0x8] sm:$0xff]
        %v4704 = vld [vmem:[%s4701 + $0x10] sm:$0xff]
        %v4705 = vld [vmem:[%s4701 + $0x18] sm:$0xff]
        %v4706 = vld [vmem:[%s4701 + $0x20] sm:$0xff]
        %v4707 = vld [vmem:[%s4701 + $0x28] sm:$0xff]
        %v4708 = vld [vmem:[%s4701 + $0x30] sm:$0xff]
        %v4709 = vld [vmem:[%s4701 + $0x38] sm:$0xff]
        %v4710 = vld [vmem:[%s4701 + $0x40] sm:$0xff]
        %v4711 = vld [vmem:[%s4701 + $0x48] sm:$0xff]
        %v4712 = vld [vmem:[%s4701 + $0x50] sm:$0xff]
        %v4713 = vld [vmem:[%s4701 + $0x58] sm:$0xff]
        %v4714 = vld [vmem:[%s4701 + $0x60] sm:$0xff]
        %v4715 = vld [vmem:[%s4701 + $0x68] sm:$0xff]
        %v4716 = vld [vmem:[%s4701 + $0x70] sm:$0xff]
        %v4717 = vld [vmem:[%s4701 + $0x78] sm:$0xff]
        %v4718 = vld [vmem:[%s4701 + $0x80] sm:$0xff]
        %v4719 = vld [vmem:[%s4701 + $0x88] sm:$0xff]
        %v4720 = vld [vmem:[%s4701 + $0x90] sm:$0xff]
        %v4721 = vld [vmem:[%s4701 + $0x98] sm:$0xff]
        %v4722 = vld [vmem:[%s4701 + $0xa0] sm:$0xff]
        %v4723 = vld [vmem:[%s4701 + $0xa8] sm:$0xff]
        %v4724 = vld [vmem:[%s4701 + $0xb0] sm:$0xff]
        %v4725 = vld [vmem:[%s4701 + $0xb8] sm:$0xff]
        %v4726 = vld [vmem:[%s4701 + $0xc0] sm:$0xff]
        %v4727 = vld [vmem:[%s4701 + $0xc8] sm:$0xff]
        %v4728 = vld [vmem:[%s4701 + $0xd0] sm:$0xff]
        %v4729 = vld [vmem:[%s4701 + $0xd8] sm:$0xff]
        %v4730 = vld [vmem:[%s4701 + $0xe0] sm:$0xff]
        %v4731 = vld [vmem:[%s4701 + $0xe8] sm:$0xff]
        %v4732 = vld [vmem:[%s4701 + $0xf0] sm:$0xff]
        %v4733 = vld [vmem:[%s4701 + $0xf8] sm:$0xff]
        %v4734 = vld [vmem:[%s4701 + $0x100] sm:$0xff]
        %v4735 = vld [vmem:[%s4701 + $0x108] sm:$0x77]
        %v4770 = vunpack.c.l.b16 %v4702
        %v4771 = vunpack.c.h.b16 %v4702
        %v4772 = vunpack.c.l.b16 %v4703
        %v4773 = vunpack.c.h.b16 %v4703
        %v4774 = vunpack.c.l.b16 %v4704
        %v4775 = vunpack.c.h.b16 %v4704
        %v4776 = vunpack.c.l.b16 %v4705
        %v4777 = vunpack.c.h.b16 %v4705
        %v4778 = vunpack.c.l.b16 %v4706
        %v4779 = vunpack.c.h.b16 %v4706
        %v4780 = vunpack.c.l.b16 %v4707
        %v4781 = vunpack.c.h.b16 %v4707
        %v4782 = vunpack.c.l.b16 %v4708
        %v4783 = vunpack.c.h.b16 %v4708
        %v4784 = vunpack.c.l.b16 %v4709
        %v4785 = vunpack.c.h.b16 %v4709
        %v4786 = vunpack.c.l.b16 %v4710
        %v4787 = vunpack.c.h.b16 %v4710
        %v4788 = vunpack.c.l.b16 %v4711
        %v4789 = vunpack.c.h.b16 %v4711
        %v4790 = vunpack.c.l.b16 %v4712
        %v4791 = vunpack.c.h.b16 %v4712
        %v4792 = vunpack.c.l.b16 %v4713
        %v4793 = vunpack.c.h.b16 %v4713
        %v4794 = vunpack.c.l.b16 %v4714
        %v4795 = vunpack.c.h.b16 %v4714
        %v4796 = vunpack.c.l.b16 %v4715
        %v4797 = vunpack.c.h.b16 %v4715
        %v4798 = vunpack.c.l.b16 %v4716
        %v4799 = vunpack.c.h.b16 %v4716
        %v4800 = vunpack.c.l.b16 %v4717
        %v4801 = vunpack.c.h.b16 %v4717
        %v4802 = vunpack.c.l.b16 %v4718
        %v4803 = vunpack.c.h.b16 %v4718
        %v4804 = vunpack.c.l.b16 %v4719
        %v4805 = vunpack.c.h.b16 %v4719
        %v4806 = vunpack.c.l.b16 %v4720
        %v4807 = vunpack.c.h.b16 %v4720
        %v4808 = vunpack.c.l.b16 %v4721
        %v4809 = vunpack.c.h.b16 %v4721
        %v4810 = vunpack.c.l.b16 %v4722
        %v4811 = vunpack.c.h.b16 %v4722
        %v4812 = vunpack.c.l.b16 %v4723
        %v4813 = vunpack.c.h.b16 %v4723
        %v4814 = vunpack.c.l.b16 %v4724
        %v4815 = vunpack.c.h.b16 %v4724
        %v4816 = vunpack.c.l.b16 %v4725
        %v4817 = vunpack.c.h.b16 %v4725
        %v4818 = vunpack.c.l.b16 %v4726
        %v4819 = vunpack.c.h.b16 %v4726
        %v4820 = vunpack.c.l.b16 %v4727
        %v4821 = vunpack.c.h.b16 %v4727
        %v4822 = vunpack.c.l.b16 %v4728
        %v4823 = vunpack.c.h.b16 %v4728
        %v4824 = vunpack.c.l.b16 %v4729
        %v4825 = vunpack.c.h.b16 %v4729
        %v4826 = vunpack.c.l.b16 %v4730
        %v4827 = vunpack.c.h.b16 %v4730
        %v4828 = vunpack.c.l.b16 %v4731
        %v4829 = vunpack.c.h.b16 %v4731
        %v4830 = vunpack.c.l.b16 %v4732
        %v4831 = vunpack.c.h.b16 %v4732
        %v4832 = vunpack.c.l.b16 %v4733
        %v4833 = vunpack.c.h.b16 %v4733
        %v4834 = vunpack.c.l.b16 %v4734
        %v4835 = vunpack.c.h.b16 %v4734
        %v4836 = vunpack.c.l.b16 %v4735
        %v4837 = vunpack.c.h.b16 %v4735
        %v4838 = vpack.c.b16 %v4772, %v4770
        %v4839 = vpack.c.b16 %v4773, %v4771
        %v4840 = vpack.c.b16 %v4776, %v4774
        %v4841 = vpack.c.b16 %v4777, %v4775
        %v4842 = vpack.c.b16 %v4780, %v4778
        %v4843 = vpack.c.b16 %v4781, %v4779
        %v4844 = vpack.c.b16 %v4784, %v4782
        %v4845 = vpack.c.b16 %v4785, %v4783
        %v4846 = vpack.c.b16 %v4788, %v4786
        %v4847 = vpack.c.b16 %v4789, %v4787
        %v4848 = vpack.c.b16 %v4792, %v4790
        %v4849 = vpack.c.b16 %v4793, %v4791
        %v4850 = vpack.c.b16 %v4796, %v4794
        %v4851 = vpack.c.b16 %v4797, %v4795
        %v4852 = vpack.c.b16 %v4800, %v4798
        %v4853 = vpack.c.b16 %v4801, %v4799
        %v4854 = vpack.c.b16 %v4804, %v4802
        %v4855 = vpack.c.b16 %v4805, %v4803
        %v4856 = vpack.c.b16 %v4808, %v4806
        %v4857 = vpack.c.b16 %v4809, %v4807
        %v4858 = vpack.c.b16 %v4812, %v4810
        %v4859 = vpack.c.b16 %v4813, %v4811
        %v4860 = vpack.c.b16 %v4816, %v4814
        %v4861 = vpack.c.b16 %v4817, %v4815
        %v4862 = vpack.c.b16 %v4820, %v4818
        %v4863 = vpack.c.b16 %v4821, %v4819
        %v4864 = vpack.c.b16 %v4824, %v4822
        %v4865 = vpack.c.b16 %v4825, %v4823
        %v4866 = vpack.c.b16 %v4828, %v4826
        %v4867 = vpack.c.b16 %v4829, %v4827
        %v4868 = vpack.c.b16 %v4832, %v4830
        %v4869 = vpack.c.b16 %v4833, %v4831
        %v4870 = vpack.c.b16 %v4836, %v4834
        %v4871 = vpack.c.b16 %v4837, %v4835
        %v4905 = vsel %vm3200, %v4700, 0
        %v4908 = vsel %vm3216, %v4870, 0
        %v4911 = vsel %vm3216, %v4871, 0
        %4913 = vmatpush.bf16.msra.mxu0 %v4852
        %4914 = vmatpush.bf16.msra.mxu0 %v4850
        %4915 = vmatpush.bf16.msra.mxu0 %v4848
        %4916 = vmatpush.bf16.msra.mxu0 %v4846
        %4917 = vmatpush.bf16.msra.mxu0 %v4844
        %4918 = vmatpush.bf16.msra.mxu0 %v4842
        %4919 = vmatpush.bf16.msra.mxu0 %v4840
        %4920 = vmatpush.bf16.msra.mxu0 %v4838
        %4921 = vmatmul.bf16.gmra.mxu0 %v2939
        %v4922 = vpop.f32.mrf.mxu0
        %v4923 = vadd.f32 0.0, %v4922
        %v4924 = vpop.f32.mrf.mxu0
        %v4925 = vadd.f32 0.0, %v4924
        %4926 = vmatmul.bf16.gmra.mxu0 %v2942
        %v4927 = vpop.f32.mrf.mxu0
        %v4928 = vadd.f32 0.0, %v4927
        %v4929 = vpop.f32.mrf.mxu0
        %v4930 = vadd.f32 0.0, %v4929
        %4931 = vmatmul.bf16.gmra.mxu0 %v2945
        %v4932 = vpop.f32.mrf.mxu0
        %v4933 = vadd.f32 0.0, %v4932
        %v4934 = vpop.f32.mrf.mxu0
        %v4935 = vadd.f32 0.0, %v4934
        %4936 = vmatmul.bf16.gmra.mxu0 %v3820
        %v4937 = vpop.f32.mrf.mxu0
        %v4938 = vadd.f32 0.0, %v4937
        %v4939 = vpop.f32.mrf.mxu0
        %v4940 = vadd.f32 0.0, %v4939
        %4941 = vmatmul.bf16.gmra.mxu0 %v4698
        %v4942 = vpop.f32.mrf.mxu0
        %v4943 = vadd.f32 0.0, %v4942
        %v4944 = vpop.f32.mrf.mxu0
        %v4945 = vadd.f32 0.0, %v4944
        %4946 = vdwg.mxu0
        %4947 = vmatpush.bf16.msra.mxu0 %v4868
        %4948 = vmatpush.bf16.msra.mxu0 %v4866
        %4949 = vmatpush.bf16.msra.mxu0 %v4864
        %4950 = vmatpush.bf16.msra.mxu0 %v4862
        %4951 = vmatpush.bf16.msra.mxu0 %v4860
        %4952 = vmatpush.bf16.msra.mxu0 %v4858
        %4953 = vmatpush.bf16.msra.mxu0 %v4856
        %4954 = vmatpush.bf16.msra.mxu0 %v4854
        %4955 = vmatmul.bf16.gmra.mxu0 %v2940
        %v4956 = vpop.f32.mrf.mxu0
        %v4957 = vadd.f32 %v4923, %v4956
        %v4958 = vpop.f32.mrf.mxu0
        %v4959 = vadd.f32 %v4925, %v4958
        %4960 = vmatmul.bf16.gmra.mxu0 %v2943
        %v4961 = vpop.f32.mrf.mxu0
        %v4962 = vadd.f32 %v4928, %v4961
        %v4963 = vpop.f32.mrf.mxu0
        %v4964 = vadd.f32 %v4930, %v4963
        %4965 = vmatmul.bf16.gmra.mxu0 %v2946
        %v4966 = vpop.f32.mrf.mxu0
        %v4967 = vadd.f32 %v4933, %v4966
        %v4968 = vpop.f32.mrf.mxu0
        %v4969 = vadd.f32 %v4935, %v4968
        %4970 = vmatmul.bf16.gmra.mxu0 %v3821
        %v4971 = vpop.f32.mrf.mxu0
        %v4972 = vadd.f32 %v4938, %v4971
        %v4973 = vpop.f32.mrf.mxu0
        %v4974 = vadd.f32 %v4940, %v4973
        %4975 = vmatmul.bf16.gmra.mxu0 %v4699
        %v4976 = vpop.f32.mrf.mxu0
        %v4977 = vadd.f32 %v4943, %v4976
        %v4978 = vpop.f32.mrf.mxu0
        %v4979 = vadd.f32 %v4945, %v4978
        %4980 = vdwg.mxu0
        %4981 = vmatpush.bf16.msra.mxu0 0
        %4982 = vmatpush.bf16.msra.mxu0 0
        %4983 = vmatpush.bf16.msra.mxu0 0
        %4984 = vmatpush.bf16.msra.mxu0 0
        %4985 = vmatpush.bf16.msra.mxu0 0
        %4986 = vmatpush.bf16.msra.mxu0 0
        %4987 = vmatpush.bf16.msra.mxu0 0
        %4988 = vmatpush.bf16.msra.mxu0 %v4908
        %4989 = vmatmul.bf16.gmra.mxu0 %v3602
        %v4990 = vpop.f32.mrf.mxu0
        %v4991 = vadd.f32 %v4957, %v4990
        %v4992 = vpop.f32.mrf.mxu0
        %v4993 = vadd.f32 %v4959, %v4992
        %4994 = vmatmul.bf16.gmra.mxu0 %v3605
        %v4995 = vpop.f32.mrf.mxu0
        %v4996 = vadd.f32 %v4962, %v4995
        %v4997 = vpop.f32.mrf.mxu0
        %v4998 = vadd.f32 %v4964, %v4997
        %4999 = vmatmul.bf16.gmra.mxu0 %v3608
        %v5000 = vpop.f32.mrf.mxu0
        %v5001 = vadd.f32 %v4967, %v5000
        %v5002 = vpop.f32.mrf.mxu0
        %v5003 = vadd.f32 %v4969, %v5002
        %5004 = vmatmul.bf16.gmra.mxu0 %v4027
        %v5005 = vpop.f32.mrf.mxu0
        %v5006 = vadd.f32 %v4972, %v5005
        %v5007 = vpop.f32.mrf.mxu0
        %v5008 = vadd.f32 %v4974, %v5007
        %5009 = vmatmul.bf16.gmra.mxu0 %v4905
        %v5010 = vpop.f32.mrf.mxu0
        %v5011 = vadd.f32 %v4977, %v5010
        %v5012 = vpop.f32.mrf.mxu0
        %v5013 = vadd.f32 %v4979, %v5012
        %5014 = vdwg.mxu0
        %5015 = vmatpush.bf16.msra.mxu0 %v4853
        %5016 = vmatpush.bf16.msra.mxu0 %v4851
        %5017 = vmatpush.bf16.msra.mxu0 %v4849
        %5018 = vmatpush.bf16.msra.mxu0 %v4847
        %5019 = vmatpush.bf16.msra.mxu0 %v4845
        %5020 = vmatpush.bf16.msra.mxu0 %v4843
        %5021 = vmatpush.bf16.msra.mxu0 %v4841
        %5022 = vmatpush.bf16.msra.mxu0 %v4839
        %5023 = vmatmul.bf16.gmra.mxu0 %v2939
        %v5024 = vpop.f32.mrf.mxu0
        %v5025 = vadd.f32 0.0, %v5024
        %v5026 = vpop.f32.mrf.mxu0
        %v5027 = vadd.f32 0.0, %v5026
        %5028 = vmatmul.bf16.gmra.mxu0 %v2942
        %v5029 = vpop.f32.mrf.mxu0
        %v5030 = vadd.f32 0.0, %v5029
        %v5031 = vpop.f32.mrf.mxu0
        %v5032 = vadd.f32 0.0, %v5031
        %5033 = vmatmul.bf16.gmra.mxu0 %v2945
        %v5034 = vpop.f32.mrf.mxu0
        %v5035 = vadd.f32 0.0, %v5034
        %v5036 = vpop.f32.mrf.mxu0
        %v5037 = vadd.f32 0.0, %v5036
        %5038 = vmatmul.bf16.gmra.mxu0 %v3820
        %v5039 = vpop.f32.mrf.mxu0
        %v5040 = vadd.f32 0.0, %v5039
        %v5041 = vpop.f32.mrf.mxu0
        %v5042 = vadd.f32 0.0, %v5041
        %5043 = vmatmul.bf16.gmra.mxu0 %v4698
        %v5044 = vpop.f32.mrf.mxu0
        %v5045 = vadd.f32 0.0, %v5044
        %v5046 = vpop.f32.mrf.mxu0
        %v5047 = vadd.f32 0.0, %v5046
        %5048 = vdwg.mxu0
        %5049 = vmatpush.bf16.msra.mxu0 %v4869
        %5050 = vmatpush.bf16.msra.mxu0 %v4867
        %5051 = vmatpush.bf16.msra.mxu0 %v4865
        %5052 = vmatpush.bf16.msra.mxu0 %v4863
        %5053 = vmatpush.bf16.msra.mxu0 %v4861
        %5054 = vmatpush.bf16.msra.mxu0 %v4859
        %5055 = vmatpush.bf16.msra.mxu0 %v4857
        %5056 = vmatpush.bf16.msra.mxu0 %v4855
        %5057 = vmatmul.bf16.gmra.mxu0 %v2940
        %v5058 = vpop.f32.mrf.mxu0
        %v5059 = vadd.f32 %v5025, %v5058
        %v5060 = vpop.f32.mrf.mxu0
        %v5061 = vadd.f32 %v5027, %v5060
        %5062 = vmatmul.bf16.gmra.mxu0 %v2943
        %v5063 = vpop.f32.mrf.mxu0
        %v5064 = vadd.f32 %v5030, %v5063
        %v5065 = vpop.f32.mrf.mxu0
        %v5066 = vadd.f32 %v5032, %v5065
        %5067 = vmatmul.bf16.gmra.mxu0 %v2946
        %v5068 = vpop.f32.mrf.mxu0
        %v5069 = vadd.f32 %v5035, %v5068
        %v5070 = vpop.f32.mrf.mxu0
        %v5071 = vadd.f32 %v5037, %v5070
        %5072 = vmatmul.bf16.gmra.mxu0 %v3821
        %v5073 = vpop.f32.mrf.mxu0
        %v5074 = vadd.f32 %v5040, %v5073
        %v5075 = vpop.f32.mrf.mxu0
        %v5076 = vadd.f32 %v5042, %v5075
        %5077 = vmatmul.bf16.gmra.mxu0 %v4699
        %v5078 = vpop.f32.mrf.mxu0
        %v5079 = vadd.f32 %v5045, %v5078
        %v5080 = vpop.f32.mrf.mxu0
        %v5081 = vadd.f32 %v5047, %v5080
        %5082 = vdwg.mxu0
        %5083 = vmatpush.bf16.msra.mxu0 0
        %5084 = vmatpush.bf16.msra.mxu0 0
        %5085 = vmatpush.bf16.msra.mxu0 0
        %5086 = vmatpush.bf16.msra.mxu0 0
        %5087 = vmatpush.bf16.msra.mxu0 0
        %5088 = vmatpush.bf16.msra.mxu0 0
        %5089 = vmatpush.bf16.msra.mxu0 0
        %5090 = vmatpush.bf16.msra.mxu0 %v4911
        %5091 = vmatmul.bf16.gmra.mxu0 %v3602
        %v5092 = vpop.f32.mrf.mxu0
        %v5093 = vadd.f32 %v5059, %v5092
        %v5094 = vpop.f32.mrf.mxu0
        %v5095 = vadd.f32 %v5061, %v5094
        %5096 = vmatmul.bf16.gmra.mxu0 %v3605
        %v5097 = vpop.f32.mrf.mxu0
        %v5098 = vadd.f32 %v5064, %v5097
        %v5099 = vpop.f32.mrf.mxu0
        %v5100 = vadd.f32 %v5066, %v5099
        %5101 = vmatmul.bf16.gmra.mxu0 %v3608
        %v5102 = vpop.f32.mrf.mxu0
        %v5103 = vadd.f32 %v5069, %v5102
        %v5104 = vpop.f32.mrf.mxu0
        %v5105 = vadd.f32 %v5071, %v5104
        %5106 = vmatmul.bf16.gmra.mxu0 %v4027
        %v5107 = vpop.f32.mrf.mxu0
        %v5108 = vadd.f32 %v5074, %v5107
        %v5109 = vpop.f32.mrf.mxu0
        %v5110 = vadd.f32 %v5076, %v5109
        %5111 = vmatmul.bf16.gmra.mxu0 %v4905
        %v5112 = vpop.f32.mrf.mxu0
        %v5113 = vadd.f32 %v5079, %v5112
        %v5114 = vpop.f32.mrf.mxu0
        %v5115 = vadd.f32 %v5081, %v5114
        %5116 = vdwg.mxu0
        %v5117 = vadd.f32 %v4678, %v4991
        %v5118 = vadd.f32 %v4679, %v5093
        %v5119 = vadd.f32 %v4680, %v4993
        %v5120 = vadd.f32 %v4681, %v5095
        %v5121 = vadd.f32 %v4682, %v4996
        %v5122 = vadd.f32 %v4683, %v5098
        %v5123 = vadd.f32 %v4684, %v4998
        %v5124 = vadd.f32 %v4685, %v5100
        %v5125 = vadd.f32 %v4686, %v5001
        %v5126 = vadd.f32 %v4687, %v5103
        %v5127 = vadd.f32 %v4688, %v5003
        %v5128 = vadd.f32 %v4689, %v5105
        %v5129 = vadd.f32 %v4690, %v5006
        %v5130 = vadd.f32 %v4691, %v5108
        %v5131 = vadd.f32 %v4692, %v5008
        %v5132 = vadd.f32 %v4693, %v5110
        %v5133 = vadd.f32 %v4694, %v5011
        %v5134 = vadd.f32 %v4695, %v5113
        %v5135 = vadd.f32 %v4696, %v5013
        %v5136 = vadd.f32 %v4697, %v5115
        %v5137 = vmax.f32 %v5117, %v5119
        %vm5138 = vcmask 588800
        %v5139 = vsel %vm5138, %v5118, -inf
        %v5140 = vsel %vm5138, %v5120, -inf
        %v5141 = vmax.f32 %v5139, %v5140
        %v5142 = vmax.f32 %v5121, %v5123
        %v5143 = vsel %vm5138, %v5122, -inf
        %v5144 = vsel %vm5138, %v5124, -inf
        %v5145 = vmax.f32 %v5143, %v5144
        %v5146 = vmax.f32 %v5125, %v5127
        %v5147 = vsel %vm5138, %v5126, -inf
        %v5148 = vsel %vm5138, %v5128, -inf
        %v5149 = vmax.f32 %v5147, %v5148
        %v5150 = vmax.f32 %v5129, %v5131
        %v5151 = vsel %vm5138, %v5130, -inf
        %v5152 = vsel %vm5138, %v5132, -inf
        %v5153 = vmax.f32 %v5151, %v5152
        %v5154 = vmax.f32 %v5133, %v5135
        %v5155 = vsel %vm5138, %v5134, -inf
        %v5156 = vsel %vm5138, %v5136, -inf
        %v5157 = vmax.f32 %v5155, %v5156
        %5168 = vrot.lane.b32.xlu0 %v5137, 108
        %v5169 = vpop.permute.xlu0 %5168
        %5170 = vrot.lane.b32.xlu0 %v5141, 108
        %v5171 = vpop.permute.xlu0 %5170
        %5172 = vrot.lane.b32.xlu0 %v5142, 108
        %v5173 = vpop.permute.xlu0 %5172
        %5174 = vrot.lane.b32.xlu0 %v5145, 108
        %v5175 = vpop.permute.xlu0 %5174
        %5176 = vrot.lane.b32.xlu0 %v5146, 108
        %v5177 = vpop.permute.xlu0 %5176
        %5178 = vrot.lane.b32.xlu0 %v5149, 108
        %v5179 = vpop.permute.xlu0 %5178
        %5180 = vrot.lane.b32.xlu0 %v5150, 108
        %v5181 = vpop.permute.xlu0 %5180
        %5182 = vrot.lane.b32.xlu0 %v5153, 108
        %v5183 = vpop.permute.xlu0 %5182
        %5184 = vrot.lane.b32.xlu0 %v5154, 108
        %v5185 = vpop.permute.xlu0 %5184
        %5186 = vrot.lane.b32.xlu0 %v5157, 108
        %v5187 = vpop.permute.xlu0 %5186
        %vm5188 = vcmask 883712
        %v5189 = vsel %vm5188, %v5169, %v5171
        %v5190 = vsel %vm5188, %v5173, %v5175
        %v5191 = vsel %vm5188, %v5177, %v5179
        %v5192 = vsel %vm5188, %v5181, %v5183
        %v5193 = vsel %vm5188, %v5185, %v5187
        %v5204 = vmax.f32 %v5137, %v5189
        %v5205 = vmax.f32 %v5141, %v5171
        %v5206 = vmax.f32 %v5142, %v5190
        %v5207 = vmax.f32 %v5145, %v5175
        %v5208 = vmax.f32 %v5146, %v5191
        %v5209 = vmax.f32 %v5149, %v5179
        %v5210 = vmax.f32 %v5150, %v5192
        %v5211 = vmax.f32 %v5153, %v5183
        %v5212 = vmax.f32 %v5154, %v5193
        %v5213 = vmax.f32 %v5157, %v5187
        %v5214 = vmax.f32 %v5204, 0.0
        %v5215 = vmax.f32 %v5205, 0.0
        %v5216 = vmax.f32 %v5206, 0.0
        %v5217 = vmax.f32 %v5207, 0.0
        %v5218 = vmax.f32 %v5208, 0.0
        %v5219 = vmax.f32 %v5209, 0.0
        %v5220 = vmax.f32 %v5210, 0.0
        %v5221 = vmax.f32 %v5211, 0.0
        %v5222 = vmax.f32 %v5212, 0.0
        %v5223 = vmax.f32 %v5213, 0.0
        %v5224 = vpack.c.bf16 %v5214, %v5214
        %v5225 = vpack.c.bf16 %v5215, %v5215
        %v5226 = vld [vmem:[%s3] sm:$0xf]
        %v5227 = vld [vmem:[%s3 + $0x4] sm:$0xf]
        %v5228 = vld [vmem:[%s3 + $0x8] sm:$0xf]
        %v5229 = vld [vmem:[%s3 + $0xc] sm:$0xf]
        %v5230 = vld [vmem:[%s3 + $0x10] sm:$0xf]
        %v5231 = vld [vmem:[%s3 + $0x14] sm:$0xf]
        %v5232 = vld [vmem:[%s3 + $0x18] sm:$0xf]
        %v5233 = vld [vmem:[%s3 + $0x1c] sm:$0xf]
        %v5234 = vld [vmem:[%s3 + $0x20] sm:$0xf]
        %v5235 = vld [vmem:[%s3 + $0x24] sm:$0xf]
        %v5236 = vld [vmem:[%s3 + $0x28] sm:$0xf]
        %v5237 = vld [vmem:[%s3 + $0x2c] sm:$0xf]
        %v5238 = vld [vmem:[%s3 + $0x30] sm:$0xf]
        %v5239 = vld [vmem:[%s3 + $0x34] sm:$0xf]
        %v5240 = vld [vmem:[%s3 + $0x38] sm:$0xf]
        %v5241 = vld [vmem:[%s3 + $0x3c] sm:$0xf]
        %v5242 = vld [vmem:[%s3 + $0x40] sm:$0xf]
        %v5243 = vld [vmem:[%s3 + $0x44] sm:$0xf]
        %v5244 = vld [vmem:[%s3 + $0x48] sm:$0xf]
        %v5245 = vld [vmem:[%s3 + $0x4c] sm:$0xf]
        %v5246 = vld [vmem:[%s3 + $0x50] sm:$0xf]
        %v5247 = vld [vmem:[%s3 + $0x54] sm:$0xf]
        %v5248 = vld [vmem:[%s3 + $0x58] sm:$0x3]
        %v5249 = vpack.c.bf16 %v5216, %v5216
        %v5250 = vpack.c.bf16 %v5217, %v5217
        %s5251 = scalar_lea.vmem %s3, 92
        %v5252 = vld [vmem:[%s5251] sm:$0xf]
        %v5253 = vld [vmem:[%s5251 + $0x4] sm:$0xf]
        %v5254 = vld [vmem:[%s5251 + $0x8] sm:$0xf]
        %v5255 = vld [vmem:[%s5251 + $0xc] sm:$0xf]
        %v5256 = vld [vmem:[%s5251 + $0x10] sm:$0xf]
        %v5257 = vld [vmem:[%s5251 + $0x14] sm:$0xf]
        %v5258 = vld [vmem:[%s5251 + $0x18] sm:$0xf]
        %v5259 = vld [vmem:[%s5251 + $0x1c] sm:$0xf]
        %v5260 = vld [vmem:[%s5251 + $0x20] sm:$0xf]
        %v5261 = vld [vmem:[%s5251 + $0x24] sm:$0xf]
        %v5262 = vld [vmem:[%s5251 + $0x28] sm:$0xf]
        %v5263 = vld [vmem:[%s5251 + $0x2c] sm:$0xf]
        %v5264 = vld [vmem:[%s5251 + $0x30] sm:$0xf]
        %v5265 = vld [vmem:[%s5251 + $0x34] sm:$0xf]
        %v5266 = vld [vmem:[%s5251 + $0x38] sm:$0xf]
        %v5267 = vld [vmem:[%s5251 + $0x3c] sm:$0xf]
        %v5268 = vld [vmem:[%s5251 + $0x40] sm:$0xf]
        %v5269 = vld [vmem:[%s5251 + $0x44] sm:$0xf]
        %v5270 = vld [vmem:[%s5251 + $0x48] sm:$0xf]
        %v5271 = vld [vmem:[%s5251 + $0x4c] sm:$0xf]
        %v5272 = vld [vmem:[%s5251 + $0x50] sm:$0xf]
        %v5273 = vld [vmem:[%s5251 + $0x54] sm:$0xf]
        %v5274 = vld [vmem:[%s5251 + $0x58] sm:$0x3]
        %v5298 = vunpack.c.l.b16 %v5252
        %v5299 = vunpack.c.l.b16 %v5253
        %v5300 = vunpack.c.l.b16 %v5254
        %v5301 = vunpack.c.l.b16 %v5255
        %v5302 = vunpack.c.l.b16 %v5256
        %v5303 = vunpack.c.l.b16 %v5257
        %v5304 = vunpack.c.l.b16 %v5258
        %v5305 = vunpack.c.l.b16 %v5259
        %v5306 = vunpack.c.l.b16 %v5260
        %v5307 = vunpack.c.l.b16 %v5261
        %v5308 = vunpack.c.l.b16 %v5262
        %v5309 = vunpack.c.l.b16 %v5263
        %v5310 = vunpack.c.l.b16 %v5264
        %v5311 = vunpack.c.l.b16 %v5265
        %v5312 = vunpack.c.l.b16 %v5266
        %v5313 = vunpack.c.l.b16 %v5267
        %v5314 = vunpack.c.l.b16 %v5268
        %v5315 = vunpack.c.l.b16 %v5269
        %v5316 = vunpack.c.l.b16 %v5270
        %v5317 = vunpack.c.l.b16 %v5271
        %v5318 = vunpack.c.l.b16 %v5272
        %v5319 = vunpack.c.l.b16 %v5273
        %v5320 = vunpack.c.l.b16 %v5274
        %v5321 = vpack.c.b16 %v5299, %v5298
        %v5322 = vpack.c.b16 %v5301, %v5300
        %v5323 = vpack.c.b16 %v5303, %v5302
        %v5324 = vpack.c.b16 %v5305, %v5304
        %v5325 = vpack.c.b16 %v5307, %v5306
        %v5326 = vpack.c.b16 %v5309, %v5308
        %v5327 = vpack.c.b16 %v5311, %v5310
        %v5328 = vpack.c.b16 %v5313, %v5312
        %v5329 = vpack.c.b16 %v5315, %v5314
        %v5330 = vpack.c.b16 %v5317, %v5316
        %v5331 = vpack.c.b16 %v5319, %v5318
        %v5332 = vpack.c.b16 %v5320, %v5320
        %vm5344 = vcmask 424960
        %v5346 = vsel %vm5344, %v5250, 0
        %vm5348 = vcmask 1041408
        %v5350 = vsel %vm5348, %v5332, 0
        %5352 = vmatpush.bf16.msra.mxu0 %v5328
        %5353 = vmatpush.bf16.msra.mxu0 %v5327
        %5354 = vmatpush.bf16.msra.mxu0 %v5326
        %5355 = vmatpush.bf16.msra.mxu0 %v5325
        %5356 = vmatpush.bf16.msra.mxu0 %v5324
        %5357 = vmatpush.bf16.msra.mxu0 %v5323
        %5358 = vmatpush.bf16.msra.mxu0 %v5322
        %5359 = vmatpush.bf16.msra.mxu0 %v5321
        %5360 = vmatmul.bf16.gmra.mxu0 %v5249
        %v5361 = vpop.f32.mrf.mxu0
        %v5362 = vadd.f32 0.0, %v5361
        %v5363 = vpop.f32.mrf.mxu0
        %5364 = vdwg.mxu0
        %5365 = vmatpush.bf16.msra.mxu0 0
        %5366 = vmatpush.bf16.msra.mxu0 0
        %5367 = vmatpush.bf16.msra.mxu0 0
        %5368 = vmatpush.bf16.msra.mxu0 0
        %5369 = vmatpush.bf16.msra.mxu0 %v5350
        %5370 = vmatpush.bf16.msra.mxu0 %v5331
        %5371 = vmatpush.bf16.msra.mxu0 %v5330
        %5372 = vmatpush.bf16.msra.mxu0 %v5329
        %5373 = vmatmul.bf16.gmra.mxu0 %v5346
        %v5374 = vpop.f32.mrf.mxu0
        %v5375 = vadd.f32 %v5362, %v5374
        %v5376 = vpop.f32.mrf.mxu0
        %5377 = vdwg.mxu0
        %v5401 = vunpack.c.l.b16 %v5226
        %v5402 = vunpack.c.l.b16 %v5227
        %v5403 = vunpack.c.l.b16 %v5228
        %v5404 = vunpack.c.l.b16 %v5229
        %v5405 = vunpack.c.l.b16 %v5230
        %v5406 = vunpack.c.l.b16 %v5231
        %v5407 = vunpack.c.l.b16 %v5232
        %v5408 = vunpack.c.l.b16 %v5233
        %v5409 = vunpack.c.l.b16 %v5234
        %v5410 = vunpack.c.l.b16 %v5235
        %v5411 = vunpack.c.l.b16 %v5236
        %v5412 = vunpack.c.l.b16 %v5237
        %v5413 = vunpack.c.l.b16 %v5238
        %v5414 = vunpack.c.l.b16 %v5239
        %v5415 = vunpack.c.l.b16 %v5240
        %v5416 = vunpack.c.l.b16 %v5241
        %v5417 = vunpack.c.l.b16 %v5242
        %v5418 = vunpack.c.l.b16 %v5243
        %v5419 = vunpack.c.l.b16 %v5244
        %v5420 = vunpack.c.l.b16 %v5245
        %v5421 = vunpack.c.l.b16 %v5246
        %v5422 = vunpack.c.l.b16 %v5247
        %v5423 = vunpack.c.l.b16 %v5248
        %v5424 = vpack.c.b16 %v5402, %v5401
        %v5425 = vpack.c.b16 %v5404, %v5403
        %v5426 = vpack.c.b16 %v5406, %v5405
        %v5427 = vpack.c.b16 %v5408, %v5407
        %v5428 = vpack.c.b16 %v5410, %v5409
        %v5429 = vpack.c.b16 %v5412, %v5411
        %v5430 = vpack.c.b16 %v5414, %v5413
        %v5431 = vpack.c.b16 %v5416, %v5415
        %v5432 = vpack.c.b16 %v5418, %v5417
        %v5433 = vpack.c.b16 %v5420, %v5419
        %v5434 = vpack.c.b16 %v5422, %v5421
        %v5435 = vpack.c.b16 %v5423, %v5423
        %v5448 = vsel %vm5344, %v5225, 0
        %v5451 = vsel %vm5348, %v5435, 0
        %5453 = vmatpush.bf16.msra.mxu0 %v5431
        %5454 = vmatpush.bf16.msra.mxu0 %v5430
        %5455 = vmatpush.bf16.msra.mxu0 %v5429
        %5456 = vmatpush.bf16.msra.mxu0 %v5428
        %5457 = vmatpush.bf16.msra.mxu0 %v5427
        %5458 = vmatpush.bf16.msra.mxu0 %v5426
        %5459 = vmatpush.bf16.msra.mxu0 %v5425
        %5460 = vmatpush.bf16.msra.mxu0 %v5424
        %5461 = vmatmul.bf16.gmra.mxu0 %v5224
        %v5462 = vpop.f32.mrf.mxu0
        %v5463 = vadd.f32 %v5375, %v5462
        %v5464 = vpop.f32.mrf.mxu0
        %5465 = vdwg.mxu0
        %5466 = vmatpush.bf16.msra.mxu0 0
        %5467 = vmatpush.bf16.msra.mxu0 0
        %5468 = vmatpush.bf16.msra.mxu0 0
        %5469 = vmatpush.bf16.msra.mxu0 0
        %5470 = vmatpush.bf16.msra.mxu0 %v5451
        %5471 = vmatpush.bf16.msra.mxu0 %v5434
        %5472 = vmatpush.bf16.msra.mxu0 %v5433
        %5473 = vmatpush.bf16.msra.mxu0 %v5432
        %5474 = vmatmul.bf16.gmra.mxu0 %v5448
        %v5475 = vpop.f32.mrf.mxu0
        %v5476 = vadd.f32 %v5463, %v5475
        %v5477 = vpop.f32.mrf.mxu0
        %5478 = vdwg.mxu0
        %v5479 = vpack.c.bf16 %v5218, %v5218
        %v5480 = vpack.c.bf16 %v5219, %v5219
        %s5481 = scalar_lea.vmem %s3, 184
        %v5482 = vld [vmem:[%s5481] sm:$0xf]
        %v5483 = vld [vmem:[%s5481 + $0x4] sm:$0xf]
        %v5484 = vld [vmem:[%s5481 + $0x8] sm:$0xf]
        %v5485 = vld [vmem:[%s5481 + $0xc] sm:$0xf]
        %v5486 = vld [vmem:[%s5481 + $0x10] sm:$0xf]
        %v5487 = vld [vmem:[%s5481 + $0x14] sm:$0xf]
        %v5488 = vld [vmem:[%s5481 + $0x18] sm:$0xf]
        %v5489 = vld [vmem:[%s5481 + $0x1c] sm:$0xf]
        %v5490 = vld [vmem:[%s5481 + $0x20] sm:$0xf]
        %v5491 = vld [vmem:[%s5481 + $0x24] sm:$0xf]
        %v5492 = vld [vmem:[%s5481 + $0x28] sm:$0xf]
        %v5493 = vld [vmem:[%s5481 + $0x2c] sm:$0xf]
        %v5494 = vld [vmem:[%s5481 + $0x30] sm:$0xf]
        %v5495 = vld [vmem:[%s5481 + $0x34] sm:$0xf]
        %v5496 = vld [vmem:[%s5481 + $0x38] sm:$0xf]
        %v5497 = vld [vmem:[%s5481 + $0x3c] sm:$0xf]
        %v5498 = vld [vmem:[%s5481 + $0x40] sm:$0xf]
        %v5499 = vld [vmem:[%s5481 + $0x44] sm:$0xf]
        %v5500 = vld [vmem:[%s5481 + $0x48] sm:$0xf]
        %v5501 = vld [vmem:[%s5481 + $0x4c] sm:$0xf]
        %v5502 = vld [vmem:[%s5481 + $0x50] sm:$0xf]
        %v5503 = vld [vmem:[%s5481 + $0x54] sm:$0xf]
        %v5504 = vld [vmem:[%s5481 + $0x58] sm:$0x3]
        %v5528 = vunpack.c.l.b16 %v5482
        %v5529 = vunpack.c.l.b16 %v5483
        %v5530 = vunpack.c.l.b16 %v5484
        %v5531 = vunpack.c.l.b16 %v5485
        %v5532 = vunpack.c.l.b16 %v5486
        %v5533 = vunpack.c.l.b16 %v5487
        %v5534 = vunpack.c.l.b16 %v5488
        %v5535 = vunpack.c.l.b16 %v5489
        %v5536 = vunpack.c.l.b16 %v5490
        %v5537 = vunpack.c.l.b16 %v5491
        %v5538 = vunpack.c.l.b16 %v5492
        %v5539 = vunpack.c.l.b16 %v5493
        %v5540 = vunpack.c.l.b16 %v5494
        %v5541 = vunpack.c.l.b16 %v5495
        %v5542 = vunpack.c.l.b16 %v5496
        %v5543 = vunpack.c.l.b16 %v5497
        %v5544 = vunpack.c.l.b16 %v5498
        %v5545 = vunpack.c.l.b16 %v5499
        %v5546 = vunpack.c.l.b16 %v5500
        %v5547 = vunpack.c.l.b16 %v5501
        %v5548 = vunpack.c.l.b16 %v5502
        %v5549 = vunpack.c.l.b16 %v5503
        %v5550 = vunpack.c.l.b16 %v5504
        %v5551 = vpack.c.b16 %v5529, %v5528
        %v5552 = vpack.c.b16 %v5531, %v5530
        %v5553 = vpack.c.b16 %v5533, %v5532
        %v5554 = vpack.c.b16 %v5535, %v5534
        %v5555 = vpack.c.b16 %v5537, %v5536
        %v5556 = vpack.c.b16 %v5539, %v5538
        %v5557 = vpack.c.b16 %v5541, %v5540
        %v5558 = vpack.c.b16 %v5543, %v5542
        %v5559 = vpack.c.b16 %v5545, %v5544
        %v5560 = vpack.c.b16 %v5547, %v5546
        %v5561 = vpack.c.b16 %v5549, %v5548
        %v5562 = vpack.c.b16 %v5550, %v5550
        %v5575 = vsel %vm5344, %v5480, 0
        %v5578 = vsel %vm5348, %v5562, 0
        %5580 = vmatpush.bf16.msra.mxu0 %v5558
        %5581 = vmatpush.bf16.msra.mxu0 %v5557
        %5582 = vmatpush.bf16.msra.mxu0 %v5556
        %5583 = vmatpush.bf16.msra.mxu0 %v5555
        %5584 = vmatpush.bf16.msra.mxu0 %v5554
        %5585 = vmatpush.bf16.msra.mxu0 %v5553
        %5586 = vmatpush.bf16.msra.mxu0 %v5552
        %5587 = vmatpush.bf16.msra.mxu0 %v5551
        %5588 = vmatmul.bf16.gmra.mxu0 %v5479
        %v5589 = vpop.f32.mrf.mxu0
        %v5590 = vadd.f32 0.0, %v5589
        %v5591 = vpop.f32.mrf.mxu0
        %5592 = vdwg.mxu0
        %5593 = vmatpush.bf16.msra.mxu0 0
        %5594 = vmatpush.bf16.msra.mxu0 0
        %5595 = vmatpush.bf16.msra.mxu0 0
        %5596 = vmatpush.bf16.msra.mxu0 0
        %5597 = vmatpush.bf16.msra.mxu0 %v5578
        %5598 = vmatpush.bf16.msra.mxu0 %v5561
        %5599 = vmatpush.bf16.msra.mxu0 %v5560
        %5600 = vmatpush.bf16.msra.mxu0 %v5559
        %5601 = vmatmul.bf16.gmra.mxu0 %v5575
        %v5602 = vpop.f32.mrf.mxu0
        %v5603 = vadd.f32 %v5590, %v5602
        %v5604 = vpop.f32.mrf.mxu0
        %5605 = vdwg.mxu0
        %v5606 = vadd.f32 %v5476, %v5603
        %v5607 = vpack.c.bf16 %v5220, %v5220
        %v5608 = vpack.c.bf16 %v5221, %v5221
        %s5609 = scalar_lea.vmem %s3, 276
        %v5610 = vld [vmem:[%s5609] sm:$0xf]
        %v5611 = vld [vmem:[%s5609 + $0x4] sm:$0xf]
        %v5612 = vld [vmem:[%s5609 + $0x8] sm:$0xf]
        %v5613 = vld [vmem:[%s5609 + $0xc] sm:$0xf]
        %v5614 = vld [vmem:[%s5609 + $0x10] sm:$0xf]
        %v5615 = vld [vmem:[%s5609 + $0x14] sm:$0xf]
        %v5616 = vld [vmem:[%s5609 + $0x18] sm:$0xf]
        %v5617 = vld [vmem:[%s5609 + $0x1c] sm:$0xf]
        %v5618 = vld [vmem:[%s5609 + $0x20] sm:$0xf]
        %v5619 = vld [vmem:[%s5609 + $0x24] sm:$0xf]
        %v5620 = vld [vmem:[%s5609 + $0x28] sm:$0xf]
        %v5621 = vld [vmem:[%s5609 + $0x2c] sm:$0xf]
        %v5622 = vld [vmem:[%s5609 + $0x30] sm:$0xf]
        %v5623 = vld [vmem:[%s5609 + $0x34] sm:$0xf]
        %v5624 = vld [vmem:[%s5609 + $0x38] sm:$0xf]
        %v5625 = vld [vmem:[%s5609 + $0x3c] sm:$0xf]
        %v5626 = vld [vmem:[%s5609 + $0x40] sm:$0xf]
        %v5627 = vld [vmem:[%s5609 + $0x44] sm:$0xf]
        %v5628 = vld [vmem:[%s5609 + $0x48] sm:$0xf]
        %v5629 = vld [vmem:[%s5609 + $0x4c] sm:$0xf]
        %v5630 = vld [vmem:[%s5609 + $0x50] sm:$0xf]
        %v5631 = vld [vmem:[%s5609 + $0x54] sm:$0xf]
        %v5632 = vld [vmem:[%s5609 + $0x58] sm:$0x3]
        %v5656 = vunpack.c.l.b16 %v5610
        %v5657 = vunpack.c.l.b16 %v5611
        %v5658 = vunpack.c.l.b16 %v5612
        %v5659 = vunpack.c.l.b16 %v5613
        %v5660 = vunpack.c.l.b16 %v5614
        %v5661 = vunpack.c.l.b16 %v5615
        %v5662 = vunpack.c.l.b16 %v5616
        %v5663 = vunpack.c.l.b16 %v5617
        %v5664 = vunpack.c.l.b16 %v5618
        %v5665 = vunpack.c.l.b16 %v5619
        %v5666 = vunpack.c.l.b16 %v5620
        %v5667 = vunpack.c.l.b16 %v5621
        %v5668 = vunpack.c.l.b16 %v5622
        %v5669 = vunpack.c.l.b16 %v5623
        %v5670 = vunpack.c.l.b16 %v5624
        %v5671 = vunpack.c.l.b16 %v5625
        %v5672 = vunpack.c.l.b16 %v5626
        %v5673 = vunpack.c.l.b16 %v5627
        %v5674 = vunpack.c.l.b16 %v5628
        %v5675 = vunpack.c.l.b16 %v5629
        %v5676 = vunpack.c.l.b16 %v5630
        %v5677 = vunpack.c.l.b16 %v5631
        %v5678 = vunpack.c.l.b16 %v5632
        %v5679 = vpack.c.b16 %v5657, %v5656
        %v5680 = vpack.c.b16 %v5659, %v5658
        %v5681 = vpack.c.b16 %v5661, %v5660
        %v5682 = vpack.c.b16 %v5663, %v5662
        %v5683 = vpack.c.b16 %v5665, %v5664
        %v5684 = vpack.c.b16 %v5667, %v5666
        %v5685 = vpack.c.b16 %v5669, %v5668
        %v5686 = vpack.c.b16 %v5671, %v5670
        %v5687 = vpack.c.b16 %v5673, %v5672
        %v5688 = vpack.c.b16 %v5675, %v5674
        %v5689 = vpack.c.b16 %v5677, %v5676
        %v5690 = vpack.c.b16 %v5678, %v5678
        %v5703 = vsel %vm5344, %v5608, 0
        %v5706 = vsel %vm5348, %v5690, 0
        %5708 = vmatpush.bf16.msra.mxu0 %v5686
        %5709 = vmatpush.bf16.msra.mxu0 %v5685
        %5710 = vmatpush.bf16.msra.mxu0 %v5684
        %5711 = vmatpush.bf16.msra.mxu0 %v5683
        %5712 = vmatpush.bf16.msra.mxu0 %v5682
        %5713 = vmatpush.bf16.msra.mxu0 %v5681
        %5714 = vmatpush.bf16.msra.mxu0 %v5680
        %5715 = vmatpush.bf16.msra.mxu0 %v5679
        %5716 = vmatmul.bf16.gmra.mxu0 %v5607
        %v5717 = vpop.f32.mrf.mxu0
        %v5718 = vadd.f32 0.0, %v5717
        %v5719 = vpop.f32.mrf.mxu0
        %5720 = vdwg.mxu0
        %5721 = vmatpush.bf16.msra.mxu0 0
        %5722 = vmatpush.bf16.msra.mxu0 0
        %5723 = vmatpush.bf16.msra.mxu0 0
        %5724 = vmatpush.bf16.msra.mxu0 0
        %5725 = vmatpush.bf16.msra.mxu0 %v5706
        %5726 = vmatpush.bf16.msra.mxu0 %v5689
        %5727 = vmatpush.bf16.msra.mxu0 %v5688
        %5728 = vmatpush.bf16.msra.mxu0 %v5687
        %5729 = vmatmul.bf16.gmra.mxu0 %v5703
        %v5730 = vpop.f32.mrf.mxu0
        %v5731 = vadd.f32 %v5718, %v5730
        %v5732 = vpop.f32.mrf.mxu0
        %5733 = vdwg.mxu0
        %v5734 = vadd.f32 %v5606, %v5731
        %v5735 = vpack.c.bf16 %v5222, %v5222
        %v5736 = vpack.c.bf16 %v5223, %v5223
        %s5737 = scalar_lea.vmem %s3, 368
        %v5738 = vld [vmem:[%s5737] sm:$0xf]
        %v5739 = vld [vmem:[%s5737 + $0x4] sm:$0xf]
        %v5740 = vld [vmem:[%s5737 + $0x8] sm:$0xf]
        %v5741 = vld [vmem:[%s5737 + $0xc] sm:$0xf]
        %v5742 = vld [vmem:[%s5737 + $0x10] sm:$0xf]
        %v5743 = vld [vmem:[%s5737 + $0x14] sm:$0xf]
        %v5744 = vld [vmem:[%s5737 + $0x18] sm:$0xf]
        %v5745 = vld [vmem:[%s5737 + $0x1c] sm:$0xf]
        %v5746 = vld [vmem:[%s5737 + $0x20] sm:$0xf]
        %v5747 = vld [vmem:[%s5737 + $0x24] sm:$0xf]
        %v5748 = vld [vmem:[%s5737 + $0x28] sm:$0xf]
        %v5749 = vld [vmem:[%s5737 + $0x2c] sm:$0xf]
        %v5750 = vld [vmem:[%s5737 + $0x30] sm:$0xf]
        %v5751 = vld [vmem:[%s5737 + $0x34] sm:$0xf]
        %v5752 = vld [vmem:[%s5737 + $0x38] sm:$0xf]
        %v5753 = vld [vmem:[%s5737 + $0x3c] sm:$0xf]
        %v5754 = vld [vmem:[%s5737 + $0x40] sm:$0xf]
        %v5755 = vld [vmem:[%s5737 + $0x44] sm:$0xf]
        %v5756 = vld [vmem:[%s5737 + $0x48] sm:$0xf]
        %v5757 = vld [vmem:[%s5737 + $0x4c] sm:$0xf]
        %v5758 = vld [vmem:[%s5737 + $0x50] sm:$0xf]
        %v5759 = vld [vmem:[%s5737 + $0x54] sm:$0xf]
        %v5760 = vld [vmem:[%s5737 + $0x58] sm:$0x3]
        %v5784 = vunpack.c.l.b16 %v5738
        %v5785 = vunpack.c.l.b16 %v5739
        %v5786 = vunpack.c.l.b16 %v5740
        %v5787 = vunpack.c.l.b16 %v5741
        %v5788 = vunpack.c.l.b16 %v5742
        %v5789 = vunpack.c.l.b16 %v5743
        %v5790 = vunpack.c.l.b16 %v5744
        %v5791 = vunpack.c.l.b16 %v5745
        %v5792 = vunpack.c.l.b16 %v5746
        %v5793 = vunpack.c.l.b16 %v5747
        %v5794 = vunpack.c.l.b16 %v5748
        %v5795 = vunpack.c.l.b16 %v5749
        %v5796 = vunpack.c.l.b16 %v5750
        %v5797 = vunpack.c.l.b16 %v5751
        %v5798 = vunpack.c.l.b16 %v5752
        %v5799 = vunpack.c.l.b16 %v5753
        %v5800 = vunpack.c.l.b16 %v5754
        %v5801 = vunpack.c.l.b16 %v5755
        %v5802 = vunpack.c.l.b16 %v5756
        %v5803 = vunpack.c.l.b16 %v5757
        %v5804 = vunpack.c.l.b16 %v5758
        %v5805 = vunpack.c.l.b16 %v5759
        %v5806 = vunpack.c.l.b16 %v5760
        %v5807 = vpack.c.b16 %v5785, %v5784
        %v5808 = vpack.c.b16 %v5787, %v5786
        %v5809 = vpack.c.b16 %v5789, %v5788
        %v5810 = vpack.c.b16 %v5791, %v5790
        %v5811 = vpack.c.b16 %v5793, %v5792
        %v5812 = vpack.c.b16 %v5795, %v5794
        %v5813 = vpack.c.b16 %v5797, %v5796
        %v5814 = vpack.c.b16 %v5799, %v5798
        %v5815 = vpack.c.b16 %v5801, %v5800
        %v5816 = vpack.c.b16 %v5803, %v5802
        %v5817 = vpack.c.b16 %v5805, %v5804
        %v5818 = vpack.c.b16 %v5806, %v5806
        %v5831 = vsel %vm5344, %v5736, 0
        %v5834 = vsel %vm5348, %v5818, 0
        %5836 = vmatpush.bf16.msra.mxu0 %v5814
        %5837 = vmatpush.bf16.msra.mxu0 %v5813
        %5838 = vmatpush.bf16.msra.mxu0 %v5812
        %5839 = vmatpush.bf16.msra.mxu0 %v5811
        %5840 = vmatpush.bf16.msra.mxu0 %v5810
        %5841 = vmatpush.bf16.msra.mxu0 %v5809
        %5842 = vmatpush.bf16.msra.mxu0 %v5808
        %5843 = vmatpush.bf16.msra.mxu0 %v5807
        %5844 = vmatmul.bf16.gmra.mxu0 %v5735
        %v5845 = vpop.f32.mrf.mxu0
        %v5846 = vadd.f32 0.0, %v5845
        %v5847 = vpop.f32.mrf.mxu0
        %5848 = vdwg.mxu0
        %5849 = vmatpush.bf16.msra.mxu0 0
        %5850 = vmatpush.bf16.msra.mxu0 0
        %5851 = vmatpush.bf16.msra.mxu0 0
        %5852 = vmatpush.bf16.msra.mxu0 0
        %5853 = vmatpush.bf16.msra.mxu0 %v5834
        %5854 = vmatpush.bf16.msra.mxu0 %v5817
        %5855 = vmatpush.bf16.msra.mxu0 %v5816
        %5856 = vmatpush.bf16.msra.mxu0 %v5815
        %5857 = vmatmul.bf16.gmra.mxu0 %v5831
        %v5858 = vpop.f32.mrf.mxu0
        %v5859 = vadd.f32 %v5846, %v5858
        %v5860 = vpop.f32.mrf.mxu0
        %5861 = vdwg.mxu0
        %v5862 = vadd.f32 %v5734, %v5859
        %v5863 = vmax.f32 %v5862, 0.0
        %v5864 = vpack.c.bf16 %v5863, %v5863
        %v5865 = vld [vmem:[%s4] sm:$0xf]
        %v5866 = vld [vmem:[%s4 + $0x4] sm:$0xf]
        %v5867 = vld [vmem:[%s4 + $0x8] sm:$0xf]
        %v5868 = vld [vmem:[%s4 + $0xc] sm:$0xf]
        %v5869 = vld [vmem:[%s4 + $0x10] sm:$0xf]
        %v5870 = vld [vmem:[%s4 + $0x14] sm:$0xf]
        %v5871 = vld [vmem:[%s4 + $0x18] sm:$0x1]
        %v5879 = vunpack.c.l.b16 %v5865
        %v5880 = vunpack.c.l.b16 %v5866
        %v5881 = vunpack.c.l.b16 %v5867
        %v5882 = vunpack.c.l.b16 %v5868
        %v5883 = vunpack.c.l.b16 %v5869
        %v5884 = vunpack.c.l.b16 %v5870
        %v5885 = vunpack.c.l.b16 %v5871
        %v5886 = vpack.c.b16 %v5880, %v5879
        %v5887 = vpack.c.b16 %v5882, %v5881
        %v5888 = vpack.c.b16 %v5884, %v5883
        %v5889 = vpack.c.b16 %v5885, %v5885
        %vm5893 = vcmask 408576
        %v5895 = vsel %vm5893, %v5864, 0
        %vm5897 = vcmask 1040384
        %v5899 = vsel %vm5897, %v5889, 0
        %5901 = vmatpush.bf16.msra.mxu0 0
        %5902 = vmatpush.bf16.msra.mxu0 0
        %5903 = vmatpush.bf16.msra.mxu0 0
        %5904 = vmatpush.bf16.msra.mxu0 0
        %5905 = vmatpush.bf16.msra.mxu0 %v5899
        %5906 = vmatpush.bf16.msra.mxu0 %v5888
        %5907 = vmatpush.bf16.msra.mxu0 %v5887
        %5908 = vmatpush.bf16.msra.mxu0 %v5886
        %5909 = vmatmul.bf16.gmra.mxu0 %v5895
        %v5910 = vpop.f32.mrf.mxu0
        %v5911 = vadd.f32 0.0, %v5910
        %v5912 = vpop.f32.mrf.mxu0
        %5913 = vdwg.mxu0
        %vm5914 = vcmask 80896
        %v5915 = vsel %vm5914, %v5911, -inf
        %5916 = vmax.xlane.f32.xlu0 %v5915
        %v5917 = vpop.xlane.xlu0 %5916
        %v5918 = vsub.f32 %v5911, %v5917
        %v5919 = vmul.f32 %v5918, 1.442695
        %v5920 = vpow.pop %v5919
        %v5921 = vsel %vm5914, %v5920, 0.0
        %5922 = vadd.xlane.f32.xlu0 %v5921
        %v5923 = vpop.xlane.xlu0 %5922
        %v5924 = vlog2.pop %v5923
        %v5925 = vmul.f32 %v5924, 0.6931472
        %v5926 = vsub.f32 %v5918, %v5925
        %5927 = vst.msk [vmem:[%s381] sm:$0xff] %vm5914, %v5926
        %s5928 = sand.u32 %s137, 1
        %s5929 = scalar_lea.sflag [#allocation4], %s5928
        %s5930 = sand.u32 %s137, 1
        %s5931 = smul.addr %s5930, 8
        %s5932 = scalar_lea.vmem [#allocation3], %s5931
        // Predicated region
        $region79: #{net_cifar_forward.1} parent=73 // pred_check
          %p5933 = pneg %p147
        $region80: #{net_cifar_forward.1} parent=73 // pred_check_branch
          %5935 = sbr.rel (%p5933) target = $region82
        $region81: #{net_cifar_forward.1} parent=73 // pred_region
          %5937 = vsyncadd %s5929, 0
          %s5938 = smul.addr %s19, 8
          %s5939 = scalar_lea.hbm %s5, %s5938
          %s5941 = sshll.u32 %s5932, 4
          %s5942 = int_to_ptr.vmem [resolvable:$true] %s5941
          %s5943 = sshll.u32 %s5939, 4
          %s5944 = int_to_ptr.hbm [resolvable:$true] %s5943
          %5946 = dma.vmem_to_hbm [thread:$0]  %s5942, 128, %s5944, %s5929
        $region82: #{net_cifar_forward.1} parent=73 // pred_fallthru
          _
      $region74: #{net_cifar_forward.1} parent=5 // pred_fallthru
        _
      %p5947 = scmp.le.s32.totalorder 2, %s14
      // Predicated region
      $region83: #{net_cifar_forward.1} parent=5 // pred_check
        %p5948 = pneg %p5947
      $region84: #{net_cifar_forward.1} parent=5 // pred_check_branch
        %5950 = sbr.rel (%p5948) target = $region86
      $region85: #{net_cifar_forward.1} parent=5 // pred_region
        %s5951 = ssub.s32 %s14, 2
        // Predicated region
        $region87: #{net_cifar_forward.1} parent=85 // pred_check
          %p5952 = pneg %p153
        $region88: #{net_cifar_forward.1} parent=85 // pred_check_branch
          %5954 = sbr.rel (%p5952) target = $region90
        $region89: #{net_cifar_forward.1} parent=85 // pred_region
          %s5955 = sand.u32 %s138, 1
          %s5956 = scalar_lea.sflag [#allocation4], %s5955
          %s5957 = sand.u32 %s138, 1
          %s5958 = smul.addr %s5957, 8
          %s5959 = scalar_lea.vmem [#allocation3], %s5958
          %5961 = dma.done %s5956, 128
        $region90: #{net_cifar_forward.1} parent=85 // pred_fallthru
          _
      $region86: #{net_cifar_forward.1} parent=5 // pred_fallthru
        _
    $region6: #{net_cifar_forward.1} parent=1 // loop_footer
      %s18 = sadd.s32 1, %s14
    $region7: #{net_cifar_forward.1} parent=1 // loop_footer_branch
      %13 = sbr.rel target = $region3
    $region8: #{net_cifar_forward.1} parent=1 // loop_exit
      _
    %5962 = vsyncpa [#allocation4], 1
    %s5963 = scalar_lea.sflag [#allocation4], 1
    %5964 = vsyncpa %s5963, 1

</llo_original>
